<compile_context>
chip_gen: v6e
topology: v6e:2x2x1
jax: 0.10.0
libtpu: 0.0.40
codegen_flags: <defaults>
</compile_context>

<pallas_src>
import jax
import jax.numpy as jnp
from jax.experimental import pallas as pl
from jax.experimental.pallas import tpu as pltpu

EPS = 1e-5
_VMEM_LIMIT_BYTES = 32 * 1024 * 1024


# ---------------------------------------------------------------------------
# Kernels
# ---------------------------------------------------------------------------

def _conv1_kernel(x_ref, w1_ref, t1_ref, st_ref):
    """1x1 conv (bias dropped: cancelled by BN) + per-tile BN partials."""
    t = jnp.dot(x_ref[...].astype(jnp.bfloat16), w1_ref[...],
                preferred_element_type=jnp.float32)          # (RT, Cmid) f32
    t1_ref[...] = t.astype(jnp.bfloat16)
    m = jnp.mean(t, axis=0, keepdims=True)                   # (1, Cmid)
    d = t - m
    st_ref[0] = jnp.concatenate([m, jnp.sum(d * d, axis=0, keepdims=True)], axis=0)


def _conv2_kernel(t1_ref, sc_ref, sh_ref, w2_ref, t2_ref, st_ref, pad_ref):
    """BN1 (folded scale/shift) + ReLU + 3x3 conv (stride 1, pad 1) + partials.

    The 3x3 conv is 9 accumulating K=Cmid matmuls on shifted (ky, kx) views of
    a zero-halo f32 VMEM scratch; only the halo ring is re-zeroed per step.
    """
    Hp, Wp, Cmid = pad_ref.shape
    H, W = Hp - 2, Wp - 2
    HW = H * W

    # Re-zero only the 1-pixel halo ring (interior is fully overwritten below).
    zrow = jnp.zeros((Wp, Cmid), jnp.float32)
    pad_ref[0] = zrow
    pad_ref[H + 1] = zrow
    zcol = jnp.zeros((H, 1, Cmid), jnp.float32)
    pad_ref[1:H + 1, 0:1, :] = zcol
    pad_ref[1:H + 1, W + 1:W + 2, :] = zcol

    # BN1 + ReLU into the interior of the padded scratch.
    y = jnp.maximum(t1_ref[...].astype(jnp.float32) * sc_ref[0] + sh_ref[0], 0.0)
    pad_ref[1:H + 1, 1:W + 1, :] = y.reshape(H, W, Cmid)

    # 9 accumulating matmuls; accumulator starts from the first dot (no zeros).
    acc = None
    for ky in range(3):
        for kx in range(3):
            patch = pad_ref[ky:ky + H, kx:kx + W, :].reshape(HW, Cmid)
            d = jnp.dot(patch.astype(jnp.bfloat16), w2_ref[ky * 3 + kx],
                        preferred_element_type=jnp.float32)
            acc = d if acc is None else acc + d

    t2_ref[...] = acc.astype(jnp.bfloat16)
    m = jnp.mean(acc, axis=0, keepdims=True)
    dd = acc - m
    st_ref[0] = jnp.concatenate([m, jnp.sum(dd * dd, axis=0, keepdims=True)], axis=0)


def _conv3_kernel(t2_ref, sc_ref, sh_ref, w3_ref, t3_ref, st_ref):
    """BN2 (folded scale/shift) + ReLU + 1x1 conv to Cout + per-tile partials."""
    y = jnp.maximum(t2_ref[...].astype(jnp.float32) * sc_ref[0] + sh_ref[0], 0.0)
    u = jnp.dot(y.astype(jnp.bfloat16), w3_ref[...],
                preferred_element_type=jnp.float32)           # (RT, Cout) f32
    t3_ref[...] = u.astype(jnp.bfloat16)
    m = jnp.mean(u, axis=0, keepdims=True)
    d = u - m
    st_ref[0] = jnp.concatenate([m, jnp.sum(d * d, axis=0, keepdims=True)], axis=0)


def _residual_kernel(t3_ref, x_ref, sc_ref, sh_ref, o_ref):
    """BN3 (folded scale/shift) + residual add + final ReLU."""
    y = (t3_ref[...].astype(jnp.float32) * sc_ref[0] + sh_ref[0]
         + x_ref[...].astype(jnp.float32))
    o_ref[...] = jnp.maximum(y, 0.0).astype(o_ref.dtype)


# ---------------------------------------------------------------------------
# Wrapper
# ---------------------------------------------------------------------------

def _scale_shift(stats, gamma, beta, rows_per_tile, total_rows):
    """Combine per-tile (mean, centered sumsq) partials into BN scale/shift."""
    means = stats[:, 0, :]                          # (T, C)
    m2s = stats[:, 1, :]                            # (T, C)
    mean = jnp.mean(means, axis=0)                  # equal-size tiles -> exact
    var = (jnp.sum(m2s, axis=0)
           + rows_per_tile * jnp.sum((means - mean) ** 2, axis=0)) / total_rows
    scale = gamma.reshape(-1) * jax.lax.rsqrt(var + EPS)
    shift = beta.reshape(-1) - mean * scale
    return scale.reshape(1, -1), shift.reshape(1, -1)


def bottleneck_block_nhwc(x, p, *, group_size=1):
    """NHWC in/out.  4 gridded pallas_calls + tiny per-channel reductions.

    `group_size` images are processed per grid step of the row-wise kernels
    (K1/K3/K4) to fill the MXU M dimension at late ResNet stages (tune per
    generation; 1 keeps >=2 parallel grid steps for v7x's dual TensorCores at
    small batch).  K2 stays one image per step (it needs spatial structure).
    """
    N, H, W, Cin = x.shape
    Cmid = p["w1"].shape[1]
    Cout = p["w3"].shape[1]
    assert Cin == Cout, "identity path requires in_channels == out_channels * 4"
    assert N % group_size == 0
    rows = N * H * W
    HW = H * W
    T = N // group_size
    RT = group_size * HW                       # rows per step for K1/K3/K4
    assert RT % 8 == 0 and HW % 8 == 0, (
        "TODO(synk): pad row tiles when H*W is not a multiple of 8")

    in_bytes = jnp.dtype(x.dtype).itemsize
    x2d = x.reshape(rows, Cin)                 # free, layout-preserving

    # Matmul weights pre-cast to bf16 (f32 MXU accumulation in-kernel).
    w1 = p["w1"].astype(jnp.bfloat16)                          # (Cin, Cmid)
    w2 = p["w2"].reshape(9, Cmid, Cmid).astype(jnp.bfloat16)   # (9, Cmid, Cmid)
    w3 = p["w3"].astype(jnp.bfloat16)                          # (Cmid, Cout)

    cp = pltpu.CompilerParams(dimension_semantics=("parallel",),
                              vmem_limit_bytes=_VMEM_LIMIT_BYTES)

    row_blk = lambda c: pl.BlockSpec((RT, c), lambda i: (i, 0))
    img_blk = lambda c: pl.BlockSpec((HW, c), lambda n: (n, 0))
    vec = lambda c: pl.BlockSpec((1, c), lambda i: (0, 0))
    stat_blk = lambda c: pl.BlockSpec((1, 2, c), lambda i: (i, 0, 0))

    # ---- phase 1: conv1 (1x1) + BN1 partials --------------------------------
    t1, st1 = pl.pallas_call(
        _conv1_kernel,
        grid=(T,),
        in_specs=[row_blk(Cin), pl.BlockSpec((Cin, Cmid), lambda i: (0, 0))],
        out_specs=(row_blk(Cmid), stat_blk(Cmid)),
        out_shape=(jax.ShapeDtypeStruct((rows, Cmid), jnp.bfloat16),
                   jax.ShapeDtypeStruct((T, 2, Cmid), jnp.float32)),
        compiler_params=cp,
        cost_estimate=pl.CostEstimate(
            flops=2 * rows * Cin * Cmid, transcendentals=0,
            bytes_accessed=in_bytes * rows * Cin + 2 * rows * Cmid),
    )(x2d, w1)
    sc1, sh1 = _scale_shift(st1, p["g1"], p["be1"], RT, rows)

    # ---- phase 2: BN1 + ReLU + conv2 (3x3) + BN2 partials -------------------
    t2, st2 = pl.pallas_call(
        _conv2_kernel,
        grid=(N,),
        in_specs=[img_blk(Cmid), vec(Cmid), vec(Cmid),
                  pl.BlockSpec((9, Cmid, Cmid), lambda n: (0, 0, 0))],
        out_specs=(img_blk(Cmid), stat_blk(Cmid)),
        out_shape=(jax.ShapeDtypeStruct((rows, Cmid), jnp.bfloat16),
                   jax.ShapeDtypeStruct((N, 2, Cmid), jnp.float32)),
        scratch_shapes=[pltpu.VMEM((H + 2, W + 2, Cmid), jnp.float32)],
        compiler_params=cp,
        cost_estimate=pl.CostEstimate(
            flops=2 * rows * 9 * Cmid * Cmid, transcendentals=0,
            bytes_accessed=2 * rows * 2 * Cmid + 2 * 9 * Cmid * Cmid),
    )(t1, sc1, sh1, w2)
    sc2, sh2 = _scale_shift(st2, p["g2"], p["be2"], HW, rows)

    # ---- phase 3: BN2 + ReLU + conv3 (1x1) + BN3 partials -------------------
    t3, st3 = pl.pallas_call(
        _conv3_kernel,
        grid=(T,),
        in_specs=[row_blk(Cmid), vec(Cmid), vec(Cmid),
                  pl.BlockSpec((Cmid, Cout), lambda i: (0, 0))],
        out_specs=(row_blk(Cout), stat_blk(Cout)),
        out_shape=(jax.ShapeDtypeStruct((rows, Cout), jnp.bfloat16),
                   jax.ShapeDtypeStruct((T, 2, Cout), jnp.float32)),
        compiler_params=cp,
        cost_estimate=pl.CostEstimate(
            flops=2 * rows * Cmid * Cout, transcendentals=0,
            bytes_accessed=2 * rows * (Cmid + Cout)),
    )(t2, sc2, sh2, w3)
    sc3, sh3 = _scale_shift(st3, p["g3"], p["be3"], RT, rows)

    # ---- phase 4: BN3 + residual add + final ReLU ---------------------------
    out2d = pl.pallas_call(
        _residual_kernel,
        grid=(T,),
        in_specs=[row_blk(Cout), row_blk(Cout), vec(Cout), vec(Cout)],
        out_specs=row_blk(Cout),
        out_shape=jax.ShapeDtypeStruct((rows, Cout), x.dtype),
        compiler_params=cp,
        cost_estimate=pl.CostEstimate(
            flops=4 * rows * Cout, transcendentals=0,
            bytes_accessed=(2 + 2 * in_bytes) * rows * Cout),
    )(t3, x2d, sc3, sh3)

    return out2d.reshape(N, H, W, Cout)


def bottleneck_block(x_nchw, p):
    """NCHW in/out, matching the PyTorch module interface.

    TODO(synk): a full ResNet should stay NHWC end-to-end (use
    bottleneck_block_nhwc directly) and drop these boundary transposes — they
    roughly double the block's HBM traffic.
    """
    x = jnp.transpose(x_nchw, (0, 2, 3, 1))          # NCHW -> NHWC
    out = bottleneck_block_nhwc(x, p)
    return jnp.transpose(out, (0, 3, 1, 2))          # NHWC -> NCHW


# ---------------------------------------------------------------------------
# Params / reference / test
# ---------------------------------------------------------------------------

def init_params(key, in_channels, out_channels):
    expansion = 4
    Cmid, Cout = out_channels, out_channels * expansion
    assert in_channels == Cout, (
        "identity_downsample=None requires in_channels == out_channels * 4")
    ks = jax.random.split(key, 12)

    def nrm(k, shape, scale):
        return (scale * jax.random.normal(k, shape)).astype(jnp.float32)

    return dict(
        # Conv weights in matmul / HWIO form. Biases (b*) are only used by the
        # f32 reference: training-mode BN cancels them exactly, so the kernels
        # drop the adds.
        w1=nrm(ks[0], (in_channels, Cmid), 0.1),
        b1=nrm(ks[1], (1, Cmid), 0.1),
        w2=nrm(ks[2], (3, 3, Cmid, Cmid), 0.1),
        b2=nrm(ks[3], (1, Cmid), 0.1),
        w3=nrm(ks[4], (Cmid, Cout), 0.1),
        b3=nrm(ks[5], (1, Cout), 0.1),
        g1=(1.0 + nrm(ks[6], (1, Cmid), 0.05)),
        be1=nrm(ks[7], (1, Cmid), 0.05),
        g2=(1.0 + nrm(ks[8], (1, Cmid), 0.05)),
        be2=nrm(ks[9], (1, Cmid), 0.05),
        g3=(1.0 + nrm(ks[10], (1, Cout), 0.05)),
        be3=nrm(ks[11], (1, Cout), 0.05),
    )


def reference_nhwc(x, p):
    """Pure-JAX f32 reference mirroring the PyTorch module (incl. conv biases)."""
    x = x.astype(jnp.float32)
    N, H, W, Cin = x.shape
    Cmid, Cout = p["w1"].shape[1], p["w3"].shape[1]

    def bn(t, g, b, relu=True):
        m = jnp.mean(t, axis=0, keepdims=True)
        v = jnp.mean((t - m) ** 2, axis=0, keepdims=True)
        y = (t - m) / jnp.sqrt(v + EPS) * g + b
        return jnp.maximum(y, 0.0) if relu else y

    t = bn(x.reshape(-1, Cin) @ p["w1"] + p["b1"], p["g1"], p["be1"])
    t = t.reshape(N, H, W, Cmid)
    tp = jnp.pad(t, ((0, 0), (1, 1), (1, 1), (0, 0)))
    acc = jnp.zeros((N * H * W, Cmid), jnp.float32)
    for ky in range(3):
        for kx in range(3):
            acc = acc + tp[:, ky:ky + H, kx:kx + W, :].reshape(-1, Cmid) @ p["w2"][ky, kx]
    acc = bn(acc + p["b2"], p["g2"], p["be2"])
    u = bn(acc @ p["w3"] + p["b3"], p["g3"], p["be3"], relu=False)
    return jnp.maximum(u.reshape(N, H, W, Cout) + x, 0.0)


if __name__ == "__main__":
    key = jax.random.PRNGKey(0)
    kx, kp = jax.random.split(key)

    # Small shapes consistent with the module (stride=1, no downsample =>
    # in_channels == out_channels * 4).
    in_channels, out_channels = 128, 32
    N, H, W = 2, 16, 16

    x_nhwc = jax.random.normal(kx, (N, H, W, in_channels), dtype=jnp.float32)
    params = init_params(kp, in_channels, out_channels)

    # Primary NHWC path (no layout transposes; what a full NHWC ResNet uses).
    fwd = jax.jit(bottleneck_block_nhwc)
    out = jax.block_until_ready(fwd(x_nhwc, params))
    ref = reference_nhwc(x_nhwc, params)
    assert out.shape == (N, H, W, out_channels * 4), out.shape
    # Kernels feed the MXU bf16 operands and store bf16 intermediates (stats
    # from f32 accumulators); the reference is pure f32 -> bf16-level tolerance.
    assert jnp.allclose(out, ref, atol=7.5e-2, rtol=7.5e-2), (
        "NHWC mismatch vs reference, max abs diff = %e"
        % float(jnp.max(jnp.abs(out - ref))))

    # NCHW interface-compat wrapper (matches the PyTorch module layout).
    x_nchw = jnp.transpose(x_nhwc, (0, 3, 1, 2))
    out_nchw = jax.block_until_ready(jax.jit(bottleneck_block)(x_nchw, params))
    ref_nchw = jnp.transpose(ref, (0, 3, 1, 2))
    assert jnp.allclose(out_nchw, ref_nchw, atol=7.5e-2, rtol=7.5e-2), (
        "NCHW mismatch vs reference, max abs diff = %e"
        % float(jnp.max(jnp.abs(out_nchw - ref_nchw))))

    print("KERNEL_OK")
</pallas_src>

<mosaic_0001>
module attributes {stable_mosaic.version = 11 : i64} {
  func.func @_conv1_kernel(%arg0: i32, %arg1: memref<256x128xf32, #tpu.memory_space<vmem>>, %arg2: memref<128x32xbf16, #tpu.memory_space<vmem>>, %arg3: memref<256x32xbf16, #tpu.memory_space<vmem>>, %arg4: memref<1x2x32xf32, #tpu.memory_space<vmem>>) attributes {dimension_semantics = [#tpu.dimension_semantics<parallel>], iteration_bounds = array<i64: 2>, scalar_prefetch = 0 : i64, scratch_operands = 0 : i64, tpu.core_type = #tpu.core_type<tc>, window_params = [{transform_indices = @transform_0, window_bounds = array<i64: 256, 128>}, {pipeline_mode = #tpu.pipeline_mode<synchronous>, transform_indices = @transform_1, window_bounds = array<i64: 128, 32>}, {transform_indices = @transform_2, window_bounds = array<i64: 256, 32>}, {transform_indices = @transform_3, window_bounds = array<i64: 1, 2, 32>}]} {
    %c0 = arith.constant 0 : index
    %c0_0 = arith.constant 0 : index
    %0 = vector.load %arg1[%c0, %c0_0] : memref<256x128xf32, #tpu.memory_space<vmem>>, vector<256x128xf32>
    %1 = arith.truncf %0 : vector<256x128xf32> to vector<256x128xbf16>
    %c0_1 = arith.constant 0 : index
    %c0_2 = arith.constant 0 : index
    %2 = vector.load %arg2[%c0_1, %c0_2] : memref<128x32xbf16, #tpu.memory_space<vmem>>, vector<128x32xbf16>
    %cst = arith.constant dense<0.000000e+00> : vector<256x32xf32>
    %3 = tpu.matmul %1, %2, %cst {dimension_numbers = #tpu.dot_dimension_numbers<[1], [0], [0], [1], [0, 0, 1, 1], [], []>} : vector<256x128xbf16>, vector<128x32xbf16>, vector<256x32xf32> -> vector<256x32xf32>
    %4 = arith.truncf %3 : vector<256x32xf32> to vector<256x32xbf16>
    %c0_3 = arith.constant 0 : index
    %c0_4 = arith.constant 0 : index
    %5 = vector.load %arg3[%c0_3, %c0_4] : memref<256x32xbf16, #tpu.memory_space<vmem>>, vector<256x32xbf16>
    tpu.vector_store %arg3[%c0_3, %c0_4], %4 {strides = array<i32>} : memref<256x32xbf16, #tpu.memory_space<vmem>>, vector<256x32xbf16>,
    %cst_5 = arith.constant dense<0.000000e+00> : vector<32xf32>
    %6 = vector.multi_reduction <add>, %3, %cst_5 [0] : vector<256x32xf32> to vector<32xf32>
    %7 = vector.shape_cast %6 : vector<32xf32> to vector<1x32xf32>
    %cst_6 = arith.constant 2.560000e+02 : f32
    %8 = vector.broadcast %cst_6 : f32 to vector<1x32xf32>
    %9 = arith.divf %7, %8 : vector<1x32xf32>
    %10 = vector.broadcast %9 : vector<1x32xf32> to vector<256x32xf32>
    %11 = arith.subf %3, %10 : vector<256x32xf32>
    %12 = arith.mulf %11, %11 : vector<256x32xf32>
    %cst_7 = arith.constant dense<0.000000e+00> : vector<32xf32>
    %13 = vector.multi_reduction <add>, %12, %cst_7 [0] : vector<256x32xf32> to vector<32xf32>
    %14 = vector.shape_cast %13 : vector<32xf32> to vector<1x32xf32>
    %15 = tpu.concatenate %9, %14 in 0 : vector<1x32xf32>, vector<1x32xf32> -> vector<2x32xf32>
    %c0_8 = arith.constant 0 : index
    %c0_9 = arith.constant 0 : index
    %c0_10 = arith.constant 0 : index
    %16 = vector.load %arg4[%c0_8, %c0_9, %c0_10] : memref<1x2x32xf32, #tpu.memory_space<vmem>>, vector<1x2x32xf32>
    %17 = vector.shape_cast %16 : vector<1x2x32xf32> to vector<2x32xf32>
    %18 = vector.shape_cast %15 : vector<2x32xf32> to vector<1x2x32xf32>
    tpu.vector_store %arg4[%c0_8, %c0_9, %c0_10], %18 {strides = array<i32>} : memref<1x2x32xf32, #tpu.memory_space<vmem>>, vector<1x2x32xf32>,
    return
  }
  func.func @transform_0(%arg0: i32) -> (i32, i32) {
    %c0_i32 = arith.constant 0 : i32
    %c0_i32_0 = arith.constant 0 : i32
    return %arg0, %c0_i32 : i32, i32
  }
  func.func @transform_1(%arg0: i32) -> (i32, i32) {
    %c0_i32 = arith.constant 0 : i32
    %c0_i32_0 = arith.constant 0 : i32
    %c0_i32_1 = arith.constant 0 : i32
    return %c0_i32, %c0_i32_0 : i32, i32
  }
  func.func @transform_2(%arg0: i32) -> (i32, i32) {
    %c0_i32 = arith.constant 0 : i32
    %c0_i32_0 = arith.constant 0 : i32
    return %arg0, %c0_i32 : i32, i32
  }
  func.func @transform_3(%arg0: i32) -> (i32, i32, i32) {
    %c0_i32 = arith.constant 0 : i32
    %c0_i32_0 = arith.constant 0 : i32
    %c0_i32_1 = arith.constant 0 : i32
    return %arg0, %c0_i32, %c0_i32_0 : i32, i32, i32
  }
}

module attributes {stable_mosaic.version = 11 : i64} {
  func.func @_conv2_kernel(%arg0: i32, %arg1: memref<256x32xbf16, #tpu.memory_space<vmem>>, %arg2: memref<1x32xf32, #tpu.memory_space<vmem>>, %arg3: memref<1x32xf32, #tpu.memory_space<vmem>>, %arg4: memref<9x32x32xbf16, #tpu.memory_space<vmem>>, %arg5: memref<256x32xbf16, #tpu.memory_space<vmem>>, %arg6: memref<1x2x32xf32, #tpu.memory_space<vmem>>, %arg7: memref<18x18x32xf32, #tpu.memory_space<vmem>>) attributes {dimension_semantics = [#tpu.dimension_semantics<parallel>], iteration_bounds = array<i64: 2>, scalar_prefetch = 0 : i64, scratch_operands = 1 : i64, tpu.core_type = #tpu.core_type<tc>, window_params = [{transform_indices = @transform_0, window_bounds = array<i64: 256, 32>}, {pipeline_mode = #tpu.pipeline_mode<synchronous>, transform_indices = @transform_1, window_bounds = array<i64: 1, 32>}, {pipeline_mode = #tpu.pipeline_mode<synchronous>, transform_indices = @transform_2, window_bounds = array<i64: 1, 32>}, {pipeline_mode = #tpu.pipeline_mode<synchronous>, transform_indices = @transform_3, window_bounds = array<i64: 9, 32, 32>}, {transform_indices = @transform_4, window_bounds = array<i64: 256, 32>}, {transform_indices = @transform_5, window_bounds = array<i64: 1, 2, 32>}]} {
    %cst = arith.constant 0.000000e+00 : f32
    %0 = vector.broadcast %cst : f32 to vector<18x32xf32>
    %c0 = arith.constant 0 : index
    %c0_0 = arith.constant 0 : index
    %c0_1 = arith.constant 0 : index
    %1 = vector.load %arg7[%c0, %c0_0, %c0_1] : memref<18x18x32xf32, #tpu.memory_space<vmem>>, vector<1x18x32xf32>
    %2 = vector.shape_cast %1 : vector<1x18x32xf32> to vector<18x32xf32>
    %3 = vector.shape_cast %0 : vector<18x32xf32> to vector<1x18x32xf32>
    tpu.vector_store %arg7[%c0, %c0_0, %c0_1], %3 {strides = array<i32>} : memref<18x18x32xf32, #tpu.memory_space<vmem>>, vector<1x18x32xf32>,
    %c17 = arith.constant 17 : index
    %c0_2 = arith.constant 0 : index
    %c0_3 = arith.constant 0 : index
    %4 = vector.load %arg7[%c17, %c0_2, %c0_3] : memref<18x18x32xf32, #tpu.memory_space<vmem>>, vector<1x18x32xf32>
    %5 = vector.shape_cast %4 : vector<1x18x32xf32> to vector<18x32xf32>
    %6 = vector.shape_cast %0 : vector<18x32xf32> to vector<1x18x32xf32>
    tpu.vector_store %arg7[%c17, %c0_2, %c0_3], %6 {strides = array<i32>} : memref<18x18x32xf32, #tpu.memory_space<vmem>>, vector<1x18x32xf32>,
    %cst_4 = arith.constant 0.000000e+00 : f32
    %7 = vector.broadcast %cst_4 : f32 to vector<16x1x32xf32>
    %c1 = arith.constant 1 : index
    %c0_5 = arith.constant 0 : index
    %c0_6 = arith.constant 0 : index
    %8 = vector.load %arg7[%c1, %c0_5, %c0_6] : memref<18x18x32xf32, #tpu.memory_space<vmem>>, vector<16x1x32xf32>
    tpu.vector_store %arg7[%c1, %c0_5, %c0_6], %7 {strides = array<i32>} : memref<18x18x32xf32, #tpu.memory_space<vmem>>, vector<16x1x32xf32>,
    %c1_7 = arith.constant 1 : index
    %c17_8 = arith.constant 17 : index
    %c0_9 = arith.constant 0 : index
    %9 = vector.load %arg7[%c1_7, %c17_8, %c0_9] : memref<18x18x32xf32, #tpu.memory_space<vmem>>, vector<16x1x32xf32>
    tpu.vector_store %arg7[%c1_7, %c17_8, %c0_9], %7 {strides = array<i32>} : memref<18x18x32xf32, #tpu.memory_space<vmem>>, vector<16x1x32xf32>,
    %c0_10 = arith.constant 0 : index
    %c0_11 = arith.constant 0 : index
    %10 = vector.load %arg1[%c0_10, %c0_11] : memref<256x32xbf16, #tpu.memory_space<vmem>>, vector<256x32xbf16>
    %11 = arith.extf %10 : vector<256x32xbf16> to vector<256x32xf32>
    %c0_12 = arith.constant 0 : index
    %c0_13 = arith.constant 0 : index
    %12 = vector.load %arg2[%c0_12, %c0_13] : memref<1x32xf32, #tpu.memory_space<vmem>>, vector<1x32xf32>
    %13 = vector.shape_cast %12 : vector<1x32xf32> to vector<32xf32>
    %14 = vector.shape_cast %13 : vector<32xf32> to vector<1x32xf32>
    %15 = vector.broadcast %14 : vector<1x32xf32> to vector<256x32xf32>
    %16 = arith.mulf %11, %15 : vector<256x32xf32>
    %c0_14 = arith.constant 0 : index
    %c0_15 = arith.constant 0 : index
    %17 = vector.load %arg3[%c0_14, %c0_15] : memref<1x32xf32, #tpu.memory_space<vmem>>, vector<1x32xf32>
    %18 = vector.shape_cast %17 : vector<1x32xf32> to vector<32xf32>
    %19 = vector.shape_cast %18 : vector<32xf32> to vector<1x32xf32>
    %20 = vector.broadcast %19 : vector<1x32xf32> to vector<256x32xf32>
    %21 = arith.addf %16, %20 : vector<256x32xf32>
    %cst_16 = arith.constant 0.000000e+00 : f32
    %22 = vector.broadcast %cst_16 : f32 to vector<256x32xf32>
    %23 = arith.maximumf %21, %22 : vector<256x32xf32>
    %24 = vector.shape_cast %23 : vector<256x32xf32> to vector<16x16x32xf32>
    %c1_17 = arith.constant 1 : index
    %c1_18 = arith.constant 1 : index
    %c0_19 = arith.constant 0 : index
    %25 = vector.load %arg7[%c1_17, %c1_18, %c0_19] : memref<18x18x32xf32, #tpu.memory_space<vmem>>, vector<16x16x32xf32>
    tpu.vector_store %arg7[%c1_17, %c1_18, %c0_19], %24 {strides = array<i32>} : memref<18x18x32xf32, #tpu.memory_space<vmem>>, vector<16x16x32xf32>,
    %c0_20 = arith.constant 0 : index
    %c0_21 = arith.constant 0 : index
    %c0_22 = arith.constant 0 : index
    %26 = vector.load %arg7[%c0_20, %c0_21, %c0_22] : memref<18x18x32xf32, #tpu.memory_space<vmem>>, vector<16x16x32xf32>
    %27 = vector.shape_cast %26 : vector<16x16x32xf32> to vector<256x32xf32>
    %28 = arith.truncf %27 : vector<256x32xf32> to vector<256x32xbf16>
    %c0_23 = arith.constant 0 : index
    %c0_24 = arith.constant 0 : index
    %c0_25 = arith.constant 0 : index
    %29 = vector.load %arg4[%c0_23, %c0_24, %c0_25] : memref<9x32x32xbf16, #tpu.memory_space<vmem>>, vector<1x32x32xbf16>
    %30 = vector.shape_cast %29 : vector<1x32x32xbf16> to vector<32x32xbf16>
    %cst_26 = arith.constant dense<0.000000e+00> : vector<256x32xf32>
    %31 = tpu.matmul %28, %30, %cst_26 {dimension_numbers = #tpu.dot_dimension_numbers<[1], [0], [0], [1], [0, 0, 1, 1], [], []>} : vector<256x32xbf16>, vector<32x32xbf16>, vector<256x32xf32> -> vector<256x32xf32>
    %c0_27 = arith.constant 0 : index
    %c1_28 = arith.constant 1 : index
    %c0_29 = arith.constant 0 : index
    %32 = vector.load %arg7[%c0_27, %c1_28, %c0_29] : memref<18x18x32xf32, #tpu.memory_space<vmem>>, vector<16x16x32xf32>
    %33 = vector.shape_cast %32 : vector<16x16x32xf32> to vector<256x32xf32>
    %34 = arith.truncf %33 : vector<256x32xf32> to vector<256x32xbf16>
    %c1_30 = arith.constant 1 : index
    %c0_31 = arith.constant 0 : index
    %c0_32 = arith.constant 0 : index
    %35 = vector.load %arg4[%c1_30, %c0_31, %c0_32] : memref<9x32x32xbf16, #tpu.memory_space<vmem>>, vector<1x32x32xbf16>
    %36 = vector.shape_cast %35 : vector<1x32x32xbf16> to vector<32x32xbf16>
    %cst_33 = arith.constant dense<0.000000e+00> : vector<256x32xf32>
    %37 = tpu.matmul %34, %36, %cst_33 {dimension_numbers = #tpu.dot_dimension_numbers<[1], [0], [0], [1], [0, 0, 1, 1], [], []>} : vector<256x32xbf16>, vector<32x32xbf16>, vector<256x32xf32> -> vector<256x32xf32>
    %38 = arith.addf %31, %37 : vector<256x32xf32>
    %c0_34 = arith.constant 0 : index
    %c2 = arith.constant 2 : index
    %c0_35 = arith.constant 0 : index
    %39 = vector.load %arg7[%c0_34, %c2, %c0_35] : memref<18x18x32xf32, #tpu.memory_space<vmem>>, vector<16x16x32xf32>
    %40 = vector.shape_cast %39 : vector<16x16x32xf32> to vector<256x32xf32>
    %41 = arith.truncf %40 : vector<256x32xf32> to vector<256x32xbf16>
    %c2_36 = arith.constant 2 : index
    %c0_37 = arith.constant 0 : index
    %c0_38 = arith.constant 0 : index
    %42 = vector.load %arg4[%c2_36, %c0_37, %c0_38] : memref<9x32x32xbf16, #tpu.memory_space<vmem>>, vector<1x32x32xbf16>
    %43 = vector.shape_cast %42 : vector<1x32x32xbf16> to vector<32x32xbf16>
    %cst_39 = arith.constant dense<0.000000e+00> : vector<256x32xf32>
    %44 = tpu.matmul %41, %43, %cst_39 {dimension_numbers = #tpu.dot_dimension_numbers<[1], [0], [0], [1], [0, 0, 1, 1], [], []>} : vector<256x32xbf16>, vector<32x32xbf16>, vector<256x32xf32> -> vector<256x32xf32>
    %45 = arith.addf %38, %44 : vector<256x32xf32>
    %c1_40 = arith.constant 1 : index
    %c0_41 = arith.constant 0 : index
    %c0_42 = arith.constant 0 : index
    %46 = vector.load %arg7[%c1_40, %c0_41, %c0_42] : memref<18x18x32xf32, #tpu.memory_space<vmem>>, vector<16x16x32xf32>
    %47 = vector.shape_cast %46 : vector<16x16x32xf32> to vector<256x32xf32>
    %48 = arith.truncf %47 : vector<256x32xf32> to vector<256x32xbf16>
    %c3 = arith.constant 3 : index
    %c0_43 = arith.constant 0 : index
    %c0_44 = arith.constant 0 : index
    %49 = vector.load %arg4[%c3, %c0_43, %c0_44] : memref<9x32x32xbf16, #tpu.memory_space<vmem>>, vector<1x32x32xbf16>
    %50 = vector.shape_cast %49 : vector<1x32x32xbf16> to vector<32x32xbf16>
    %cst_45 = arith.constant dense<0.000000e+00> : vector<256x32xf32>
    %51 = tpu.matmul %48, %50, %cst_45 {dimension_numbers = #tpu.dot_dimension_numbers<[1], [0], [0], [1], [0, 0, 1, 1], [], []>} : vector<256x32xbf16>, vector<32x32xbf16>, vector<256x32xf32> -> vector<256x32xf32>
    %52 = arith.addf %45, %51 : vector<256x32xf32>
    %c1_46 = arith.constant 1 : index
    %c1_47 = arith.constant 1 : index
    %c0_48 = arith.constant 0 : index
    %53 = vector.load %arg7[%c1_46, %c1_47, %c0_48] : memref<18x18x32xf32, #tpu.memory_space<vmem>>, vector<16x16x32xf32>
    %54 = vector.shape_cast %53 : vector<16x16x32xf32> to vector<256x32xf32>
    %55 = arith.truncf %54 : vector<256x32xf32> to vector<256x32xbf16>
    %c4 = arith.constant 4 : index
    %c0_49 = arith.constant 0 : index
    %c0_50 = arith.constant 0 : index
    %56 = vector.load %arg4[%c4, %c0_49, %c0_50] : memref<9x32x32xbf16, #tpu.memory_space<vmem>>, vector<1x32x32xbf16>
    %57 = vector.shape_cast %56 : vector<1x32x32xbf16> to vector<32x32xbf16>
    %cst_51 = arith.constant dense<0.000000e+00> : vector<256x32xf32>
    %58 = tpu.matmul %55, %57, %cst_51 {dimension_numbers = #tpu.dot_dimension_numbers<[1], [0], [0], [1], [0, 0, 1, 1], [], []>} : vector<256x32xbf16>, vector<32x32xbf16>, vector<256x32xf32> -> vector<256x32xf32>
    %59 = arith.addf %52, %58 : vector<256x32xf32>
    %c1_52 = arith.constant 1 : index
    %c2_53 = arith.constant 2 : index
    %c0_54 = arith.constant 0 : index
    %60 = vector.load %arg7[%c1_52, %c2_53, %c0_54] : memref<18x18x32xf32, #tpu.memory_space<vmem>>, vector<16x16x32xf32>
    %61 = vector.shape_cast %60 : vector<16x16x32xf32> to vector<256x32xf32>
    %62 = arith.truncf %61 : vector<256x32xf32> to vector<256x32xbf16>
    %c5 = arith.constant 5 : index
    %c0_55 = arith.constant 0 : index
    %c0_56 = arith.constant 0 : index
    %63 = vector.load %arg4[%c5, %c0_55, %c0_56] : memref<9x32x32xbf16, #tpu.memory_space<vmem>>, vector<1x32x32xbf16>
    %64 = vector.shape_cast %63 : vector<1x32x32xbf16> to vector<32x32xbf16>
    %cst_57 = arith.constant dense<0.000000e+00> : vector<256x32xf32>
    %65 = tpu.matmul %62, %64, %cst_57 {dimension_numbers = #tpu.dot_dimension_numbers<[1], [0], [0], [1], [0, 0, 1, 1], [], []>} : vector<256x32xbf16>, vector<32x32xbf16>, vector<256x32xf32> -> vector<256x32xf32>
    %66 = arith.addf %59, %65 : vector<256x32xf32>
    %c2_58 = arith.constant 2 : index
    %c0_59 = arith.constant 0 : index
    %c0_60 = arith.constant 0 : index
    %67 = vector.load %arg7[%c2_58, %c0_59, %c0_60] : memref<18x18x32xf32, #tpu.memory_space<vmem>>, vector<16x16x32xf32>
    %68 = vector.shape_cast %67 : vector<16x16x32xf32> to vector<256x32xf32>
    %69 = arith.truncf %68 : vector<256x32xf32> to vector<256x32xbf16>
    %c6 = arith.constant 6 : index
    %c0_61 = arith.constant 0 : index
    %c0_62 = arith.constant 0 : index
    %70 = vector.load %arg4[%c6, %c0_61, %c0_62] : memref<9x32x32xbf16, #tpu.memory_space<vmem>>, vector<1x32x32xbf16>
    %71 = vector.shape_cast %70 : vector<1x32x32xbf16> to vector<32x32xbf16>
    %cst_63 = arith.constant dense<0.000000e+00> : vector<256x32xf32>
    %72 = tpu.matmul %69, %71, %cst_63 {dimension_numbers = #tpu.dot_dimension_numbers<[1], [0], [0], [1], [0, 0, 1, 1], [], []>} : vector<256x32xbf16>, vector<32x32xbf16>, vector<256x32xf32> -> vector<256x32xf32>
    %73 = arith.addf %66, %72 : vector<256x32xf32>
    %c2_64 = arith.constant 2 : index
    %c1_65 = arith.constant 1 : index
    %c0_66 = arith.constant 0 : index
    %74 = vector.load %arg7[%c2_64, %c1_65, %c0_66] : memref<18x18x32xf32, #tpu.memory_space<vmem>>, vector<16x16x32xf32>
    %75 = vector.shape_cast %74 : vector<16x16x32xf32> to vector<256x32xf32>
    %76 = arith.truncf %75 : vector<256x32xf32> to vector<256x32xbf16>
    %c7 = arith.constant 7 : index
    %c0_67 = arith.constant 0 : index
    %c0_68 = arith.constant 0 : index
    %77 = vector.load %arg4[%c7, %c0_67, %c0_68] : memref<9x32x32xbf16, #tpu.memory_space<vmem>>, vector<1x32x32xbf16>
    %78 = vector.shape_cast %77 : vector<1x32x32xbf16> to vector<32x32xbf16>
    %cst_69 = arith.constant dense<0.000000e+00> : vector<256x32xf32>
    %79 = tpu.matmul %76, %78, %cst_69 {dimension_numbers = #tpu.dot_dimension_numbers<[1], [0], [0], [1], [0, 0, 1, 1], [], []>} : vector<256x32xbf16>, vector<32x32xbf16>, vector<256x32xf32> -> vector<256x32xf32>
    %80 = arith.addf %73, %79 : vector<256x32xf32>
    %c2_70 = arith.constant 2 : index
    %c2_71 = arith.constant 2 : index
    %c0_72 = arith.constant 0 : index
    %81 = vector.load %arg7[%c2_70, %c2_71, %c0_72] : memref<18x18x32xf32, #tpu.memory_space<vmem>>, vector<16x16x32xf32>
    %82 = vector.shape_cast %81 : vector<16x16x32xf32> to vector<256x32xf32>
    %83 = arith.truncf %82 : vector<256x32xf32> to vector<256x32xbf16>
    %c8 = arith.constant 8 : index
    %c0_73 = arith.constant 0 : index
    %c0_74 = arith.constant 0 : index
    %84 = vector.load %arg4[%c8, %c0_73, %c0_74] : memref<9x32x32xbf16, #tpu.memory_space<vmem>>, vector<1x32x32xbf16>
    %85 = vector.shape_cast %84 : vector<1x32x32xbf16> to vector<32x32xbf16>
    %cst_75 = arith.constant dense<0.000000e+00> : vector<256x32xf32>
    %86 = tpu.matmul %83, %85, %cst_75 {dimension_numbers = #tpu.dot_dimension_numbers<[1], [0], [0], [1], [0, 0, 1, 1], [], []>} : vector<256x32xbf16>, vector<32x32xbf16>, vector<256x32xf32> -> vector<256x32xf32>
    %87 = arith.addf %80, %86 : vector<256x32xf32>
    %88 = arith.truncf %87 : vector<256x32xf32> to vector<256x32xbf16>
    %c0_76 = arith.constant 0 : index
    %c0_77 = arith.constant 0 : index
    %89 = vector.load %arg5[%c0_76, %c0_77] : memref<256x32xbf16, #tpu.memory_space<vmem>>, vector<256x32xbf16>
    tpu.vector_store %arg5[%c0_76, %c0_77], %88 {strides = array<i32>} : memref<256x32xbf16, #tpu.memory_space<vmem>>, vector<256x32xbf16>,
    %cst_78 = arith.constant dense<0.000000e+00> : vector<32xf32>
    %90 = vector.multi_reduction <add>, %87, %cst_78 [0] : vector<256x32xf32> to vector<32xf32>
    %91 = vector.shape_cast %90 : vector<32xf32> to vector<1x32xf32>
    %cst_79 = arith.constant 2.560000e+02 : f32
    %92 = vector.broadcast %cst_79 : f32 to vector<1x32xf32>
    %93 = arith.divf %91, %92 : vector<1x32xf32>
    %94 = vector.broadcast %93 : vector<1x32xf32> to vector<256x32xf32>
    %95 = arith.subf %87, %94 : vector<256x32xf32>
    %96 = arith.mulf %95, %95 : vector<256x32xf32>
    %cst_80 = arith.constant dense<0.000000e+00> : vector<32xf32>
    %97 = vector.multi_reduction <add>, %96, %cst_80 [0] : vector<256x32xf32> to vector<32xf32>
    %98 = vector.shape_cast %97 : vector<32xf32> to vector<1x32xf32>
    %99 = tpu.concatenate %93, %98 in 0 : vector<1x32xf32>, vector<1x32xf32> -> vector<2x32xf32>
    %c0_81 = arith.constant 0 : index
    %c0_82 = arith.constant 0 : index
    %c0_83 = arith.constant 0 : index
    %100 = vector.load %arg6[%c0_81, %c0_82, %c0_83] : memref<1x2x32xf32, #tpu.memory_space<vmem>>, vector<1x2x32xf32>
    %101 = vector.shape_cast %100 : vector<1x2x32xf32> to vector<2x32xf32>
    %102 = vector.shape_cast %99 : vector<2x32xf32> to vector<1x2x32xf32>
    tpu.vector_store %arg6[%c0_81, %c0_82, %c0_83], %102 {strides = array<i32>} : memref<1x2x32xf32, #tpu.memory_space<vmem>>, vector<1x2x32xf32>,
    return
  }
  func.func @transform_0(%arg0: i32) -> (i32, i32) {
    %c0_i32 = arith.constant 0 : i32
    %c0_i32_0 = arith.constant 0 : i32
    return %arg0, %c0_i32 : i32, i32
  }
  func.func @transform_1(%arg0: i32) -> (i32, i32) {
    %c0_i32 = arith.constant 0 : i32
    %c0_i32_0 = arith.constant 0 : i32
    %c0_i32_1 = arith.constant 0 : i32
    return %c0_i32, %c0_i32_0 : i32, i32
  }
  func.func @transform_2(%arg0: i32) -> (i32, i32) {
    %c0_i32 = arith.constant 0 : i32
    %c0_i32_0 = arith.constant 0 : i32
    %c0_i32_1 = arith.constant 0 : i32
    return %c0_i32, %c0_i32_0 : i32, i32
  }
  func.func @transform_3(%arg0: i32) -> (i32, i32, i32) {
    %c0_i32 = arith.constant 0 : i32
    %c0_i32_0 = arith.constant 0 : i32
    %c0_i32_1 = arith.constant 0 : i32
    %c0_i32_2 = arith.constant 0 : i32
    return %c0_i32, %c0_i32_0, %c0_i32_1 : i32, i32, i32
  }
  func.func @transform_4(%arg0: i32) -> (i32, i32) {
    %c0_i32 = arith.constant 0 : i32
    %c0_i32_0 = arith.constant 0 : i32
    return %arg0, %c0_i32 : i32, i32
  }
  func.func @transform_5(%arg0: i32) -> (i32, i32, i32) {
    %c0_i32 = arith.constant 0 : i32
    %c0_i32_0 = arith.constant 0 : i32
    %c0_i32_1 = arith.constant 0 : i32
    return %arg0, %c0_i32, %c0_i32_0 : i32, i32, i32
  }
}

module attributes {stable_mosaic.version = 11 : i64} {
  func.func @_conv3_kernel(%arg0: i32, %arg1: memref<256x32xbf16, #tpu.memory_space<vmem>>, %arg2: memref<1x32xf32, #tpu.memory_space<vmem>>, %arg3: memref<1x32xf32, #tpu.memory_space<vmem>>, %arg4: memref<32x128xbf16, #tpu.memory_space<vmem>>, %arg5: memref<256x128xbf16, #tpu.memory_space<vmem>>, %arg6: memref<1x2x128xf32, #tpu.memory_space<vmem>>) attributes {dimension_semantics = [#tpu.dimension_semantics<parallel>], iteration_bounds = array<i64: 2>, scalar_prefetch = 0 : i64, scratch_operands = 0 : i64, tpu.core_type = #tpu.core_type<tc>, window_params = [{transform_indices = @transform_0, window_bounds = array<i64: 256, 32>}, {pipeline_mode = #tpu.pipeline_mode<synchronous>, transform_indices = @transform_1, window_bounds = array<i64: 1, 32>}, {pipeline_mode = #tpu.pipeline_mode<synchronous>, transform_indices = @transform_2, window_bounds = array<i64: 1, 32>}, {pipeline_mode = #tpu.pipeline_mode<synchronous>, transform_indices = @transform_3, window_bounds = array<i64: 32, 128>}, {transform_indices = @transform_4, window_bounds = array<i64: 256, 128>}, {transform_indices = @transform_5, window_bounds = array<i64: 1, 2, 128>}]} {
    %c0 = arith.constant 0 : index
    %c0_0 = arith.constant 0 : index
    %0 = vector.load %arg1[%c0, %c0_0] : memref<256x32xbf16, #tpu.memory_space<vmem>>, vector<256x32xbf16>
    %1 = arith.extf %0 : vector<256x32xbf16> to vector<256x32xf32>
    %c0_1 = arith.constant 0 : index
    %c0_2 = arith.constant 0 : index
    %2 = vector.load %arg2[%c0_1, %c0_2] : memref<1x32xf32, #tpu.memory_space<vmem>>, vector<1x32xf32>
    %3 = vector.shape_cast %2 : vector<1x32xf32> to vector<32xf32>
    %4 = vector.shape_cast %3 : vector<32xf32> to vector<1x32xf32>
    %5 = vector.broadcast %4 : vector<1x32xf32> to vector<256x32xf32>
    %6 = arith.mulf %1, %5 : vector<256x32xf32>
    %c0_3 = arith.constant 0 : index
    %c0_4 = arith.constant 0 : index
    %7 = vector.load %arg3[%c0_3, %c0_4] : memref<1x32xf32, #tpu.memory_space<vmem>>, vector<1x32xf32>
    %8 = vector.shape_cast %7 : vector<1x32xf32> to vector<32xf32>
    %9 = vector.shape_cast %8 : vector<32xf32> to vector<1x32xf32>
    %10 = vector.broadcast %9 : vector<1x32xf32> to vector<256x32xf32>
    %11 = arith.addf %6, %10 : vector<256x32xf32>
    %cst = arith.constant 0.000000e+00 : f32
    %12 = vector.broadcast %cst : f32 to vector<256x32xf32>
    %13 = arith.maximumf %11, %12 : vector<256x32xf32>
    %14 = arith.truncf %13 : vector<256x32xf32> to vector<256x32xbf16>
    %c0_5 = arith.constant 0 : index
    %c0_6 = arith.constant 0 : index
    %15 = vector.load %arg4[%c0_5, %c0_6] : memref<32x128xbf16, #tpu.memory_space<vmem>>, vector<32x128xbf16>
    %cst_7 = arith.constant dense<0.000000e+00> : vector<256x128xf32>
    %16 = tpu.matmul %14, %15, %cst_7 {dimension_numbers = #tpu.dot_dimension_numbers<[1], [0], [0], [1], [0, 0, 1, 1], [], []>} : vector<256x32xbf16>, vector<32x128xbf16>, vector<256x128xf32> -> vector<256x128xf32>
    %17 = arith.truncf %16 : vector<256x128xf32> to vector<256x128xbf16>
    %c0_8 = arith.constant 0 : index
    %c0_9 = arith.constant 0 : index
    %18 = vector.load %arg5[%c0_8, %c0_9] : memref<256x128xbf16, #tpu.memory_space<vmem>>, vector<256x128xbf16>
    tpu.vector_store %arg5[%c0_8, %c0_9], %17 {strides = array<i32>} : memref<256x128xbf16, #tpu.memory_space<vmem>>, vector<256x128xbf16>,
    %cst_10 = arith.constant dense<0.000000e+00> : vector<128xf32>
    %19 = vector.multi_reduction <add>, %16, %cst_10 [0] : vector<256x128xf32> to vector<128xf32>
    %20 = vector.shape_cast %19 : vector<128xf32> to vector<1x128xf32>
    %cst_11 = arith.constant 2.560000e+02 : f32
    %21 = vector.broadcast %cst_11 : f32 to vector<1x128xf32>
    %22 = arith.divf %20, %21 : vector<1x128xf32>
    %23 = vector.broadcast %22 : vector<1x128xf32> to vector<256x128xf32>
    %24 = arith.subf %16, %23 : vector<256x128xf32>
    %25 = arith.mulf %24, %24 : vector<256x128xf32>
    %cst_12 = arith.constant dense<0.000000e+00> : vector<128xf32>
    %26 = vector.multi_reduction <add>, %25, %cst_12 [0] : vector<256x128xf32> to vector<128xf32>
    %27 = vector.shape_cast %26 : vector<128xf32> to vector<1x128xf32>
    %28 = tpu.concatenate %22, %27 in 0 : vector<1x128xf32>, vector<1x128xf32> -> vector<2x128xf32>
    %c0_13 = arith.constant 0 : index
    %c0_14 = arith.constant 0 : index
    %c0_15 = arith.constant 0 : index
    %29 = vector.load %arg6[%c0_13, %c0_14, %c0_15] : memref<1x2x128xf32, #tpu.memory_space<vmem>>, vector<1x2x128xf32>
    %30 = vector.shape_cast %29 : vector<1x2x128xf32> to vector<2x128xf32>
    %31 = vector.shape_cast %28 : vector<2x128xf32> to vector<1x2x128xf32>
    tpu.vector_store %arg6[%c0_13, %c0_14, %c0_15], %31 {strides = array<i32>} : memref<1x2x128xf32, #tpu.memory_space<vmem>>, vector<1x2x128xf32>,
    return
  }
  func.func @transform_0(%arg0: i32) -> (i32, i32) {
    %c0_i32 = arith.constant 0 : i32
    %c0_i32_0 = arith.constant 0 : i32
    return %arg0, %c0_i32 : i32, i32
  }
  func.func @transform_1(%arg0: i32) -> (i32, i32) {
    %c0_i32 = arith.constant 0 : i32
    %c0_i32_0 = arith.constant 0 : i32
    %c0_i32_1 = arith.constant 0 : i32
    return %c0_i32, %c0_i32_0 : i32, i32
  }
  func.func @transform_2(%arg0: i32) -> (i32, i32) {
    %c0_i32 = arith.constant 0 : i32
    %c0_i32_0 = arith.constant 0 : i32
    %c0_i32_1 = arith.constant 0 : i32
    return %c0_i32, %c0_i32_0 : i32, i32
  }
  func.func @transform_3(%arg0: i32) -> (i32, i32) {
    %c0_i32 = arith.constant 0 : i32
    %c0_i32_0 = arith.constant 0 : i32
    %c0_i32_1 = arith.constant 0 : i32
    return %c0_i32, %c0_i32_0 : i32, i32
  }
  func.func @transform_4(%arg0: i32) -> (i32, i32) {
    %c0_i32 = arith.constant 0 : i32
    %c0_i32_0 = arith.constant 0 : i32
    return %arg0, %c0_i32 : i32, i32
  }
  func.func @transform_5(%arg0: i32) -> (i32, i32, i32) {
    %c0_i32 = arith.constant 0 : i32
    %c0_i32_0 = arith.constant 0 : i32
    %c0_i32_1 = arith.constant 0 : i32
    return %arg0, %c0_i32, %c0_i32_0 : i32, i32, i32
  }
}

module attributes {stable_mosaic.version = 11 : i64} {
  func.func @_residual_kernel(%arg0: i32, %arg1: memref<256x128xbf16, #tpu.memory_space<vmem>>, %arg2: memref<256x128xf32, #tpu.memory_space<vmem>>, %arg3: memref<1x128xf32, #tpu.memory_space<vmem>>, %arg4: memref<1x128xf32, #tpu.memory_space<vmem>>, %arg5: memref<256x128xf32, #tpu.memory_space<vmem>>) attributes {dimension_semantics = [#tpu.dimension_semantics<parallel>], iteration_bounds = array<i64: 2>, scalar_prefetch = 0 : i64, scratch_operands = 0 : i64, tpu.core_type = #tpu.core_type<tc>, window_params = [{transform_indices = @transform_0, window_bounds = array<i64: 256, 128>}, {transform_indices = @transform_1, window_bounds = array<i64: 256, 128>}, {pipeline_mode = #tpu.pipeline_mode<synchronous>, transform_indices = @transform_2, window_bounds = array<i64: 1, 128>}, {pipeline_mode = #tpu.pipeline_mode<synchronous>, transform_indices = @transform_3, window_bounds = array<i64: 1, 128>}, {transform_indices = @transform_4, window_bounds = array<i64: 256, 128>}]} {
    %c0 = arith.constant 0 : index
    %c0_0 = arith.constant 0 : index
    %0 = vector.load %arg1[%c0, %c0_0] : memref<256x128xbf16, #tpu.memory_space<vmem>>, vector<256x128xbf16>
    %1 = arith.extf %0 : vector<256x128xbf16> to vector<256x128xf32>
    %c0_1 = arith.constant 0 : index
    %c0_2 = arith.constant 0 : index
    %2 = vector.load %arg3[%c0_1, %c0_2] : memref<1x128xf32, #tpu.memory_space<vmem>>, vector<1x128xf32>
    %3 = vector.shape_cast %2 : vector<1x128xf32> to vector<128xf32>
    %4 = vector.shape_cast %3 : vector<128xf32> to vector<1x128xf32>
    %5 = vector.broadcast %4 : vector<1x128xf32> to vector<256x128xf32>
    %6 = arith.mulf %1, %5 : vector<256x128xf32>
    %c0_3 = arith.constant 0 : index
    %c0_4 = arith.constant 0 : index
    %7 = vector.load %arg4[%c0_3, %c0_4] : memref<1x128xf32, #tpu.memory_space<vmem>>, vector<1x128xf32>
    %8 = vector.shape_cast %7 : vector<1x128xf32> to vector<128xf32>
    %9 = vector.shape_cast %8 : vector<128xf32> to vector<1x128xf32>
    %10 = vector.broadcast %9 : vector<1x128xf32> to vector<256x128xf32>
    %11 = arith.addf %6, %10 : vector<256x128xf32>
    %c0_5 = arith.constant 0 : index
    %c0_6 = arith.constant 0 : index
    %12 = vector.load %arg2[%c0_5, %c0_6] : memref<256x128xf32, #tpu.memory_space<vmem>>, vector<256x128xf32>
    %13 = arith.addf %11, %12 : vector<256x128xf32>
    %cst = arith.constant 0.000000e+00 : f32
    %14 = vector.broadcast %cst : f32 to vector<256x128xf32>
    %15 = arith.maximumf %13, %14 : vector<256x128xf32>
    %c0_7 = arith.constant 0 : index
    %c0_8 = arith.constant 0 : index
    %16 = vector.load %arg5[%c0_7, %c0_8] : memref<256x128xf32, #tpu.memory_space<vmem>>, vector<256x128xf32>
    tpu.vector_store %arg5[%c0_7, %c0_8], %15 {strides = array<i32>} : memref<256x128xf32, #tpu.memory_space<vmem>>, vector<256x128xf32>,
    return
  }
  func.func @transform_0(%arg0: i32) -> (i32, i32) {
    %c0_i32 = arith.constant 0 : i32
    %c0_i32_0 = arith.constant 0 : i32
    return %arg0, %c0_i32 : i32, i32
  }
  func.func @transform_1(%arg0: i32) -> (i32, i32) {
    %c0_i32 = arith.constant 0 : i32
    %c0_i32_0 = arith.constant 0 : i32
    return %arg0, %c0_i32 : i32, i32
  }
  func.func @transform_2(%arg0: i32) -> (i32, i32) {
    %c0_i32 = arith.constant 0 : i32
    %c0_i32_0 = arith.constant 0 : i32
    %c0_i32_1 = arith.constant 0 : i32
    return %c0_i32, %c0_i32_0 : i32, i32
  }
  func.func @transform_3(%arg0: i32) -> (i32, i32) {
    %c0_i32 = arith.constant 0 : i32
    %c0_i32_0 = arith.constant 0 : i32
    %c0_i32_1 = arith.constant 0 : i32
    return %c0_i32, %c0_i32_0 : i32, i32
  }
  func.func @transform_4(%arg0: i32) -> (i32, i32) {
    %c0_i32 = arith.constant 0 : i32
    %c0_i32_0 = arith.constant 0 : i32
    return %arg0, %c0_i32 : i32, i32
  }
}

</mosaic_0001>

<llo_original>
// kernel: bottleneck_block_nhwc.4
$region0: #{bottleneck_block_nhwc.4}
  #allocation0 [shape = 'u32[]', space=smem, size = 0x4, offset = 0x4, fixed_abs, tag = 'smem constant byte address 0x4 - core index']
  #allocation1 [shape = 'u32[144,128]{1,0:T(1,128)}', space=vmem, size = 0x12000, scoped, tag = 'internal scratch']
  %s0 = inlined_call_operand.vmem [shape: f32[512,128], index: 0, kind: input, shape index: {}]
  %s1 = inlined_call_operand.vmem [shape: bf16[128,32], index: 1, kind: input, shape index: {}]
  %s2 = inlined_call_operand.vmem [shape: bf16[512,32], index: 2, kind: output, shape index: {0}]
  %s3 = inlined_call_operand.vmem [shape: f32[2,2,32], index: 3, kind: output, shape index: {1}]
  %4 = xla_tuple %s2, %s3
  %s5 = sld [smem:[#allocation0]]
  $region49: #{bottleneck_block_nhwc.4} parent=0
    _
  %s7 = ssub.s32 1, %s5
  %s8 = scalar_select 0, %s7, %s5
  loop: start=0, step=1, limit=4
  $region2: #{bottleneck_block_nhwc.4} parent=0 // loop_pre_header
    _
  $region3: #{bottleneck_block_nhwc.4} parent=0 // loop_header
    %s10 = sphi 0, %s14
    %p11 = scmp.ge.s32.totalorder %s10, 4
    %s20 = sphi 0, %s22
    %s23 = sphi 0, %s20
    %s24 = sphi 0, %s23
    %s40 = sphi 0, %s24
    %s44 = sphi 0, %s44
    %s46 = sphi 0, %s44
    %s47 = sphi 0, %s46
    %s61 = sphi 0, %s47
    %s67 = sphi 0, %s69
    %s70 = sphi 0, %s67
    %s71 = sphi 0, %s70
    %s87 = sphi 0, %s71
    %s93 = sphi 0, %s95
    %s96 = sphi 0, %s93
    %s97 = sphi 0, %s96
    %s113 = sphi 0, %s97
  $region4: #{bottleneck_block_nhwc.4} parent=0 // loop_header_branch
    %13 = sbr.rel (%p11) target = $region8
  $region5: #{bottleneck_block_nhwc.4} parent=0 // loop_body
    %s15 = ssub.s32 %s10, 1
    %s16 = ssub.s32 %s10, 2
    %s17 = sadd.s32 %s10, 1
    %s18 = ssub.s32 %s10, %s17
    %p19 = scmp.eq.s32.totalorder %s18, 0
    %s21 = sadd.s32 %s20, 1
    %s22 = scalar_select %p19, %s20, %s21
    %p25 = pneg %p19
    %p26 = scmp.eq.s32.totalorder %s10, 1
    %p27 = por %p25, %p26
    %p28 = scmp.ne.s32.totalorder %s20, %s23
    %p29 = scmp.eq.s32.totalorder %s10, 0
    %p30 = por %p28, %p29
    %p31 = scmp.ne.s32.totalorder %s20, %s23
    %p32 = scmp.eq.s32.totalorder %s15, 1
    %p33 = por %p31, %p32
    %p34 = scmp.ne.s32.totalorder %s23, %s24
    %p35 = scmp.eq.s32.totalorder %s15, 0
    %p36 = por %p34, %p35
    %p37 = scmp.ne.s32.totalorder %s23, %s24
    %p38 = scmp.eq.s32.totalorder %s16, 1
    %p39 = por %p37, %p38
    %p41 = scmp.ne.s32.totalorder %s24, %s40
    %p42 = scmp.eq.s32.totalorder %s16, 0
    %p43 = por %p41, %p42
    %s45 = sadd.s32 %s44, 1
    %p48 = scmp.eq.s32.totalorder %s10, 1
    %p49 = scmp.ne.s32.totalorder %s44, %s46
    %p50 = scmp.eq.s32.totalorder %s10, 0
    %p51 = por %p49, %p50
    %p52 = scmp.ne.s32.totalorder %s44, %s46
    %p53 = scmp.eq.s32.totalorder %s15, 1
    %p54 = por %p52, %p53
    %p55 = scmp.ne.s32.totalorder %s46, %s47
    %p56 = scmp.eq.s32.totalorder %s15, 0
    %p57 = por %p55, %p56
    %p58 = scmp.ne.s32.totalorder %s46, %s47
    %p59 = scmp.eq.s32.totalorder %s16, 1
    %p60 = por %p58, %p59
    %p62 = scmp.ne.s32.totalorder %s47, %s61
    %p63 = scmp.eq.s32.totalorder %s16, 0
    %p64 = por %p62, %p63
    %s65 = ssub.s32 %s10, %s17
    %p66 = scmp.eq.s32.totalorder %s65, 0
    %s68 = sadd.s32 %s67, 1
    %s69 = scalar_select %p66, %s67, %s68
    %p72 = pneg %p66
    %p73 = scmp.eq.s32.totalorder %s10, 1
    %p74 = por %p72, %p73
    %p75 = scmp.ne.s32.totalorder %s67, %s70
    %p76 = scmp.eq.s32.totalorder %s10, 0
    %p77 = por %p75, %p76
    %p78 = scmp.ne.s32.totalorder %s67, %s70
    %p79 = scmp.eq.s32.totalorder %s15, 1
    %p80 = por %p78, %p79
    %p81 = scmp.ne.s32.totalorder %s70, %s71
    %p82 = scmp.eq.s32.totalorder %s15, 0
    %p83 = por %p81, %p82
    %p84 = scmp.ne.s32.totalorder %s70, %s71
    %p85 = scmp.eq.s32.totalorder %s16, 1
    %p86 = por %p84, %p85
    %p88 = scmp.ne.s32.totalorder %s71, %s87
    %p89 = scmp.eq.s32.totalorder %s16, 0
    %p90 = por %p88, %p89
    %s91 = ssub.s32 %s10, %s17
    %p92 = scmp.eq.s32.totalorder %s91, 0
    %s94 = sadd.s32 %s93, 1
    %s95 = scalar_select %p92, %s93, %s94
    %p98 = pneg %p92
    %p99 = scmp.eq.s32.totalorder %s10, 1
    %p100 = por %p98, %p99
    %p101 = scmp.ne.s32.totalorder %s93, %s96
    %p102 = scmp.eq.s32.totalorder %s10, 0
    %p103 = por %p101, %p102
    %p104 = scmp.ne.s32.totalorder %s93, %s96
    %p105 = scmp.eq.s32.totalorder %s15, 1
    %p106 = por %p104, %p105
    %p107 = scmp.ne.s32.totalorder %s96, %s97
    %p108 = scmp.eq.s32.totalorder %s15, 0
    %p109 = por %p107, %p108
    %p110 = scmp.ne.s32.totalorder %s96, %s97
    %p111 = scmp.eq.s32.totalorder %s16, 1
    %p112 = por %p110, %p111
    %p114 = scmp.ne.s32.totalorder %s97, %s113
    %p115 = scmp.eq.s32.totalorder %s16, 0
    %p116 = por %p114, %p115
    %p117 = scmp.le.s32.totalorder 1, %s10
    %p118 = scmp.lt.s32.totalorder %s10, 3
    %p119 = pnand %p117, %p118
    %p120 = pneg %p119
    // Predicated region
    $region9: #{bottleneck_block_nhwc.4} parent=5 // pred_check
      _
    $region10: #{bottleneck_block_nhwc.4} parent=5 // pred_check_branch
      %122 = sbr.rel (%p119) target = $region12
    $region11: #{bottleneck_block_nhwc.4} parent=5 // pred_region
      %s123 = ssub.s32 %s10, 1
      // Predicated region
      $region13: #{bottleneck_block_nhwc.4} parent=11 // pred_check
        %p124 = pneg %p57
      $region14: #{bottleneck_block_nhwc.4} parent=11 // pred_check_branch
        %126 = sbr.rel (%p124) target = $region16
      $region15: #{bottleneck_block_nhwc.4} parent=11 // pred_region
        _
      $region16: #{bottleneck_block_nhwc.4} parent=11 // pred_fallthru
        _
    $region12: #{bottleneck_block_nhwc.4} parent=5 // pred_fallthru
      _
    %p127 = scmp.lt.s32.totalorder %s10, 2
    // Predicated region
    $region17: #{bottleneck_block_nhwc.4} parent=5 // pred_check
      %p128 = pneg %p127
    $region18: #{bottleneck_block_nhwc.4} parent=5 // pred_check_branch
      %130 = sbr.rel (%p128) target = $region20
    $region19: #{bottleneck_block_nhwc.4} parent=5 // pred_region
      // Predicated region
      $region21: #{bottleneck_block_nhwc.4} parent=19 // pred_check
        %p131 = pneg %p30
      $region22: #{bottleneck_block_nhwc.4} parent=19 // pred_check_branch
        %133 = sbr.rel (%p131) target = $region24
      $region23: #{bottleneck_block_nhwc.4} parent=19 // pred_region
        %s134 = smul.u32 32, %s10
        %p135 = scmp.lt.s32.totalorder %s134, 63
        %s136 = scalar_select %p135, %s134, 63
        %s137 = smul.addr %s136, 8
        %s138 = scalar_lea.vmem %s0, %s137
        %s139 = smul.u32 32, %s10
      $region24: #{bottleneck_block_nhwc.4} parent=19 // pred_fallthru
        _
    $region20: #{bottleneck_block_nhwc.4} parent=5 // pred_fallthru
      _
    %p140 = scmp.le.s32.totalorder 1, %s10
    %p141 = scmp.lt.s32.totalorder %s10, 3
    %p142 = pnand %p140, %p141
    %p143 = pneg %p142
    // Predicated region
    $region25: #{bottleneck_block_nhwc.4} parent=5 // pred_check
      _
    $region26: #{bottleneck_block_nhwc.4} parent=5 // pred_check_branch
      %145 = sbr.rel (%p142) target = $region28
    $region27: #{bottleneck_block_nhwc.4} parent=5 // pred_region
      %s146 = ssub.s32 %s10, 1
      %s147 = smul.u32 32, %s15
      %p148 = scmp.lt.s32.totalorder %s147, 63
      %s149 = scalar_select %p148, %s147, 63
      %s150 = smul.addr %s149, 8
      %s151 = scalar_lea.vmem %s0, %s150
      %p152 = pneg %p36
      %p153 = pneg %p33
      %p154 = pneg %p57
      %p155 = pneg %p54
      %p156 = pneg %p83
      %p157 = pneg %p80
      %s158 = smul.u32 32, %s15
      %p159 = scmp.lt.s32.totalorder %s158, 63
      %s160 = scalar_select %p159, %s158, 63
      %s161 = smul.addr %s160, 4
      %s162 = scalar_lea.vmem %s2, %s161
      %p163 = pneg %p109
      %p164 = pneg %p106
      %p165 = scmp.lt.s32.totalorder %s15, 1
      %s166 = scalar_select %p165, %s15, 1
      %s167 = smul.addr %s166, 2
      %s168 = scalar_lea.vmem %s3, %s167
      %s169 = smul.u32 32, %s15
      %p170 = scmp.lt.s32.totalorder %s169, 63
      %s171 = scalar_select %p170, %s169, 63
      %s172 = smul.addr %s171, 8
      %s173 = scalar_lea.vmem %s0, %s172
      %s174 = smul.u32 32, %s15
      %s175 = smul.u32 32, %s15
      %p176 = scmp.lt.s32.totalorder %s175, 63
      %s177 = scalar_select %p176, %s175, 63
      %s178 = smul.addr %s177, 4
      %s179 = scalar_lea.vmem %s2, %s178
      %s180 = smul.u32 32, %s15
      %p181 = scmp.lt.s32.totalorder %s15, 1
      %s182 = scalar_select %p181, %s15, 1
      %s183 = smul.addr %s182, 2
      %s184 = scalar_lea.vmem %s3, %s183
      %v186 = vld [vmem:[%s173] sm:$0xff]
      %v187 = vld [vmem:[%s173 + $0x8] sm:$0xff]
      %v188 = vld [vmem:[%s173 + $0x10] sm:$0xff]
      %v189 = vld [vmem:[%s173 + $0x18] sm:$0xff]
      %v190 = vld [vmem:[%s173 + $0x20] sm:$0xff]
      %v191 = vld [vmem:[%s173 + $0x28] sm:$0xff]
      %v192 = vld [vmem:[%s173 + $0x30] sm:$0xff]
      %v193 = vld [vmem:[%s173 + $0x38] sm:$0xff]
      %v194 = vld [vmem:[%s173 + $0x40] sm:$0xff]
      %v195 = vld [vmem:[%s173 + $0x48] sm:$0xff]
      %v196 = vld [vmem:[%s173 + $0x50] sm:$0xff]
      %v197 = vld [vmem:[%s173 + $0x58] sm:$0xff]
      %v198 = vld [vmem:[%s173 + $0x60] sm:$0xff]
      %v199 = vld [vmem:[%s173 + $0x68] sm:$0xff]
      %v200 = vld [vmem:[%s173 + $0x70] sm:$0xff]
      %v201 = vld [vmem:[%s173 + $0x78] sm:$0xff]
      %v202 = vld [vmem:[%s173 + $0x80] sm:$0xff]
      %v203 = vld [vmem:[%s173 + $0x88] sm:$0xff]
      %v204 = vld [vmem:[%s173 + $0x90] sm:$0xff]
      %v205 = vld [vmem:[%s173 + $0x98] sm:$0xff]
      %v206 = vld [vmem:[%s173 + $0xa0] sm:$0xff]
      %v207 = vld [vmem:[%s173 + $0xa8] sm:$0xff]
      %v208 = vld [vmem:[%s173 + $0xb0] sm:$0xff]
      %v209 = vld [vmem:[%s173 + $0xb8] sm:$0xff]
      %v210 = vld [vmem:[%s173 + $0xc0] sm:$0xff]
      %v211 = vld [vmem:[%s173 + $0xc8] sm:$0xff]
      %v212 = vld [vmem:[%s173 + $0xd0] sm:$0xff]
      %v213 = vld [vmem:[%s173 + $0xd8] sm:$0xff]
      %v214 = vld [vmem:[%s173 + $0xe0] sm:$0xff]
      %v215 = vld [vmem:[%s173 + $0xe8] sm:$0xff]
      %v216 = vld [vmem:[%s173 + $0xf0] sm:$0xff]
      %v217 = vld [vmem:[%s173 + $0xf8] sm:$0xff]
      %v218 = vpack.c.bf16 %v187, %v186
      %v219 = vpack.c.bf16 %v189, %v188
      %v220 = vpack.c.bf16 %v191, %v190
      %v221 = vpack.c.bf16 %v193, %v192
      %v222 = vpack.c.bf16 %v195, %v194
      %v223 = vpack.c.bf16 %v197, %v196
      %v224 = vpack.c.bf16 %v199, %v198
      %v225 = vpack.c.bf16 %v201, %v200
      %v226 = vpack.c.bf16 %v203, %v202
      %v227 = vpack.c.bf16 %v205, %v204
      %v228 = vpack.c.bf16 %v207, %v206
      %v229 = vpack.c.bf16 %v209, %v208
      %v230 = vpack.c.bf16 %v211, %v210
      %v231 = vpack.c.bf16 %v213, %v212
      %v232 = vpack.c.bf16 %v215, %v214
      %v233 = vpack.c.bf16 %v217, %v216
      %v234 = vld [vmem:[%s1] sm:$0xf]
      %v235 = vld [vmem:[%s1 + $0x4] sm:$0xf]
      %v236 = vld [vmem:[%s1 + $0x8] sm:$0xf]
      %v237 = vld [vmem:[%s1 + $0xc] sm:$0xf]
      %v238 = vld [vmem:[%s1 + $0x10] sm:$0xf]
      %v239 = vld [vmem:[%s1 + $0x14] sm:$0xf]
      %v240 = vld [vmem:[%s1 + $0x18] sm:$0xf]
      %v241 = vld [vmem:[%s1 + $0x1c] sm:$0xf]
      %v242 = vld [vmem:[%s1 + $0x20] sm:$0xf]
      %v243 = vld [vmem:[%s1 + $0x24] sm:$0xf]
      %v244 = vld [vmem:[%s1 + $0x28] sm:$0xf]
      %v245 = vld [vmem:[%s1 + $0x2c] sm:$0xf]
      %v246 = vld [vmem:[%s1 + $0x30] sm:$0xf]
      %v247 = vld [vmem:[%s1 + $0x34] sm:$0xf]
      %v248 = vld [vmem:[%s1 + $0x38] sm:$0xf]
      %v249 = vld [vmem:[%s1 + $0x3c] sm:$0xf]
      %v266 = vunpack.c.l.b16 %v234
      %v267 = vunpack.c.l.b16 %v235
      %v268 = vunpack.c.l.b16 %v236
      %v269 = vunpack.c.l.b16 %v237
      %v270 = vunpack.c.l.b16 %v238
      %v271 = vunpack.c.l.b16 %v239
      %v272 = vunpack.c.l.b16 %v240
      %v273 = vunpack.c.l.b16 %v241
      %v274 = vunpack.c.l.b16 %v242
      %v275 = vunpack.c.l.b16 %v243
      %v276 = vunpack.c.l.b16 %v244
      %v277 = vunpack.c.l.b16 %v245
      %v278 = vunpack.c.l.b16 %v246
      %v279 = vunpack.c.l.b16 %v247
      %v280 = vunpack.c.l.b16 %v248
      %v281 = vunpack.c.l.b16 %v249
      %v282 = vpack.c.b16 %v267, %v266
      %v283 = vpack.c.b16 %v269, %v268
      %v284 = vpack.c.b16 %v271, %v270
      %v285 = vpack.c.b16 %v273, %v272
      %v286 = vpack.c.b16 %v275, %v274
      %v287 = vpack.c.b16 %v277, %v276
      %v288 = vpack.c.b16 %v279, %v278
      %v289 = vpack.c.b16 %v281, %v280
      %298 = vmatprep.subr.bf16.mxu0 0
      %299 = vmatpush1.bf16.msra.mxu0 %v289
      %300 = vmatprep.subr.bf16.mxu0 0
      %301 = vmatpush1.bf16.msra.mxu0 %v288
      %302 = vmatprep.subr.bf16.mxu0 0
      %303 = vmatpush1.bf16.msra.mxu0 %v287
      %304 = vmatprep.subr.bf16.mxu0 0
      %305 = vmatpush1.bf16.msra.mxu0 %v286
      %306 = vmatprep.subr.bf16.mxu0 0
      %307 = vmatpush1.bf16.msra.mxu0 %v285
      %308 = vmatprep.subr.bf16.mxu0 0
      %309 = vmatpush1.bf16.msra.mxu0 %v284
      %310 = vmatprep.subr.bf16.mxu0 0
      %311 = vmatpush1.bf16.msra.mxu0 %v283
      %312 = vmatprep.subr.bf16.mxu0 0
      %313 = vmatpush1.bf16.msra.mxu0 %v282
      %314 = vmatprep.subr.bf16.mxu0 0
      %315 = vmatpush2.bf16.msra.mxu0 0
      %316 = vmatprep.subr.bf16.mxu0 0
      %317 = vmatpush2.bf16.msra.mxu0 0
      %318 = vmatprep.subr.bf16.mxu0 0
      %319 = vmatpush2.bf16.msra.mxu0 0
      %320 = vmatprep.subr.bf16.mxu0 0
      %321 = vmatpush2.bf16.msra.mxu0 0
      %322 = vmatprep.subr.bf16.mxu0 0
      %323 = vmatpush2.bf16.msra.mxu0 0
      %324 = vmatprep.subr.bf16.mxu0 0
      %325 = vmatpush2.bf16.msra.mxu0 0
      %326 = vmatprep.subr.bf16.mxu0 0
      %327 = vmatpush2.bf16.msra.mxu0 0
      %328 = vmatprep.subr.bf16.mxu0 0
      %329 = vmatpush2.bf16.msra.mxu0 0
      %330 = vmatprep.mubr.bf16.mxu0 0
      %331 = vmatmul.mubr.bf16.gmra.mxu0 %v218
      %v332 = vpop.f32.mrf.mxu0
      %v333 = vadd.f32 0.0, %v332
      %v334 = vpop.f32.mrf.mxu0
      %v335 = vpop.f32.mrf.mxu0
      %v336 = vadd.f32 0.0, %v335
      %v337 = vpop.f32.mrf.mxu0
      %338 = vmatprep.mubr.bf16.mxu0 0
      %339 = vmatmul.mubr.bf16.gmra.mxu0 %v219
      %v340 = vpop.f32.mrf.mxu0
      %v341 = vadd.f32 0.0, %v340
      %v342 = vpop.f32.mrf.mxu0
      %v343 = vpop.f32.mrf.mxu0
      %v344 = vadd.f32 0.0, %v343
      %v345 = vpop.f32.mrf.mxu0
      %346 = vmatprep.mubr.bf16.mxu0 0
      %347 = vmatmul.mubr.bf16.gmra.mxu0 %v220
      %v348 = vpop.f32.mrf.mxu0
      %v349 = vadd.f32 0.0, %v348
      %v350 = vpop.f32.mrf.mxu0
      %v351 = vpop.f32.mrf.mxu0
      %v352 = vadd.f32 0.0, %v351
      %v353 = vpop.f32.mrf.mxu0
      %354 = vmatprep.mubr.bf16.mxu0 0
      %355 = vmatmul.mubr.bf16.gmra.mxu0 %v221
      %v356 = vpop.f32.mrf.mxu0
      %v357 = vadd.f32 0.0, %v356
      %v358 = vpop.f32.mrf.mxu0
      %v359 = vpop.f32.mrf.mxu0
      %v360 = vadd.f32 0.0, %v359
      %v361 = vpop.f32.mrf.mxu0
      %362 = vmatprep.mubr.bf16.mxu0 0
      %363 = vmatmul.mubr.bf16.gmra.mxu0 %v222
      %v364 = vpop.f32.mrf.mxu0
      %v365 = vadd.f32 0.0, %v364
      %v366 = vpop.f32.mrf.mxu0
      %v367 = vpop.f32.mrf.mxu0
      %v368 = vadd.f32 0.0, %v367
      %v369 = vpop.f32.mrf.mxu0
      %370 = vmatprep.mubr.bf16.mxu0 0
      %371 = vmatmul.mubr.bf16.gmra.mxu0 %v223
      %v372 = vpop.f32.mrf.mxu0
      %v373 = vadd.f32 0.0, %v372
      %v374 = vpop.f32.mrf.mxu0
      %v375 = vpop.f32.mrf.mxu0
      %v376 = vadd.f32 0.0, %v375
      %v377 = vpop.f32.mrf.mxu0
      %378 = vmatprep.mubr.bf16.mxu0 0
      %379 = vmatmul.mubr.bf16.gmra.mxu0 %v224
      %v380 = vpop.f32.mrf.mxu0
      %v381 = vadd.f32 0.0, %v380
      %v382 = vpop.f32.mrf.mxu0
      %v383 = vpop.f32.mrf.mxu0
      %v384 = vadd.f32 0.0, %v383
      %v385 = vpop.f32.mrf.mxu0
      %386 = vmatprep.mubr.bf16.mxu0 0
      %387 = vmatmul.mubr.bf16.gmra.mxu0 %v225
      %v388 = vpop.f32.mrf.mxu0
      %v389 = vadd.f32 0.0, %v388
      %v390 = vpop.f32.mrf.mxu0
      %v391 = vpop.f32.mrf.mxu0
      %v392 = vadd.f32 0.0, %v391
      %v393 = vpop.f32.mrf.mxu0
      %394 = vmatprep.mubr.bf16.mxu0 0
      %395 = vmatmul.mubr.bf16.gmra.mxu0 %v226
      %v396 = vpop.f32.mrf.mxu0
      %v397 = vadd.f32 0.0, %v396
      %v398 = vpop.f32.mrf.mxu0
      %v399 = vpop.f32.mrf.mxu0
      %v400 = vadd.f32 0.0, %v399
      %v401 = vpop.f32.mrf.mxu0
      %402 = vmatprep.mubr.bf16.mxu0 0
      %403 = vmatmul.mubr.bf16.gmra.mxu0 %v227
      %v404 = vpop.f32.mrf.mxu0
      %v405 = vadd.f32 0.0, %v404
      %v406 = vpop.f32.mrf.mxu0
      %v407 = vpop.f32.mrf.mxu0
      %v408 = vadd.f32 0.0, %v407
      %v409 = vpop.f32.mrf.mxu0
      %410 = vmatprep.mubr.bf16.mxu0 0
      %411 = vmatmul.mubr.bf16.gmra.mxu0 %v228
      %v412 = vpop.f32.mrf.mxu0
      %v413 = vadd.f32 0.0, %v412
      %v414 = vpop.f32.mrf.mxu0
      %v415 = vpop.f32.mrf.mxu0
      %v416 = vadd.f32 0.0, %v415
      %v417 = vpop.f32.mrf.mxu0
      %418 = vmatprep.mubr.bf16.mxu0 0
      %419 = vmatmul.mubr.bf16.gmra.mxu0 %v229
      %v420 = vpop.f32.mrf.mxu0
      %v421 = vadd.f32 0.0, %v420
      %v422 = vpop.f32.mrf.mxu0
      %v423 = vpop.f32.mrf.mxu0
      %v424 = vadd.f32 0.0, %v423
      %v425 = vpop.f32.mrf.mxu0
      %426 = vmatprep.mubr.bf16.mxu0 0
      %427 = vmatmul.mubr.bf16.gmra.mxu0 %v230
      %v428 = vpop.f32.mrf.mxu0
      %v429 = vadd.f32 0.0, %v428
      %v430 = vpop.f32.mrf.mxu0
      %v431 = vpop.f32.mrf.mxu0
      %v432 = vadd.f32 0.0, %v431
      %v433 = vpop.f32.mrf.mxu0
      %434 = vmatprep.mubr.bf16.mxu0 0
      %435 = vmatmul.mubr.bf16.gmra.mxu0 %v231
      %v436 = vpop.f32.mrf.mxu0
      %v437 = vadd.f32 0.0, %v436
      %v438 = vpop.f32.mrf.mxu0
      %v439 = vpop.f32.mrf.mxu0
      %v440 = vadd.f32 0.0, %v439
      %v441 = vpop.f32.mrf.mxu0
      %442 = vmatprep.mubr.bf16.mxu0 0
      %443 = vmatmul.mubr.bf16.gmra.mxu0 %v232
      %v444 = vpop.f32.mrf.mxu0
      %v445 = vadd.f32 0.0, %v444
      %v446 = vpop.f32.mrf.mxu0
      %v447 = vpop.f32.mrf.mxu0
      %v448 = vadd.f32 0.0, %v447
      %v449 = vpop.f32.mrf.mxu0
      %450 = vmatprep.mubr.bf16.mxu0 0
      %451 = vmatmul.mubr.bf16.gmra.mxu0 %v233
      %v452 = vpop.f32.mrf.mxu0
      %v453 = vadd.f32 0.0, %v452
      %v454 = vpop.f32.mrf.mxu0
      %v455 = vpop.f32.mrf.mxu0
      %v456 = vadd.f32 0.0, %v455
      %v457 = vpop.f32.mrf.mxu0
      %458 = vdwg.mxu0
      %v459 = vpack.c.bf16 %v336, %v333
      %v460 = vpack.c.bf16 %v344, %v341
      %v461 = vpack.c.bf16 %v352, %v349
      %v462 = vpack.c.bf16 %v360, %v357
      %v463 = vpack.c.bf16 %v368, %v365
      %v464 = vpack.c.bf16 %v376, %v373
      %v465 = vpack.c.bf16 %v384, %v381
      %v466 = vpack.c.bf16 %v392, %v389
      %v467 = vpack.c.bf16 %v400, %v397
      %v468 = vpack.c.bf16 %v408, %v405
      %v469 = vpack.c.bf16 %v416, %v413
      %v470 = vpack.c.bf16 %v424, %v421
      %v471 = vpack.c.bf16 %v432, %v429
      %v472 = vpack.c.bf16 %v440, %v437
      %v473 = vpack.c.bf16 %v448, %v445
      %v474 = vpack.c.bf16 %v456, %v453
      %v491 = vunpack.c.l.b16 %v459
      %v492 = vunpack.c.h.b16 %v459
      %v493 = vunpack.c.l.b16 %v460
      %v494 = vunpack.c.h.b16 %v460
      %v495 = vunpack.c.l.b16 %v461
      %v496 = vunpack.c.h.b16 %v461
      %v497 = vunpack.c.l.b16 %v462
      %v498 = vunpack.c.h.b16 %v462
      %v499 = vunpack.c.l.b16 %v463
      %v500 = vunpack.c.h.b16 %v463
      %v501 = vunpack.c.l.b16 %v464
      %v502 = vunpack.c.h.b16 %v464
      %v503 = vunpack.c.l.b16 %v465
      %v504 = vunpack.c.h.b16 %v465
      %v505 = vunpack.c.l.b16 %v466
      %v506 = vunpack.c.h.b16 %v466
      %v507 = vunpack.c.l.b16 %v467
      %v508 = vunpack.c.h.b16 %v467
      %v509 = vunpack.c.l.b16 %v468
      %v510 = vunpack.c.h.b16 %v468
      %v511 = vunpack.c.l.b16 %v469
      %v512 = vunpack.c.h.b16 %v469
      %v513 = vunpack.c.l.b16 %v470
      %v514 = vunpack.c.h.b16 %v470
      %v515 = vunpack.c.l.b16 %v471
      %v516 = vunpack.c.h.b16 %v471
      %v517 = vunpack.c.l.b16 %v472
      %v518 = vunpack.c.h.b16 %v472
      %v519 = vunpack.c.l.b16 %v473
      %v520 = vunpack.c.h.b16 %v473
      %v521 = vunpack.c.l.b16 %v474
      %v522 = vunpack.c.h.b16 %v474
      %v523 = vpack.c.b16 %v491, %v491
      %v524 = vpack.c.b16 %v492, %v492
      %v525 = vpack.c.b16 %v493, %v493
      %v526 = vpack.c.b16 %v494, %v494
      %v527 = vpack.c.b16 %v495, %v495
      %v528 = vpack.c.b16 %v496, %v496
      %v529 = vpack.c.b16 %v497, %v497
      %v530 = vpack.c.b16 %v498, %v498
      %v531 = vpack.c.b16 %v499, %v499
      %v532 = vpack.c.b16 %v500, %v500
      %v533 = vpack.c.b16 %v501, %v501
      %v534 = vpack.c.b16 %v502, %v502
      %v535 = vpack.c.b16 %v503, %v503
      %v536 = vpack.c.b16 %v504, %v504
      %v537 = vpack.c.b16 %v505, %v505
      %v538 = vpack.c.b16 %v506, %v506
      %v539 = vpack.c.b16 %v507, %v507
      %v540 = vpack.c.b16 %v508, %v508
      %v541 = vpack.c.b16 %v509, %v509
      %v542 = vpack.c.b16 %v510, %v510
      %v543 = vpack.c.b16 %v511, %v511
      %v544 = vpack.c.b16 %v512, %v512
      %v545 = vpack.c.b16 %v513, %v513
      %v546 = vpack.c.b16 %v514, %v514
      %v547 = vpack.c.b16 %v515, %v515
      %v548 = vpack.c.b16 %v516, %v516
      %v549 = vpack.c.b16 %v517, %v517
      %v550 = vpack.c.b16 %v518, %v518
      %v551 = vpack.c.b16 %v519, %v519
      %v552 = vpack.c.b16 %v520, %v520
      %v553 = vpack.c.b16 %v521, %v521
      %v554 = vpack.c.b16 %v522, %v522
      %vm587 = vcmask 257024
      %588 = vst.msk [vmem:[%s179] sm:$0xf] %vm587, %v523
      %589 = vst.msk [vmem:[%s179 + $0x4] sm:$0xf] %vm587, %v524
      %590 = vst.msk [vmem:[%s179 + $0x8] sm:$0xf] %vm587, %v525
      %591 = vst.msk [vmem:[%s179 + $0xc] sm:$0xf] %vm587, %v526
      %592 = vst.msk [vmem:[%s179 + $0x10] sm:$0xf] %vm587, %v527
      %593 = vst.msk [vmem:[%s179 + $0x14] sm:$0xf] %vm587, %v528
      %594 = vst.msk [vmem:[%s179 + $0x18] sm:$0xf] %vm587, %v529
      %595 = vst.msk [vmem:[%s179 + $0x1c] sm:$0xf] %vm587, %v530
      %596 = vst.msk [vmem:[%s179 + $0x20] sm:$0xf] %vm587, %v531
      %597 = vst.msk [vmem:[%s179 + $0x24] sm:$0xf] %vm587, %v532
      %598 = vst.msk [vmem:[%s179 + $0x28] sm:$0xf] %vm587, %v533
      %599 = vst.msk [vmem:[%s179 + $0x2c] sm:$0xf] %vm587, %v534
      %600 = vst.msk [vmem:[%s179 + $0x30] sm:$0xf] %vm587, %v535
      %601 = vst.msk [vmem:[%s179 + $0x34] sm:$0xf] %vm587, %v536
      %602 = vst.msk [vmem:[%s179 + $0x38] sm:$0xf] %vm587, %v537
      %603 = vst.msk [vmem:[%s179 + $0x3c] sm:$0xf] %vm587, %v538
      %604 = vst.msk [vmem:[%s179 + $0x40] sm:$0xf] %vm587, %v539
      %605 = vst.msk [vmem:[%s179 + $0x44] sm:$0xf] %vm587, %v540
      %606 = vst.msk [vmem:[%s179 + $0x48] sm:$0xf] %vm587, %v541
      %607 = vst.msk [vmem:[%s179 + $0x4c] sm:$0xf] %vm587, %v542
      %608 = vst.msk [vmem:[%s179 + $0x50] sm:$0xf] %vm587, %v543
      %609 = vst.msk [vmem:[%s179 + $0x54] sm:$0xf] %vm587, %v544
      %610 = vst.msk [vmem:[%s179 + $0x58] sm:$0xf] %vm587, %v545
      %611 = vst.msk [vmem:[%s179 + $0x5c] sm:$0xf] %vm587, %v546
      %612 = vst.msk [vmem:[%s179 + $0x60] sm:$0xf] %vm587, %v547
      %613 = vst.msk [vmem:[%s179 + $0x64] sm:$0xf] %vm587, %v548
      %614 = vst.msk [vmem:[%s179 + $0x68] sm:$0xf] %vm587, %v549
      %615 = vst.msk [vmem:[%s179 + $0x6c] sm:$0xf] %vm587, %v550
      %616 = vst.msk [vmem:[%s179 + $0x70] sm:$0xf] %vm587, %v551
      %617 = vst.msk [vmem:[%s179 + $0x74] sm:$0xf] %vm587, %v552
      %618 = vst.msk [vmem:[%s179 + $0x78] sm:$0xf] %vm587, %v553
      %619 = vst.msk [vmem:[%s179 + $0x7c] sm:$0xf] %vm587, %v554
      %vm620 = vcmask 261120
      %v621 = vsel %vm620, %v333, 0.0
      %v622 = vsel %vm620, %v336, 0.0
      %v623 = vadd.f32 %v621, %v622
      %v624 = vsel %vm620, %v341, 0.0
      %v625 = vadd.f32 %v623, %v624
      %v626 = vsel %vm620, %v344, 0.0
      %v627 = vadd.f32 %v625, %v626
      %v628 = vsel %vm620, %v349, 0.0
      %v629 = vadd.f32 %v627, %v628
      %v630 = vsel %vm620, %v352, 0.0
      %v631 = vadd.f32 %v629, %v630
      %v632 = vsel %vm620, %v357, 0.0
      %v633 = vadd.f32 %v631, %v632
      %v634 = vsel %vm620, %v360, 0.0
      %v635 = vadd.f32 %v633, %v634
      %v636 = vsel %vm620, %v365, 0.0
      %v637 = vadd.f32 %v635, %v636
      %v638 = vsel %vm620, %v368, 0.0
      %v639 = vadd.f32 %v637, %v638
      %v640 = vsel %vm620, %v373, 0.0
      %v641 = vadd.f32 %v639, %v640
      %v642 = vsel %vm620, %v376, 0.0
      %v643 = vadd.f32 %v641, %v642
      %v644 = vsel %vm620, %v381, 0.0
      %v645 = vadd.f32 %v643, %v644
      %v646 = vsel %vm620, %v384, 0.0
      %v647 = vadd.f32 %v645, %v646
      %v648 = vsel %vm620, %v389, 0.0
      %v649 = vadd.f32 %v647, %v648
      %v650 = vsel %vm620, %v392, 0.0
      %v651 = vadd.f32 %v649, %v650
      %v652 = vsel %vm620, %v397, 0.0
      %v653 = vadd.f32 %v651, %v652
      %v654 = vsel %vm620, %v400, 0.0
      %v655 = vadd.f32 %v653, %v654
      %v656 = vsel %vm620, %v405, 0.0
      %v657 = vadd.f32 %v655, %v656
      %v658 = vsel %vm620, %v408, 0.0
      %v659 = vadd.f32 %v657, %v658
      %v660 = vsel %vm620, %v413, 0.0
      %v661 = vadd.f32 %v659, %v660
      %v662 = vsel %vm620, %v416, 0.0
      %v663 = vadd.f32 %v661, %v662
      %v664 = vsel %vm620, %v421, 0.0
      %v665 = vadd.f32 %v663, %v664
      %v666 = vsel %vm620, %v424, 0.0
      %v667 = vadd.f32 %v665, %v666
      %v668 = vsel %vm620, %v429, 0.0
      %v669 = vadd.f32 %v667, %v668
      %v670 = vsel %vm620, %v432, 0.0
      %v671 = vadd.f32 %v669, %v670
      %v672 = vsel %vm620, %v437, 0.0
      %v673 = vadd.f32 %v671, %v672
      %v674 = vsel %vm620, %v440, 0.0
      %v675 = vadd.f32 %v673, %v674
      %v676 = vsel %vm620, %v445, 0.0
      %v677 = vadd.f32 %v675, %v676
      %v678 = vsel %vm620, %v448, 0.0
      %v679 = vadd.f32 %v677, %v678
      %v680 = vsel %vm620, %v453, 0.0
      %v681 = vadd.f32 %v679, %v680
      %v682 = vsel %vm620, %v456, 0.0
      %v683 = vadd.f32 %v681, %v682
      %v684 = vrot.slane %v683, 4
      %v685 = vadd.f32 %v683, %v684
      %v686 = vrot.slane %v685, 2
      %v687 = vadd.f32 %v685, %v686
      %v688 = vrot.slane %v687, 1
      %v689 = vadd.f32 %v687, %v688
      %v690 = vrcp.pop 256.0
      %v691 = vmul.f32 %v689, %v690
      %v692 = vsub.f32 %v333, %v691
      %v693 = vsub.f32 %v336, %v691
      %v694 = vsub.f32 %v341, %v691
      %v695 = vsub.f32 %v344, %v691
      %v696 = vsub.f32 %v349, %v691
      %v697 = vsub.f32 %v352, %v691
      %v698 = vsub.f32 %v357, %v691
      %v699 = vsub.f32 %v360, %v691
      %v700 = vsub.f32 %v365, %v691
      %v701 = vsub.f32 %v368, %v691
      %v702 = vsub.f32 %v373, %v691
      %v703 = vsub.f32 %v376, %v691
      %v704 = vsub.f32 %v381, %v691
      %v705 = vsub.f32 %v384, %v691
      %v706 = vsub.f32 %v389, %v691
      %v707 = vsub.f32 %v392, %v691
      %v708 = vsub.f32 %v397, %v691
      %v709 = vsub.f32 %v400, %v691
      %v710 = vsub.f32 %v405, %v691
      %v711 = vsub.f32 %v408, %v691
      %v712 = vsub.f32 %v413, %v691
      %v713 = vsub.f32 %v416, %v691
      %v714 = vsub.f32 %v421, %v691
      %v715 = vsub.f32 %v424, %v691
      %v716 = vsub.f32 %v429, %v691
      %v717 = vsub.f32 %v432, %v691
      %v718 = vsub.f32 %v437, %v691
      %v719 = vsub.f32 %v440, %v691
      %v720 = vsub.f32 %v445, %v691
      %v721 = vsub.f32 %v448, %v691
      %v722 = vsub.f32 %v453, %v691
      %v723 = vsub.f32 %v456, %v691
      %v724 = vmul.f32 %v692, %v692
      %v725 = vmul.f32 %v693, %v693
      %v726 = vmul.f32 %v694, %v694
      %v727 = vmul.f32 %v695, %v695
      %v728 = vmul.f32 %v696, %v696
      %v729 = vmul.f32 %v697, %v697
      %v730 = vmul.f32 %v698, %v698
      %v731 = vmul.f32 %v699, %v699
      %v732 = vmul.f32 %v700, %v700
      %v733 = vmul.f32 %v701, %v701
      %v734 = vmul.f32 %v702, %v702
      %v735 = vmul.f32 %v703, %v703
      %v736 = vmul.f32 %v704, %v704
      %v737 = vmul.f32 %v705, %v705
      %v738 = vmul.f32 %v706, %v706
      %v739 = vmul.f32 %v707, %v707
      %v740 = vmul.f32 %v708, %v708
      %v741 = vmul.f32 %v709, %v709
      %v742 = vmul.f32 %v710, %v710
      %v743 = vmul.f32 %v711, %v711
      %v744 = vmul.f32 %v712, %v712
      %v745 = vmul.f32 %v713, %v713
      %v746 = vmul.f32 %v714, %v714
      %v747 = vmul.f32 %v715, %v715
      %v748 = vmul.f32 %v716, %v716
      %v749 = vmul.f32 %v717, %v717
      %v750 = vmul.f32 %v718, %v718
      %v751 = vmul.f32 %v719, %v719
      %v752 = vmul.f32 %v720, %v720
      %v753 = vmul.f32 %v721, %v721
      %v754 = vmul.f32 %v722, %v722
      %v755 = vmul.f32 %v723, %v723
      %v756 = vsel %vm620, %v724, 0.0
      %v757 = vsel %vm620, %v725, 0.0
      %v758 = vadd.f32 %v756, %v757
      %v759 = vsel %vm620, %v726, 0.0
      %v760 = vadd.f32 %v758, %v759
      %v761 = vsel %vm620, %v727, 0.0
      %v762 = vadd.f32 %v760, %v761
      %v763 = vsel %vm620, %v728, 0.0
      %v764 = vadd.f32 %v762, %v763
      %v765 = vsel %vm620, %v729, 0.0
      %v766 = vadd.f32 %v764, %v765
      %v767 = vsel %vm620, %v730, 0.0
      %v768 = vadd.f32 %v766, %v767
      %v769 = vsel %vm620, %v731, 0.0
      %v770 = vadd.f32 %v768, %v769
      %v771 = vsel %vm620, %v732, 0.0
      %v772 = vadd.f32 %v770, %v771
      %v773 = vsel %vm620, %v733, 0.0
      %v774 = vadd.f32 %v772, %v773
      %v775 = vsel %vm620, %v734, 0.0
      %v776 = vadd.f32 %v774, %v775
      %v777 = vsel %vm620, %v735, 0.0
      %v778 = vadd.f32 %v776, %v777
      %v779 = vsel %vm620, %v736, 0.0
      %v780 = vadd.f32 %v778, %v779
      %v781 = vsel %vm620, %v737, 0.0
      %v782 = vadd.f32 %v780, %v781
      %v783 = vsel %vm620, %v738, 0.0
      %v784 = vadd.f32 %v782, %v783
      %v785 = vsel %vm620, %v739, 0.0
      %v786 = vadd.f32 %v784, %v785
      %v787 = vsel %vm620, %v740, 0.0
      %v788 = vadd.f32 %v786, %v787
      %v789 = vsel %vm620, %v741, 0.0
      %v790 = vadd.f32 %v788, %v789
      %v791 = vsel %vm620, %v742, 0.0
      %v792 = vadd.f32 %v790, %v791
      %v793 = vsel %vm620, %v743, 0.0
      %v794 = vadd.f32 %v792, %v793
      %v795 = vsel %vm620, %v744, 0.0
      %v796 = vadd.f32 %v794, %v795
      %v797 = vsel %vm620, %v745, 0.0
      %v798 = vadd.f32 %v796, %v797
      %v799 = vsel %vm620, %v746, 0.0
      %v800 = vadd.f32 %v798, %v799
      %v801 = vsel %vm620, %v747, 0.0
      %v802 = vadd.f32 %v800, %v801
      %v803 = vsel %vm620, %v748, 0.0
      %v804 = vadd.f32 %v802, %v803
      %v805 = vsel %vm620, %v749, 0.0
      %v806 = vadd.f32 %v804, %v805
      %v807 = vsel %vm620, %v750, 0.0
      %v808 = vadd.f32 %v806, %v807
      %v809 = vsel %vm620, %v751, 0.0
      %v810 = vadd.f32 %v808, %v809
      %v811 = vsel %vm620, %v752, 0.0
      %v812 = vadd.f32 %v810, %v811
      %v813 = vsel %vm620, %v753, 0.0
      %v814 = vadd.f32 %v812, %v813
      %v815 = vsel %vm620, %v754, 0.0
      %v816 = vadd.f32 %v814, %v815
      %v817 = vsel %vm620, %v755, 0.0
      %v818 = vadd.f32 %v816, %v817
      %v819 = vrot.slane %v818, 4
      %v820 = vadd.f32 %v818, %v819
      %v821 = vrot.slane %v820, 2
      %v822 = vadd.f32 %v820, %v821
      %v823 = vrot.slane %v822, 1
      %v824 = vadd.f32 %v822, %v823
      %vm825 = vcmask 1040384
      %v826 = vsel %vm825, %v691, %v824
      %vm827 = vcmask 254976
      %828 = vst.msk [vmem:[%s184] sm:$0x3] %vm827, %v826
      %s829 = smul.u32 32, %s15
      %p830 = scmp.lt.s32.totalorder %s829, 63
      %s831 = scalar_select %p830, %s829, 63
      %s832 = smul.addr %s831, 4
      %s833 = scalar_lea.vmem %s2, %s832
      %p834 = scmp.lt.s32.totalorder %s15, 1
      %s835 = scalar_select %p834, %s15, 1
      %s836 = smul.addr %s835, 2
      %s837 = scalar_lea.vmem %s3, %s836
      // Predicated region
      $region29: #{bottleneck_block_nhwc.4} parent=27 // pred_check
        %p838 = pneg %p80
      $region30: #{bottleneck_block_nhwc.4} parent=27 // pred_check_branch
        %840 = sbr.rel (%p838) target = $region32
      $region31: #{bottleneck_block_nhwc.4} parent=27 // pred_region
        %s841 = smul.u32 32, %s15
      $region32: #{bottleneck_block_nhwc.4} parent=27 // pred_fallthru
        _
      // Predicated region
      $region33: #{bottleneck_block_nhwc.4} parent=27 // pred_check
        %p842 = pneg %p106
      $region34: #{bottleneck_block_nhwc.4} parent=27 // pred_check_branch
        %844 = sbr.rel (%p842) target = $region36
      $region35: #{bottleneck_block_nhwc.4} parent=27 // pred_region
        _
      $region36: #{bottleneck_block_nhwc.4} parent=27 // pred_fallthru
        _
    $region28: #{bottleneck_block_nhwc.4} parent=5 // pred_fallthru
      _
    %p845 = scmp.le.s32.totalorder 2, %s10
    // Predicated region
    $region37: #{bottleneck_block_nhwc.4} parent=5 // pred_check
      %p846 = pneg %p845
    $region38: #{bottleneck_block_nhwc.4} parent=5 // pred_check_branch
      %848 = sbr.rel (%p846) target = $region40
    $region39: #{bottleneck_block_nhwc.4} parent=5 // pred_region
      %s849 = ssub.s32 %s10, 2
      // Predicated region
      $region41: #{bottleneck_block_nhwc.4} parent=39 // pred_check
        %p850 = pneg %p86
      $region42: #{bottleneck_block_nhwc.4} parent=39 // pred_check_branch
        %852 = sbr.rel (%p850) target = $region44
      $region43: #{bottleneck_block_nhwc.4} parent=39 // pred_region
        %s853 = smul.u32 32, %s16
        %p854 = scmp.lt.s32.totalorder %s853, 63
        %s855 = scalar_select %p854, %s853, 63
        %s856 = smul.addr %s855, 4
        %s857 = scalar_lea.vmem %s2, %s856
      $region44: #{bottleneck_block_nhwc.4} parent=39 // pred_fallthru
        _
      // Predicated region
      $region45: #{bottleneck_block_nhwc.4} parent=39 // pred_check
        %p858 = pneg %p112
      $region46: #{bottleneck_block_nhwc.4} parent=39 // pred_check_branch
        %860 = sbr.rel (%p858) target = $region48
      $region47: #{bottleneck_block_nhwc.4} parent=39 // pred_region
        %p861 = scmp.lt.s32.totalorder %s16, 1
        %s862 = scalar_select %p861, %s16, 1
        %s863 = smul.addr %s862, 2
        %s864 = scalar_lea.vmem %s3, %s863
      $region48: #{bottleneck_block_nhwc.4} parent=39 // pred_fallthru
        _
    $region40: #{bottleneck_block_nhwc.4} parent=5 // pred_fallthru
      _
  $region6: #{bottleneck_block_nhwc.4} parent=0 // loop_footer
    %s14 = sadd.s32 1, %s10
  $region7: #{bottleneck_block_nhwc.4} parent=0 // loop_footer_branch
    %9 = sbr.rel target = $region3
  $region8: #{bottleneck_block_nhwc.4} parent=0 // loop_exit
    _

// kernel: bottleneck_block_nhwc.6
$region0: #{bottleneck_block_nhwc.6}
  #allocation0 [shape = 'u32[]', space=smem, size = 0x4, offset = 0x4, fixed_abs, tag = 'smem constant byte address 0x4 - core index']
  #allocation1 [shape = 'u32[144,128]{1,0:T(1,128)}', space=vmem, size = 0x12000, scoped, tag = 'internal scratch']
  %s0 = inlined_call_operand.vmem [shape: bf16[512,32], index: 0, kind: input, shape index: {}]
  %s1 = inlined_call_operand.vmem [shape: f32[1,32], index: 1, kind: input, shape index: {}]
  %s2 = inlined_call_operand.vmem [shape: f32[1,32], index: 2, kind: input, shape index: {}]
  %s3 = inlined_call_operand.vmem [shape: bf16[32,128], index: 3, kind: input, shape index: {}]
  %s4 = inlined_call_operand.vmem [shape: bf16[512,128], index: 4, kind: output, shape index: {0}]
  %s5 = inlined_call_operand.vmem [shape: f32[2,2,128], index: 5, kind: output, shape index: {1}]
  %6 = xla_tuple %s4, %s5
  %s7 = sld [smem:[#allocation0]]
  $region57: #{bottleneck_block_nhwc.6} parent=0
    _
  %s9 = ssub.s32 1, %s7
  %s10 = scalar_select 0, %s9, %s7
  loop: start=0, step=1, limit=4
  $region2: #{bottleneck_block_nhwc.6} parent=0 // loop_pre_header
    _
  $region3: #{bottleneck_block_nhwc.6} parent=0 // loop_header
    %s12 = sphi 0, %s16
    %p13 = scmp.ge.s32.totalorder %s12, 4
    %s22 = sphi 0, %s24
    %s25 = sphi 0, %s22
    %s26 = sphi 0, %s25
    %s42 = sphi 0, %s26
    %s46 = sphi 0, %s46
    %s48 = sphi 0, %s46
    %s49 = sphi 0, %s48
    %s63 = sphi 0, %s49
    %s67 = sphi 0, %s67
    %s69 = sphi 0, %s67
    %s70 = sphi 0, %s69
    %s84 = sphi 0, %s70
    %s88 = sphi 0, %s88
    %s90 = sphi 0, %s88
    %s91 = sphi 0, %s90
    %s105 = sphi 0, %s91
    %s111 = sphi 0, %s113
    %s114 = sphi 0, %s111
    %s115 = sphi 0, %s114
    %s131 = sphi 0, %s115
    %s137 = sphi 0, %s139
    %s140 = sphi 0, %s137
    %s141 = sphi 0, %s140
    %s157 = sphi 0, %s141
  $region4: #{bottleneck_block_nhwc.6} parent=0 // loop_header_branch
    %15 = sbr.rel (%p13) target = $region8
  $region5: #{bottleneck_block_nhwc.6} parent=0 // loop_body
    %s17 = ssub.s32 %s12, 1
    %s18 = ssub.s32 %s12, 2
    %s19 = sadd.s32 %s12, 1
    %s20 = ssub.s32 %s12, %s19
    %p21 = scmp.eq.s32.totalorder %s20, 0
    %s23 = sadd.s32 %s22, 1
    %s24 = scalar_select %p21, %s22, %s23
    %p27 = pneg %p21
    %p28 = scmp.eq.s32.totalorder %s12, 1
    %p29 = por %p27, %p28
    %p30 = scmp.ne.s32.totalorder %s22, %s25
    %p31 = scmp.eq.s32.totalorder %s12, 0
    %p32 = por %p30, %p31
    %p33 = scmp.ne.s32.totalorder %s22, %s25
    %p34 = scmp.eq.s32.totalorder %s17, 1
    %p35 = por %p33, %p34
    %p36 = scmp.ne.s32.totalorder %s25, %s26
    %p37 = scmp.eq.s32.totalorder %s17, 0
    %p38 = por %p36, %p37
    %p39 = scmp.ne.s32.totalorder %s25, %s26
    %p40 = scmp.eq.s32.totalorder %s18, 1
    %p41 = por %p39, %p40
    %p43 = scmp.ne.s32.totalorder %s26, %s42
    %p44 = scmp.eq.s32.totalorder %s18, 0
    %p45 = por %p43, %p44
    %s47 = sadd.s32 %s46, 1
    %p50 = scmp.eq.s32.totalorder %s12, 1
    %p51 = scmp.ne.s32.totalorder %s46, %s48
    %p52 = scmp.eq.s32.totalorder %s12, 0
    %p53 = por %p51, %p52
    %p54 = scmp.ne.s32.totalorder %s46, %s48
    %p55 = scmp.eq.s32.totalorder %s17, 1
    %p56 = por %p54, %p55
    %p57 = scmp.ne.s32.totalorder %s48, %s49
    %p58 = scmp.eq.s32.totalorder %s17, 0
    %p59 = por %p57, %p58
    %p60 = scmp.ne.s32.totalorder %s48, %s49
    %p61 = scmp.eq.s32.totalorder %s18, 1
    %p62 = por %p60, %p61
    %p64 = scmp.ne.s32.totalorder %s49, %s63
    %p65 = scmp.eq.s32.totalorder %s18, 0
    %p66 = por %p64, %p65
    %s68 = sadd.s32 %s67, 1
    %p71 = scmp.eq.s32.totalorder %s12, 1
    %p72 = scmp.ne.s32.totalorder %s67, %s69
    %p73 = scmp.eq.s32.totalorder %s12, 0
    %p74 = por %p72, %p73
    %p75 = scmp.ne.s32.totalorder %s67, %s69
    %p76 = scmp.eq.s32.totalorder %s17, 1
    %p77 = por %p75, %p76
    %p78 = scmp.ne.s32.totalorder %s69, %s70
    %p79 = scmp.eq.s32.totalorder %s17, 0
    %p80 = por %p78, %p79
    %p81 = scmp.ne.s32.totalorder %s69, %s70
    %p82 = scmp.eq.s32.totalorder %s18, 1
    %p83 = por %p81, %p82
    %p85 = scmp.ne.s32.totalorder %s70, %s84
    %p86 = scmp.eq.s32.totalorder %s18, 0
    %p87 = por %p85, %p86
    %s89 = sadd.s32 %s88, 1
    %p92 = scmp.eq.s32.totalorder %s12, 1
    %p93 = scmp.ne.s32.totalorder %s88, %s90
    %p94 = scmp.eq.s32.totalorder %s12, 0
    %p95 = por %p93, %p94
    %p96 = scmp.ne.s32.totalorder %s88, %s90
    %p97 = scmp.eq.s32.totalorder %s17, 1
    %p98 = por %p96, %p97
    %p99 = scmp.ne.s32.totalorder %s90, %s91
    %p100 = scmp.eq.s32.totalorder %s17, 0
    %p101 = por %p99, %p100
    %p102 = scmp.ne.s32.totalorder %s90, %s91
    %p103 = scmp.eq.s32.totalorder %s18, 1
    %p104 = por %p102, %p103
    %p106 = scmp.ne.s32.totalorder %s91, %s105
    %p107 = scmp.eq.s32.totalorder %s18, 0
    %p108 = por %p106, %p107
    %s109 = ssub.s32 %s12, %s19
    %p110 = scmp.eq.s32.totalorder %s109, 0
    %s112 = sadd.s32 %s111, 1
    %s113 = scalar_select %p110, %s111, %s112
    %p116 = pneg %p110
    %p117 = scmp.eq.s32.totalorder %s12, 1
    %p118 = por %p116, %p117
    %p119 = scmp.ne.s32.totalorder %s111, %s114
    %p120 = scmp.eq.s32.totalorder %s12, 0
    %p121 = por %p119, %p120
    %p122 = scmp.ne.s32.totalorder %s111, %s114
    %p123 = scmp.eq.s32.totalorder %s17, 1
    %p124 = por %p122, %p123
    %p125 = scmp.ne.s32.totalorder %s114, %s115
    %p126 = scmp.eq.s32.totalorder %s17, 0
    %p127 = por %p125, %p126
    %p128 = scmp.ne.s32.totalorder %s114, %s115
    %p129 = scmp.eq.s32.totalorder %s18, 1
    %p130 = por %p128, %p129
    %p132 = scmp.ne.s32.totalorder %s115, %s131
    %p133 = scmp.eq.s32.totalorder %s18, 0
    %p134 = por %p132, %p133
    %s135 = ssub.s32 %s12, %s19
    %p136 = scmp.eq.s32.totalorder %s135, 0
    %s138 = sadd.s32 %s137, 1
    %s139 = scalar_select %p136, %s137, %s138
    %p142 = pneg %p136
    %p143 = scmp.eq.s32.totalorder %s12, 1
    %p144 = por %p142, %p143
    %p145 = scmp.ne.s32.totalorder %s137, %s140
    %p146 = scmp.eq.s32.totalorder %s12, 0
    %p147 = por %p145, %p146
    %p148 = scmp.ne.s32.totalorder %s137, %s140
    %p149 = scmp.eq.s32.totalorder %s17, 1
    %p150 = por %p148, %p149
    %p151 = scmp.ne.s32.totalorder %s140, %s141
    %p152 = scmp.eq.s32.totalorder %s17, 0
    %p153 = por %p151, %p152
    %p154 = scmp.ne.s32.totalorder %s140, %s141
    %p155 = scmp.eq.s32.totalorder %s18, 1
    %p156 = por %p154, %p155
    %p158 = scmp.ne.s32.totalorder %s141, %s157
    %p159 = scmp.eq.s32.totalorder %s18, 0
    %p160 = por %p158, %p159
    %p161 = scmp.le.s32.totalorder 1, %s12
    %p162 = scmp.lt.s32.totalorder %s12, 3
    %p163 = pnand %p161, %p162
    %p164 = pneg %p163
    // Predicated region
    $region9: #{bottleneck_block_nhwc.6} parent=5 // pred_check
      _
    $region10: #{bottleneck_block_nhwc.6} parent=5 // pred_check_branch
      %166 = sbr.rel (%p163) target = $region12
    $region11: #{bottleneck_block_nhwc.6} parent=5 // pred_region
      %s167 = ssub.s32 %s12, 1
      // Predicated region
      $region13: #{bottleneck_block_nhwc.6} parent=11 // pred_check
        %p168 = pneg %p59
      $region14: #{bottleneck_block_nhwc.6} parent=11 // pred_check_branch
        %170 = sbr.rel (%p168) target = $region16
      $region15: #{bottleneck_block_nhwc.6} parent=11 // pred_region
        _
      $region16: #{bottleneck_block_nhwc.6} parent=11 // pred_fallthru
        _
      // Predicated region
      $region17: #{bottleneck_block_nhwc.6} parent=11 // pred_check
        %p171 = pneg %p80
      $region18: #{bottleneck_block_nhwc.6} parent=11 // pred_check_branch
        %173 = sbr.rel (%p171) target = $region20
      $region19: #{bottleneck_block_nhwc.6} parent=11 // pred_region
        _
      $region20: #{bottleneck_block_nhwc.6} parent=11 // pred_fallthru
        _
      // Predicated region
      $region21: #{bottleneck_block_nhwc.6} parent=11 // pred_check
        %p174 = pneg %p101
      $region22: #{bottleneck_block_nhwc.6} parent=11 // pred_check_branch
        %176 = sbr.rel (%p174) target = $region24
      $region23: #{bottleneck_block_nhwc.6} parent=11 // pred_region
        _
      $region24: #{bottleneck_block_nhwc.6} parent=11 // pred_fallthru
        _
    $region12: #{bottleneck_block_nhwc.6} parent=5 // pred_fallthru
      _
    %p177 = scmp.lt.s32.totalorder %s12, 2
    // Predicated region
    $region25: #{bottleneck_block_nhwc.6} parent=5 // pred_check
      %p178 = pneg %p177
    $region26: #{bottleneck_block_nhwc.6} parent=5 // pred_check_branch
      %180 = sbr.rel (%p178) target = $region28
    $region27: #{bottleneck_block_nhwc.6} parent=5 // pred_region
      // Predicated region
      $region29: #{bottleneck_block_nhwc.6} parent=27 // pred_check
        %p181 = pneg %p32
      $region30: #{bottleneck_block_nhwc.6} parent=27 // pred_check_branch
        %183 = sbr.rel (%p181) target = $region32
      $region31: #{bottleneck_block_nhwc.6} parent=27 // pred_region
        %s184 = smul.u32 32, %s12
        %p185 = scmp.lt.s32.totalorder %s184, 63
        %s186 = scalar_select %p185, %s184, 63
        %s187 = smul.addr %s186, 4
        %s188 = scalar_lea.vmem %s0, %s187
        %s189 = smul.u32 32, %s12
      $region32: #{bottleneck_block_nhwc.6} parent=27 // pred_fallthru
        _
    $region28: #{bottleneck_block_nhwc.6} parent=5 // pred_fallthru
      _
    %p190 = scmp.le.s32.totalorder 1, %s12
    %p191 = scmp.lt.s32.totalorder %s12, 3
    %p192 = pnand %p190, %p191
    %p193 = pneg %p192
    // Predicated region
    $region33: #{bottleneck_block_nhwc.6} parent=5 // pred_check
      _
    $region34: #{bottleneck_block_nhwc.6} parent=5 // pred_check_branch
      %195 = sbr.rel (%p192) target = $region36
    $region35: #{bottleneck_block_nhwc.6} parent=5 // pred_region
      %s196 = ssub.s32 %s12, 1
      %s197 = smul.u32 32, %s17
      %p198 = scmp.lt.s32.totalorder %s197, 63
      %s199 = scalar_select %p198, %s197, 63
      %s200 = smul.addr %s199, 4
      %s201 = scalar_lea.vmem %s0, %s200
      %p202 = pneg %p38
      %p203 = pneg %p35
      %p204 = pneg %p59
      %p205 = pneg %p56
      %p206 = pneg %p80
      %p207 = pneg %p77
      %p208 = pneg %p101
      %p209 = pneg %p98
      %p210 = pneg %p127
      %p211 = pneg %p124
      %s212 = smul.u32 32, %s17
      %p213 = scmp.lt.s32.totalorder %s212, 63
      %s214 = scalar_select %p213, %s212, 63
      %s215 = smul.addr %s214, 4
      %s216 = scalar_lea.vmem %s4, %s215
      %p217 = pneg %p153
      %p218 = pneg %p150
      %p219 = scmp.lt.s32.totalorder %s17, 1
      %s220 = scalar_select %p219, %s17, 1
      %s221 = smul.addr %s220, 2
      %s222 = scalar_lea.vmem %s5, %s221
      %s223 = smul.u32 32, %s17
      %p224 = scmp.lt.s32.totalorder %s223, 63
      %s225 = scalar_select %p224, %s223, 63
      %s226 = smul.addr %s225, 4
      %s227 = scalar_lea.vmem %s0, %s226
      %s228 = smul.u32 32, %s17
      %s229 = smul.u32 32, %s17
      %p230 = scmp.lt.s32.totalorder %s229, 63
      %s231 = scalar_select %p230, %s229, 63
      %s232 = smul.addr %s231, 4
      %s233 = scalar_lea.vmem %s4, %s232
      %s234 = smul.u32 32, %s17
      %p235 = scmp.lt.s32.totalorder %s17, 1
      %s236 = scalar_select %p235, %s17, 1
      %s237 = smul.addr %s236, 2
      %s238 = scalar_lea.vmem %s5, %s237
      %v240 = vld [vmem:[%s227] sm:$0xf]
      %v241 = vld [vmem:[%s227 + $0x4] sm:$0xf]
      %v242 = vld [vmem:[%s227 + $0x8] sm:$0xf]
      %v243 = vld [vmem:[%s227 + $0xc] sm:$0xf]
      %v244 = vld [vmem:[%s227 + $0x10] sm:$0xf]
      %v245 = vld [vmem:[%s227 + $0x14] sm:$0xf]
      %v246 = vld [vmem:[%s227 + $0x18] sm:$0xf]
      %v247 = vld [vmem:[%s227 + $0x1c] sm:$0xf]
      %v248 = vld [vmem:[%s227 + $0x20] sm:$0xf]
      %v249 = vld [vmem:[%s227 + $0x24] sm:$0xf]
      %v250 = vld [vmem:[%s227 + $0x28] sm:$0xf]
      %v251 = vld [vmem:[%s227 + $0x2c] sm:$0xf]
      %v252 = vld [vmem:[%s227 + $0x30] sm:$0xf]
      %v253 = vld [vmem:[%s227 + $0x34] sm:$0xf]
      %v254 = vld [vmem:[%s227 + $0x38] sm:$0xf]
      %v255 = vld [vmem:[%s227 + $0x3c] sm:$0xf]
      %v256 = vld [vmem:[%s227 + $0x40] sm:$0xf]
      %v257 = vld [vmem:[%s227 + $0x44] sm:$0xf]
      %v258 = vld [vmem:[%s227 + $0x48] sm:$0xf]
      %v259 = vld [vmem:[%s227 + $0x4c] sm:$0xf]
      %v260 = vld [vmem:[%s227 + $0x50] sm:$0xf]
      %v261 = vld [vmem:[%s227 + $0x54] sm:$0xf]
      %v262 = vld [vmem:[%s227 + $0x58] sm:$0xf]
      %v263 = vld [vmem:[%s227 + $0x5c] sm:$0xf]
      %v264 = vld [vmem:[%s227 + $0x60] sm:$0xf]
      %v265 = vld [vmem:[%s227 + $0x64] sm:$0xf]
      %v266 = vld [vmem:[%s227 + $0x68] sm:$0xf]
      %v267 = vld [vmem:[%s227 + $0x6c] sm:$0xf]
      %v268 = vld [vmem:[%s227 + $0x70] sm:$0xf]
      %v269 = vld [vmem:[%s227 + $0x74] sm:$0xf]
      %v270 = vld [vmem:[%s227 + $0x78] sm:$0xf]
      %v271 = vld [vmem:[%s227 + $0x7c] sm:$0xf]
      %v272 = vunpack.c.l.bf16 %v240
      %v273 = vunpack.c.l.bf16 %v241
      %v274 = vunpack.c.l.bf16 %v242
      %v275 = vunpack.c.l.bf16 %v243
      %v276 = vunpack.c.l.bf16 %v244
      %v277 = vunpack.c.l.bf16 %v245
      %v278 = vunpack.c.l.bf16 %v246
      %v279 = vunpack.c.l.bf16 %v247
      %v280 = vunpack.c.l.bf16 %v248
      %v281 = vunpack.c.l.bf16 %v249
      %v282 = vunpack.c.l.bf16 %v250
      %v283 = vunpack.c.l.bf16 %v251
      %v284 = vunpack.c.l.bf16 %v252
      %v285 = vunpack.c.l.bf16 %v253
      %v286 = vunpack.c.l.bf16 %v254
      %v287 = vunpack.c.l.bf16 %v255
      %v288 = vunpack.c.l.bf16 %v256
      %v289 = vunpack.c.l.bf16 %v257
      %v290 = vunpack.c.l.bf16 %v258
      %v291 = vunpack.c.l.bf16 %v259
      %v292 = vunpack.c.l.bf16 %v260
      %v293 = vunpack.c.l.bf16 %v261
      %v294 = vunpack.c.l.bf16 %v262
      %v295 = vunpack.c.l.bf16 %v263
      %v296 = vunpack.c.l.bf16 %v264
      %v297 = vunpack.c.l.bf16 %v265
      %v298 = vunpack.c.l.bf16 %v266
      %v299 = vunpack.c.l.bf16 %v267
      %v300 = vunpack.c.l.bf16 %v268
      %v301 = vunpack.c.l.bf16 %v269
      %v302 = vunpack.c.l.bf16 %v270
      %v303 = vunpack.c.l.bf16 %v271
      %v304 = vld [vmem:[%s1] sm:$0x1]
      %v306 = vlaneseq
      %v307 = vshrl.u32 %v306, 7
      %v308 = vsub.s32 0, %v307
      %v309 = vrot.slane %v304, %v308
      %v311 = vmul.f32 %v272, %v309
      %v312 = vmul.f32 %v273, %v309
      %v313 = vmul.f32 %v274, %v309
      %v314 = vmul.f32 %v275, %v309
      %v315 = vmul.f32 %v276, %v309
      %v316 = vmul.f32 %v277, %v309
      %v317 = vmul.f32 %v278, %v309
      %v318 = vmul.f32 %v279, %v309
      %v319 = vmul.f32 %v280, %v309
      %v320 = vmul.f32 %v281, %v309
      %v321 = vmul.f32 %v282, %v309
      %v322 = vmul.f32 %v283, %v309
      %v323 = vmul.f32 %v284, %v309
      %v324 = vmul.f32 %v285, %v309
      %v325 = vmul.f32 %v286, %v309
      %v326 = vmul.f32 %v287, %v309
      %v327 = vmul.f32 %v288, %v309
      %v328 = vmul.f32 %v289, %v309
      %v329 = vmul.f32 %v290, %v309
      %v330 = vmul.f32 %v291, %v309
      %v331 = vmul.f32 %v292, %v309
      %v332 = vmul.f32 %v293, %v309
      %v333 = vmul.f32 %v294, %v309
      %v334 = vmul.f32 %v295, %v309
      %v335 = vmul.f32 %v296, %v309
      %v336 = vmul.f32 %v297, %v309
      %v337 = vmul.f32 %v298, %v309
      %v338 = vmul.f32 %v299, %v309
      %v339 = vmul.f32 %v300, %v309
      %v340 = vmul.f32 %v301, %v309
      %v341 = vmul.f32 %v302, %v309
      %v342 = vmul.f32 %v303, %v309
      %v343 = vld [vmem:[%s2] sm:$0x1]
      %v345 = vlaneseq
      %v346 = vshrl.u32 %v345, 7
      %v347 = vsub.s32 0, %v346
      %v348 = vrot.slane %v343, %v347
      %v350 = vadd.f32 %v311, %v348
      %v351 = vadd.f32 %v312, %v348
      %v352 = vadd.f32 %v313, %v348
      %v353 = vadd.f32 %v314, %v348
      %v354 = vadd.f32 %v315, %v348
      %v355 = vadd.f32 %v316, %v348
      %v356 = vadd.f32 %v317, %v348
      %v357 = vadd.f32 %v318, %v348
      %v358 = vadd.f32 %v319, %v348
      %v359 = vadd.f32 %v320, %v348
      %v360 = vadd.f32 %v321, %v348
      %v361 = vadd.f32 %v322, %v348
      %v362 = vadd.f32 %v323, %v348
      %v363 = vadd.f32 %v324, %v348
      %v364 = vadd.f32 %v325, %v348
      %v365 = vadd.f32 %v326, %v348
      %v366 = vadd.f32 %v327, %v348
      %v367 = vadd.f32 %v328, %v348
      %v368 = vadd.f32 %v329, %v348
      %v369 = vadd.f32 %v330, %v348
      %v370 = vadd.f32 %v331, %v348
      %v371 = vadd.f32 %v332, %v348
      %v372 = vadd.f32 %v333, %v348
      %v373 = vadd.f32 %v334, %v348
      %v374 = vadd.f32 %v335, %v348
      %v375 = vadd.f32 %v336, %v348
      %v376 = vadd.f32 %v337, %v348
      %v377 = vadd.f32 %v338, %v348
      %v378 = vadd.f32 %v339, %v348
      %v379 = vadd.f32 %v340, %v348
      %v380 = vadd.f32 %v341, %v348
      %v381 = vadd.f32 %v342, %v348
      %v382 = vmax.f32 %v350, 0.0
      %v383 = vmax.f32 %v351, 0.0
      %v384 = vmax.f32 %v352, 0.0
      %v385 = vmax.f32 %v353, 0.0
      %v386 = vmax.f32 %v354, 0.0
      %v387 = vmax.f32 %v355, 0.0
      %v388 = vmax.f32 %v356, 0.0
      %v389 = vmax.f32 %v357, 0.0
      %v390 = vmax.f32 %v358, 0.0
      %v391 = vmax.f32 %v359, 0.0
      %v392 = vmax.f32 %v360, 0.0
      %v393 = vmax.f32 %v361, 0.0
      %v394 = vmax.f32 %v362, 0.0
      %v395 = vmax.f32 %v363, 0.0
      %v396 = vmax.f32 %v364, 0.0
      %v397 = vmax.f32 %v365, 0.0
      %v398 = vmax.f32 %v366, 0.0
      %v399 = vmax.f32 %v367, 0.0
      %v400 = vmax.f32 %v368, 0.0
      %v401 = vmax.f32 %v369, 0.0
      %v402 = vmax.f32 %v370, 0.0
      %v403 = vmax.f32 %v371, 0.0
      %v404 = vmax.f32 %v372, 0.0
      %v405 = vmax.f32 %v373, 0.0
      %v406 = vmax.f32 %v374, 0.0
      %v407 = vmax.f32 %v375, 0.0
      %v408 = vmax.f32 %v376, 0.0
      %v409 = vmax.f32 %v377, 0.0
      %v410 = vmax.f32 %v378, 0.0
      %v411 = vmax.f32 %v379, 0.0
      %v412 = vmax.f32 %v380, 0.0
      %v413 = vmax.f32 %v381, 0.0
      %v414 = vpack.c.bf16 %v383, %v382
      %v415 = vpack.c.bf16 %v385, %v384
      %v416 = vpack.c.bf16 %v387, %v386
      %v417 = vpack.c.bf16 %v389, %v388
      %v418 = vpack.c.bf16 %v391, %v390
      %v419 = vpack.c.bf16 %v393, %v392
      %v420 = vpack.c.bf16 %v395, %v394
      %v421 = vpack.c.bf16 %v397, %v396
      %v422 = vpack.c.bf16 %v399, %v398
      %v423 = vpack.c.bf16 %v401, %v400
      %v424 = vpack.c.bf16 %v403, %v402
      %v425 = vpack.c.bf16 %v405, %v404
      %v426 = vpack.c.bf16 %v407, %v406
      %v427 = vpack.c.bf16 %v409, %v408
      %v428 = vpack.c.bf16 %v411, %v410
      %v429 = vpack.c.bf16 %v413, %v412
      %v430 = vld [vmem:[%s3] sm:$0xf]
      %v431 = vld [vmem:[%s3 + $0x4] sm:$0xf]
      %v432 = vld [vmem:[%s3 + $0x8] sm:$0xf]
      %v433 = vld [vmem:[%s3 + $0xc] sm:$0xf]
      %v438 = vunpack.c.l.b16 %v430
      %v439 = vunpack.c.l.b16 %v431
      %v440 = vunpack.c.l.b16 %v432
      %v441 = vunpack.c.l.b16 %v433
      %v442 = vpack.c.b16 %v439, %v438
      %v443 = vpack.c.b16 %v441, %v440
      %vm446 = vcmask 261120
      %v448 = vsel %vm446, %v414, 0
      %v451 = vsel %vm446, %v415, 0
      %v454 = vsel %vm446, %v416, 0
      %v457 = vsel %vm446, %v417, 0
      %v460 = vsel %vm446, %v418, 0
      %v463 = vsel %vm446, %v419, 0
      %v466 = vsel %vm446, %v420, 0
      %v469 = vsel %vm446, %v421, 0
      %v472 = vsel %vm446, %v422, 0
      %v475 = vsel %vm446, %v423, 0
      %v478 = vsel %vm446, %v424, 0
      %v481 = vsel %vm446, %v425, 0
      %v484 = vsel %vm446, %v426, 0
      %v487 = vsel %vm446, %v427, 0
      %v490 = vsel %vm446, %v428, 0
      %v493 = vsel %vm446, %v429, 0
      %495 = vmatprep.subr.bf16.mxu0 0
      %496 = vmatpush1.bf16.msra.mxu0 0
      %497 = vmatprep.subr.bf16.mxu0 0
      %498 = vmatpush1.bf16.msra.mxu0 0
      %499 = vmatprep.subr.bf16.mxu0 0
      %500 = vmatpush1.bf16.msra.mxu0 0
      %501 = vmatprep.subr.bf16.mxu0 0
      %502 = vmatpush1.bf16.msra.mxu0 0
      %503 = vmatprep.subr.bf16.mxu0 0
      %504 = vmatpush1.bf16.msra.mxu0 0
      %505 = vmatprep.subr.bf16.mxu0 0
      %506 = vmatpush1.bf16.msra.mxu0 0
      %507 = vmatprep.subr.bf16.mxu0 0
      %508 = vmatpush1.bf16.msra.mxu0 %v443
      %509 = vmatprep.subr.bf16.mxu0 0
      %510 = vmatpush1.bf16.msra.mxu0 %v442
      %511 = vmatprep.subr.bf16.mxu0 0
      %512 = vmatpush2.bf16.msra.mxu0 0
      %513 = vmatprep.subr.bf16.mxu0 0
      %514 = vmatpush2.bf16.msra.mxu0 0
      %515 = vmatprep.subr.bf16.mxu0 0
      %516 = vmatpush2.bf16.msra.mxu0 0
      %517 = vmatprep.subr.bf16.mxu0 0
      %518 = vmatpush2.bf16.msra.mxu0 0
      %519 = vmatprep.subr.bf16.mxu0 0
      %520 = vmatpush2.bf16.msra.mxu0 0
      %521 = vmatprep.subr.bf16.mxu0 0
      %522 = vmatpush2.bf16.msra.mxu0 0
      %523 = vmatprep.subr.bf16.mxu0 0
      %524 = vmatpush2.bf16.msra.mxu0 0
      %525 = vmatprep.subr.bf16.mxu0 0
      %526 = vmatpush2.bf16.msra.mxu0 0
      %527 = vmatprep.mubr.bf16.mxu0 0
      %528 = vmatmul.mubr.bf16.gmra.mxu0 %v448
      %v529 = vpop.f32.mrf.mxu0
      %v530 = vadd.f32 0.0, %v529
      %v531 = vpop.f32.mrf.mxu0
      %v532 = vpop.f32.mrf.mxu0
      %v533 = vadd.f32 0.0, %v532
      %v534 = vpop.f32.mrf.mxu0
      %535 = vmatprep.mubr.bf16.mxu0 0
      %536 = vmatmul.mubr.bf16.gmra.mxu0 %v451
      %v537 = vpop.f32.mrf.mxu0
      %v538 = vadd.f32 0.0, %v537
      %v539 = vpop.f32.mrf.mxu0
      %v540 = vpop.f32.mrf.mxu0
      %v541 = vadd.f32 0.0, %v540
      %v542 = vpop.f32.mrf.mxu0
      %543 = vmatprep.mubr.bf16.mxu0 0
      %544 = vmatmul.mubr.bf16.gmra.mxu0 %v454
      %v545 = vpop.f32.mrf.mxu0
      %v546 = vadd.f32 0.0, %v545
      %v547 = vpop.f32.mrf.mxu0
      %v548 = vpop.f32.mrf.mxu0
      %v549 = vadd.f32 0.0, %v548
      %v550 = vpop.f32.mrf.mxu0
      %551 = vmatprep.mubr.bf16.mxu0 0
      %552 = vmatmul.mubr.bf16.gmra.mxu0 %v457
      %v553 = vpop.f32.mrf.mxu0
      %v554 = vadd.f32 0.0, %v553
      %v555 = vpop.f32.mrf.mxu0
      %v556 = vpop.f32.mrf.mxu0
      %v557 = vadd.f32 0.0, %v556
      %v558 = vpop.f32.mrf.mxu0
      %559 = vmatprep.mubr.bf16.mxu0 0
      %560 = vmatmul.mubr.bf16.gmra.mxu0 %v460
      %v561 = vpop.f32.mrf.mxu0
      %v562 = vadd.f32 0.0, %v561
      %v563 = vpop.f32.mrf.mxu0
      %v564 = vpop.f32.mrf.mxu0
      %v565 = vadd.f32 0.0, %v564
      %v566 = vpop.f32.mrf.mxu0
      %567 = vmatprep.mubr.bf16.mxu0 0
      %568 = vmatmul.mubr.bf16.gmra.mxu0 %v463
      %v569 = vpop.f32.mrf.mxu0
      %v570 = vadd.f32 0.0, %v569
      %v571 = vpop.f32.mrf.mxu0
      %v572 = vpop.f32.mrf.mxu0
      %v573 = vadd.f32 0.0, %v572
      %v574 = vpop.f32.mrf.mxu0
      %575 = vmatprep.mubr.bf16.mxu0 0
      %576 = vmatmul.mubr.bf16.gmra.mxu0 %v466
      %v577 = vpop.f32.mrf.mxu0
      %v578 = vadd.f32 0.0, %v577
      %v579 = vpop.f32.mrf.mxu0
      %v580 = vpop.f32.mrf.mxu0
      %v581 = vadd.f32 0.0, %v580
      %v582 = vpop.f32.mrf.mxu0
      %583 = vmatprep.mubr.bf16.mxu0 0
      %584 = vmatmul.mubr.bf16.gmra.mxu0 %v469
      %v585 = vpop.f32.mrf.mxu0
      %v586 = vadd.f32 0.0, %v585
      %v587 = vpop.f32.mrf.mxu0
      %v588 = vpop.f32.mrf.mxu0
      %v589 = vadd.f32 0.0, %v588
      %v590 = vpop.f32.mrf.mxu0
      %591 = vmatprep.mubr.bf16.mxu0 0
      %592 = vmatmul.mubr.bf16.gmra.mxu0 %v472
      %v593 = vpop.f32.mrf.mxu0
      %v594 = vadd.f32 0.0, %v593
      %v595 = vpop.f32.mrf.mxu0
      %v596 = vpop.f32.mrf.mxu0
      %v597 = vadd.f32 0.0, %v596
      %v598 = vpop.f32.mrf.mxu0
      %599 = vmatprep.mubr.bf16.mxu0 0
      %600 = vmatmul.mubr.bf16.gmra.mxu0 %v475
      %v601 = vpop.f32.mrf.mxu0
      %v602 = vadd.f32 0.0, %v601
      %v603 = vpop.f32.mrf.mxu0
      %v604 = vpop.f32.mrf.mxu0
      %v605 = vadd.f32 0.0, %v604
      %v606 = vpop.f32.mrf.mxu0
      %607 = vmatprep.mubr.bf16.mxu0 0
      %608 = vmatmul.mubr.bf16.gmra.mxu0 %v478
      %v609 = vpop.f32.mrf.mxu0
      %v610 = vadd.f32 0.0, %v609
      %v611 = vpop.f32.mrf.mxu0
      %v612 = vpop.f32.mrf.mxu0
      %v613 = vadd.f32 0.0, %v612
      %v614 = vpop.f32.mrf.mxu0
      %615 = vmatprep.mubr.bf16.mxu0 0
      %616 = vmatmul.mubr.bf16.gmra.mxu0 %v481
      %v617 = vpop.f32.mrf.mxu0
      %v618 = vadd.f32 0.0, %v617
      %v619 = vpop.f32.mrf.mxu0
      %v620 = vpop.f32.mrf.mxu0
      %v621 = vadd.f32 0.0, %v620
      %v622 = vpop.f32.mrf.mxu0
      %623 = vmatprep.mubr.bf16.mxu0 0
      %624 = vmatmul.mubr.bf16.gmra.mxu0 %v484
      %v625 = vpop.f32.mrf.mxu0
      %v626 = vadd.f32 0.0, %v625
      %v627 = vpop.f32.mrf.mxu0
      %v628 = vpop.f32.mrf.mxu0
      %v629 = vadd.f32 0.0, %v628
      %v630 = vpop.f32.mrf.mxu0
      %631 = vmatprep.mubr.bf16.mxu0 0
      %632 = vmatmul.mubr.bf16.gmra.mxu0 %v487
      %v633 = vpop.f32.mrf.mxu0
      %v634 = vadd.f32 0.0, %v633
      %v635 = vpop.f32.mrf.mxu0
      %v636 = vpop.f32.mrf.mxu0
      %v637 = vadd.f32 0.0, %v636
      %v638 = vpop.f32.mrf.mxu0
      %639 = vmatprep.mubr.bf16.mxu0 0
      %640 = vmatmul.mubr.bf16.gmra.mxu0 %v490
      %v641 = vpop.f32.mrf.mxu0
      %v642 = vadd.f32 0.0, %v641
      %v643 = vpop.f32.mrf.mxu0
      %v644 = vpop.f32.mrf.mxu0
      %v645 = vadd.f32 0.0, %v644
      %v646 = vpop.f32.mrf.mxu0
      %647 = vmatprep.mubr.bf16.mxu0 0
      %648 = vmatmul.mubr.bf16.gmra.mxu0 %v493
      %v649 = vpop.f32.mrf.mxu0
      %v650 = vadd.f32 0.0, %v649
      %v651 = vpop.f32.mrf.mxu0
      %v652 = vpop.f32.mrf.mxu0
      %v653 = vadd.f32 0.0, %v652
      %v654 = vpop.f32.mrf.mxu0
      %655 = vdwg.mxu0
      %v656 = vpack.c.bf16 %v533, %v530
      %v657 = vpack.c.bf16 %v541, %v538
      %v658 = vpack.c.bf16 %v549, %v546
      %v659 = vpack.c.bf16 %v557, %v554
      %v660 = vpack.c.bf16 %v565, %v562
      %v661 = vpack.c.bf16 %v573, %v570
      %v662 = vpack.c.bf16 %v581, %v578
      %v663 = vpack.c.bf16 %v589, %v586
      %v664 = vpack.c.bf16 %v597, %v594
      %v665 = vpack.c.bf16 %v605, %v602
      %v666 = vpack.c.bf16 %v613, %v610
      %v667 = vpack.c.bf16 %v621, %v618
      %v668 = vpack.c.bf16 %v629, %v626
      %v669 = vpack.c.bf16 %v637, %v634
      %v670 = vpack.c.bf16 %v645, %v642
      %v671 = vpack.c.bf16 %v653, %v650
      %v688 = vunpack.c.l.b16 %v656
      %v689 = vunpack.c.h.b16 %v656
      %v690 = vunpack.c.l.b16 %v657
      %v691 = vunpack.c.h.b16 %v657
      %v692 = vunpack.c.l.b16 %v658
      %v693 = vunpack.c.h.b16 %v658
      %v694 = vunpack.c.l.b16 %v659
      %v695 = vunpack.c.h.b16 %v659
      %v696 = vunpack.c.l.b16 %v660
      %v697 = vunpack.c.h.b16 %v660
      %v698 = vunpack.c.l.b16 %v661
      %v699 = vunpack.c.h.b16 %v661
      %v700 = vunpack.c.l.b16 %v662
      %v701 = vunpack.c.h.b16 %v662
      %v702 = vunpack.c.l.b16 %v663
      %v703 = vunpack.c.h.b16 %v663
      %v704 = vunpack.c.l.b16 %v664
      %v705 = vunpack.c.h.b16 %v664
      %v706 = vunpack.c.l.b16 %v665
      %v707 = vunpack.c.h.b16 %v665
      %v708 = vunpack.c.l.b16 %v666
      %v709 = vunpack.c.h.b16 %v666
      %v710 = vunpack.c.l.b16 %v667
      %v711 = vunpack.c.h.b16 %v667
      %v712 = vunpack.c.l.b16 %v668
      %v713 = vunpack.c.h.b16 %v668
      %v714 = vunpack.c.l.b16 %v669
      %v715 = vunpack.c.h.b16 %v669
      %v716 = vunpack.c.l.b16 %v670
      %v717 = vunpack.c.h.b16 %v670
      %v718 = vunpack.c.l.b16 %v671
      %v719 = vunpack.c.h.b16 %v671
      %v720 = vpack.c.b16 %v688, %v688
      %v721 = vpack.c.b16 %v689, %v689
      %v722 = vpack.c.b16 %v690, %v690
      %v723 = vpack.c.b16 %v691, %v691
      %v724 = vpack.c.b16 %v692, %v692
      %v725 = vpack.c.b16 %v693, %v693
      %v726 = vpack.c.b16 %v694, %v694
      %v727 = vpack.c.b16 %v695, %v695
      %v728 = vpack.c.b16 %v696, %v696
      %v729 = vpack.c.b16 %v697, %v697
      %v730 = vpack.c.b16 %v698, %v698
      %v731 = vpack.c.b16 %v699, %v699
      %v732 = vpack.c.b16 %v700, %v700
      %v733 = vpack.c.b16 %v701, %v701
      %v734 = vpack.c.b16 %v702, %v702
      %v735 = vpack.c.b16 %v703, %v703
      %v736 = vpack.c.b16 %v704, %v704
      %v737 = vpack.c.b16 %v705, %v705
      %v738 = vpack.c.b16 %v706, %v706
      %v739 = vpack.c.b16 %v707, %v707
      %v740 = vpack.c.b16 %v708, %v708
      %v741 = vpack.c.b16 %v709, %v709
      %v742 = vpack.c.b16 %v710, %v710
      %v743 = vpack.c.b16 %v711, %v711
      %v744 = vpack.c.b16 %v712, %v712
      %v745 = vpack.c.b16 %v713, %v713
      %v746 = vpack.c.b16 %v714, %v714
      %v747 = vpack.c.b16 %v715, %v715
      %v748 = vpack.c.b16 %v716, %v716
      %v749 = vpack.c.b16 %v717, %v717
      %v750 = vpack.c.b16 %v718, %v718
      %v751 = vpack.c.b16 %v719, %v719
      %784 = vst [vmem:[%s233] sm:$0xf] %v720
      %785 = vst [vmem:[%s233 + $0x4] sm:$0xf] %v721
      %786 = vst [vmem:[%s233 + $0x8] sm:$0xf] %v722
      %787 = vst [vmem:[%s233 + $0xc] sm:$0xf] %v723
      %788 = vst [vmem:[%s233 + $0x10] sm:$0xf] %v724
      %789 = vst [vmem:[%s233 + $0x14] sm:$0xf] %v725
      %790 = vst [vmem:[%s233 + $0x18] sm:$0xf] %v726
      %791 = vst [vmem:[%s233 + $0x1c] sm:$0xf] %v727
      %792 = vst [vmem:[%s233 + $0x20] sm:$0xf] %v728
      %793 = vst [vmem:[%s233 + $0x24] sm:$0xf] %v729
      %794 = vst [vmem:[%s233 + $0x28] sm:$0xf] %v730
      %795 = vst [vmem:[%s233 + $0x2c] sm:$0xf] %v731
      %796 = vst [vmem:[%s233 + $0x30] sm:$0xf] %v732
      %797 = vst [vmem:[%s233 + $0x34] sm:$0xf] %v733
      %798 = vst [vmem:[%s233 + $0x38] sm:$0xf] %v734
      %799 = vst [vmem:[%s233 + $0x3c] sm:$0xf] %v735
      %800 = vst [vmem:[%s233 + $0x40] sm:$0xf] %v736
      %801 = vst [vmem:[%s233 + $0x44] sm:$0xf] %v737
      %802 = vst [vmem:[%s233 + $0x48] sm:$0xf] %v738
      %803 = vst [vmem:[%s233 + $0x4c] sm:$0xf] %v739
      %804 = vst [vmem:[%s233 + $0x50] sm:$0xf] %v740
      %805 = vst [vmem:[%s233 + $0x54] sm:$0xf] %v741
      %806 = vst [vmem:[%s233 + $0x58] sm:$0xf] %v742
      %807 = vst [vmem:[%s233 + $0x5c] sm:$0xf] %v743
      %808 = vst [vmem:[%s233 + $0x60] sm:$0xf] %v744
      %809 = vst [vmem:[%s233 + $0x64] sm:$0xf] %v745
      %810 = vst [vmem:[%s233 + $0x68] sm:$0xf] %v746
      %811 = vst [vmem:[%s233 + $0x6c] sm:$0xf] %v747
      %812 = vst [vmem:[%s233 + $0x70] sm:$0xf] %v748
      %813 = vst [vmem:[%s233 + $0x74] sm:$0xf] %v749
      %814 = vst [vmem:[%s233 + $0x78] sm:$0xf] %v750
      %815 = vst [vmem:[%s233 + $0x7c] sm:$0xf] %v751
      %v816 = vadd.f32 %v530, %v533
      %v817 = vadd.f32 %v816, %v538
      %v818 = vadd.f32 %v817, %v541
      %v819 = vadd.f32 %v818, %v546
      %v820 = vadd.f32 %v819, %v549
      %v821 = vadd.f32 %v820, %v554
      %v822 = vadd.f32 %v821, %v557
      %v823 = vadd.f32 %v822, %v562
      %v824 = vadd.f32 %v823, %v565
      %v825 = vadd.f32 %v824, %v570
      %v826 = vadd.f32 %v825, %v573
      %v827 = vadd.f32 %v826, %v578
      %v828 = vadd.f32 %v827, %v581
      %v829 = vadd.f32 %v828, %v586
      %v830 = vadd.f32 %v829, %v589
      %v831 = vadd.f32 %v830, %v594
      %v832 = vadd.f32 %v831, %v597
      %v833 = vadd.f32 %v832, %v602
      %v834 = vadd.f32 %v833, %v605
      %v835 = vadd.f32 %v834, %v610
      %v836 = vadd.f32 %v835, %v613
      %v837 = vadd.f32 %v836, %v618
      %v838 = vadd.f32 %v837, %v621
      %v839 = vadd.f32 %v838, %v626
      %v840 = vadd.f32 %v839, %v629
      %v841 = vadd.f32 %v840, %v634
      %v842 = vadd.f32 %v841, %v637
      %v843 = vadd.f32 %v842, %v642
      %v844 = vadd.f32 %v843, %v645
      %v845 = vadd.f32 %v844, %v650
      %v846 = vadd.f32 %v845, %v653
      %v847 = vrot.slane %v846, 4
      %v848 = vadd.f32 %v846, %v847
      %v849 = vrot.slane %v848, 2
      %v850 = vadd.f32 %v848, %v849
      %v851 = vrot.slane %v850, 1
      %v852 = vadd.f32 %v850, %v851
      %v853 = vrcp.pop 256.0
      %v854 = vmul.f32 %v852, %v853
      %v855 = vsub.f32 %v530, %v854
      %v856 = vsub.f32 %v533, %v854
      %v857 = vsub.f32 %v538, %v854
      %v858 = vsub.f32 %v541, %v854
      %v859 = vsub.f32 %v546, %v854
      %v860 = vsub.f32 %v549, %v854
      %v861 = vsub.f32 %v554, %v854
      %v862 = vsub.f32 %v557, %v854
      %v863 = vsub.f32 %v562, %v854
      %v864 = vsub.f32 %v565, %v854
      %v865 = vsub.f32 %v570, %v854
      %v866 = vsub.f32 %v573, %v854
      %v867 = vsub.f32 %v578, %v854
      %v868 = vsub.f32 %v581, %v854
      %v869 = vsub.f32 %v586, %v854
      %v870 = vsub.f32 %v589, %v854
      %v871 = vsub.f32 %v594, %v854
      %v872 = vsub.f32 %v597, %v854
      %v873 = vsub.f32 %v602, %v854
      %v874 = vsub.f32 %v605, %v854
      %v875 = vsub.f32 %v610, %v854
      %v876 = vsub.f32 %v613, %v854
      %v877 = vsub.f32 %v618, %v854
      %v878 = vsub.f32 %v621, %v854
      %v879 = vsub.f32 %v626, %v854
      %v880 = vsub.f32 %v629, %v854
      %v881 = vsub.f32 %v634, %v854
      %v882 = vsub.f32 %v637, %v854
      %v883 = vsub.f32 %v642, %v854
      %v884 = vsub.f32 %v645, %v854
      %v885 = vsub.f32 %v650, %v854
      %v886 = vsub.f32 %v653, %v854
      %v887 = vmul.f32 %v855, %v855
      %v888 = vmul.f32 %v856, %v856
      %v889 = vmul.f32 %v857, %v857
      %v890 = vmul.f32 %v858, %v858
      %v891 = vmul.f32 %v859, %v859
      %v892 = vmul.f32 %v860, %v860
      %v893 = vmul.f32 %v861, %v861
      %v894 = vmul.f32 %v862, %v862
      %v895 = vmul.f32 %v863, %v863
      %v896 = vmul.f32 %v864, %v864
      %v897 = vmul.f32 %v865, %v865
      %v898 = vmul.f32 %v866, %v866
      %v899 = vmul.f32 %v867, %v867
      %v900 = vmul.f32 %v868, %v868
      %v901 = vmul.f32 %v869, %v869
      %v902 = vmul.f32 %v870, %v870
      %v903 = vmul.f32 %v871, %v871
      %v904 = vmul.f32 %v872, %v872
      %v905 = vmul.f32 %v873, %v873
      %v906 = vmul.f32 %v874, %v874
      %v907 = vmul.f32 %v875, %v875
      %v908 = vmul.f32 %v876, %v876
      %v909 = vmul.f32 %v877, %v877
      %v910 = vmul.f32 %v878, %v878
      %v911 = vmul.f32 %v879, %v879
      %v912 = vmul.f32 %v880, %v880
      %v913 = vmul.f32 %v881, %v881
      %v914 = vmul.f32 %v882, %v882
      %v915 = vmul.f32 %v883, %v883
      %v916 = vmul.f32 %v884, %v884
      %v917 = vmul.f32 %v885, %v885
      %v918 = vmul.f32 %v886, %v886
      %v919 = vadd.f32 %v887, %v888
      %v920 = vadd.f32 %v919, %v889
      %v921 = vadd.f32 %v920, %v890
      %v922 = vadd.f32 %v921, %v891
      %v923 = vadd.f32 %v922, %v892
      %v924 = vadd.f32 %v923, %v893
      %v925 = vadd.f32 %v924, %v894
      %v926 = vadd.f32 %v925, %v895
      %v927 = vadd.f32 %v926, %v896
      %v928 = vadd.f32 %v927, %v897
      %v929 = vadd.f32 %v928, %v898
      %v930 = vadd.f32 %v929, %v899
      %v931 = vadd.f32 %v930, %v900
      %v932 = vadd.f32 %v931, %v901
      %v933 = vadd.f32 %v932, %v902
      %v934 = vadd.f32 %v933, %v903
      %v935 = vadd.f32 %v934, %v904
      %v936 = vadd.f32 %v935, %v905
      %v937 = vadd.f32 %v936, %v906
      %v938 = vadd.f32 %v937, %v907
      %v939 = vadd.f32 %v938, %v908
      %v940 = vadd.f32 %v939, %v909
      %v941 = vadd.f32 %v940, %v910
      %v942 = vadd.f32 %v941, %v911
      %v943 = vadd.f32 %v942, %v912
      %v944 = vadd.f32 %v943, %v913
      %v945 = vadd.f32 %v944, %v914
      %v946 = vadd.f32 %v945, %v915
      %v947 = vadd.f32 %v946, %v916
      %v948 = vadd.f32 %v947, %v917
      %v949 = vadd.f32 %v948, %v918
      %v950 = vrot.slane %v949, 4
      %v951 = vadd.f32 %v949, %v950
      %v952 = vrot.slane %v951, 2
      %v953 = vadd.f32 %v951, %v952
      %v954 = vrot.slane %v953, 1
      %v955 = vadd.f32 %v953, %v954
      %vm956 = vcmask 1040384
      %v957 = vsel %vm956, %v854, %v955
      %958 = vst [vmem:[%s238] sm:$0x3] %v957
      %s959 = smul.u32 32, %s17
      %p960 = scmp.lt.s32.totalorder %s959, 63
      %s961 = scalar_select %p960, %s959, 63
      %s962 = smul.addr %s961, 4
      %s963 = scalar_lea.vmem %s4, %s962
      %p964 = scmp.lt.s32.totalorder %s17, 1
      %s965 = scalar_select %p964, %s17, 1
      %s966 = smul.addr %s965, 2
      %s967 = scalar_lea.vmem %s5, %s966
      // Predicated region
      $region37: #{bottleneck_block_nhwc.6} parent=35 // pred_check
        %p968 = pneg %p124
      $region38: #{bottleneck_block_nhwc.6} parent=35 // pred_check_branch
        %970 = sbr.rel (%p968) target = $region40
      $region39: #{bottleneck_block_nhwc.6} parent=35 // pred_region
        %s971 = smul.u32 32, %s17
      $region40: #{bottleneck_block_nhwc.6} parent=35 // pred_fallthru
        _
      // Predicated region
      $region41: #{bottleneck_block_nhwc.6} parent=35 // pred_check
        %p972 = pneg %p150
      $region42: #{bottleneck_block_nhwc.6} parent=35 // pred_check_branch
        %974 = sbr.rel (%p972) target = $region44
      $region43: #{bottleneck_block_nhwc.6} parent=35 // pred_region
        _
      $region44: #{bottleneck_block_nhwc.6} parent=35 // pred_fallthru
        _
    $region36: #{bottleneck_block_nhwc.6} parent=5 // pred_fallthru
      _
    %p975 = scmp.le.s32.totalorder 2, %s12
    // Predicated region
    $region45: #{bottleneck_block_nhwc.6} parent=5 // pred_check
      %p976 = pneg %p975
    $region46: #{bottleneck_block_nhwc.6} parent=5 // pred_check_branch
      %978 = sbr.rel (%p976) target = $region48
    $region47: #{bottleneck_block_nhwc.6} parent=5 // pred_region
      %s979 = ssub.s32 %s12, 2
      // Predicated region
      $region49: #{bottleneck_block_nhwc.6} parent=47 // pred_check
        %p980 = pneg %p130
      $region50: #{bottleneck_block_nhwc.6} parent=47 // pred_check_branch
        %982 = sbr.rel (%p980) target = $region52
      $region51: #{bottleneck_block_nhwc.6} parent=47 // pred_region
        %s983 = smul.u32 32, %s18
        %p984 = scmp.lt.s32.totalorder %s983, 63
        %s985 = scalar_select %p984, %s983, 63
        %s986 = smul.addr %s985, 4
        %s987 = scalar_lea.vmem %s4, %s986
      $region52: #{bottleneck_block_nhwc.6} parent=47 // pred_fallthru
        _
      // Predicated region
      $region53: #{bottleneck_block_nhwc.6} parent=47 // pred_check
        %p988 = pneg %p156
      $region54: #{bottleneck_block_nhwc.6} parent=47 // pred_check_branch
        %990 = sbr.rel (%p988) target = $region56
      $region55: #{bottleneck_block_nhwc.6} parent=47 // pred_region
        %p991 = scmp.lt.s32.totalorder %s18, 1
        %s992 = scalar_select %p991, %s18, 1
        %s993 = smul.addr %s992, 2
        %s994 = scalar_lea.vmem %s5, %s993
      $region56: #{bottleneck_block_nhwc.6} parent=47 // pred_fallthru
        _
    $region48: #{bottleneck_block_nhwc.6} parent=5 // pred_fallthru
      _
  $region6: #{bottleneck_block_nhwc.6} parent=0 // loop_footer
    %s16 = sadd.s32 1, %s12
  $region7: #{bottleneck_block_nhwc.6} parent=0 // loop_footer_branch
    %11 = sbr.rel target = $region3
  $region8: #{bottleneck_block_nhwc.6} parent=0 // loop_exit
    _

// kernel: bottleneck_block_nhwc.7
$region0: #{bottleneck_block_nhwc.7}
  #allocation0 [shape = 'u32[]', space=smem, size = 0x4, offset = 0x4, fixed_abs, tag = 'smem constant byte address 0x4 - core index']
  #allocation1 [shape = 'u32[144,128]{1,0:T(1,128)}', space=vmem, size = 0x12000, scoped, tag = 'internal scratch']
  %s0 = inlined_call_operand.vmem [shape: bf16[512,128], index: 0, kind: input, shape index: {}]
  %s1 = inlined_call_operand.vmem [shape: f32[512,128], index: 1, kind: input, shape index: {}]
  %s2 = inlined_call_operand.vmem [shape: f32[1,128], index: 2, kind: input, shape index: {}]
  %s3 = inlined_call_operand.vmem [shape: f32[1,128], index: 3, kind: input, shape index: {}]
  %s4 = inlined_call_operand.hbm [shape: f32[512,128], index: 4, kind: output, shape index: {}]
  %s5 = sld [smem:[#allocation0]]
  $region49: #{bottleneck_block_nhwc.7} parent=0
    _
  %s7 = ssub.s32 1, %s5
  %s8 = scalar_select 0, %s7, %s5
  $region1: #{bottleneck_block_nhwc.7} parent=0
    #allocation2 [shape = 'u8[262144]{0}', space=vmem, size = 0x40000, scoped, tag = 'output window, operand 0']
    #allocation3 [shape = 's32[2]{0}', space=sflag, size = 0x8, scoped, tag = 'scoped memory for bottleneck_block_nhwc.7']
    %9 = vsyncpa [#allocation3], 0
    %s10 = scalar_lea.sflag [#allocation3], 1
    %11 = vsyncpa %s10, 0
    loop: start=0, step=1, limit=4
    $region2: #{bottleneck_block_nhwc.7} parent=1 // loop_pre_header
      _
    $region3: #{bottleneck_block_nhwc.7} parent=1 // loop_header
      %s13 = sphi 0, %s17
      %p14 = scmp.ge.s32.totalorder %s13, 4
      %s23 = sphi 0, %s25
      %s26 = sphi 0, %s23
      %s27 = sphi 0, %s26
      %s43 = sphi 0, %s27
      %s49 = sphi 0, %s51
      %s52 = sphi 0, %s49
      %s53 = sphi 0, %s52
      %s69 = sphi 0, %s53
      %s73 = sphi 0, %s73
      %s75 = sphi 0, %s73
      %s76 = sphi 0, %s75
      %s90 = sphi 0, %s76
      %s94 = sphi 0, %s94
      %s96 = sphi 0, %s94
      %s97 = sphi 0, %s96
      %s111 = sphi 0, %s97
      %s117 = sphi 0, %s119
      %s120 = sphi 0, %s117
      %s121 = sphi 0, %s120
      %s137 = sphi 0, %s121
    $region4: #{bottleneck_block_nhwc.7} parent=1 // loop_header_branch
      %16 = sbr.rel (%p14) target = $region8
    $region5: #{bottleneck_block_nhwc.7} parent=1 // loop_body
      %s18 = ssub.s32 %s13, 1
      %s19 = ssub.s32 %s13, 2
      %s20 = sadd.s32 %s13, 1
      %s21 = ssub.s32 %s13, %s20
      %p22 = scmp.eq.s32.totalorder %s21, 0
      %s24 = sadd.s32 %s23, 1
      %s25 = scalar_select %p22, %s23, %s24
      %p28 = pneg %p22
      %p29 = scmp.eq.s32.totalorder %s13, 1
      %p30 = por %p28, %p29
      %p31 = scmp.ne.s32.totalorder %s23, %s26
      %p32 = scmp.eq.s32.totalorder %s13, 0
      %p33 = por %p31, %p32
      %p34 = scmp.ne.s32.totalorder %s23, %s26
      %p35 = scmp.eq.s32.totalorder %s18, 1
      %p36 = por %p34, %p35
      %p37 = scmp.ne.s32.totalorder %s26, %s27
      %p38 = scmp.eq.s32.totalorder %s18, 0
      %p39 = por %p37, %p38
      %p40 = scmp.ne.s32.totalorder %s26, %s27
      %p41 = scmp.eq.s32.totalorder %s19, 1
      %p42 = por %p40, %p41
      %p44 = scmp.ne.s32.totalorder %s27, %s43
      %p45 = scmp.eq.s32.totalorder %s19, 0
      %p46 = por %p44, %p45
      %s47 = ssub.s32 %s13, %s20
      %p48 = scmp.eq.s32.totalorder %s47, 0
      %s50 = sadd.s32 %s49, 1
      %s51 = scalar_select %p48, %s49, %s50
      %p54 = pneg %p48
      %p55 = scmp.eq.s32.totalorder %s13, 1
      %p56 = por %p54, %p55
      %p57 = scmp.ne.s32.totalorder %s49, %s52
      %p58 = scmp.eq.s32.totalorder %s13, 0
      %p59 = por %p57, %p58
      %p60 = scmp.ne.s32.totalorder %s49, %s52
      %p61 = scmp.eq.s32.totalorder %s18, 1
      %p62 = por %p60, %p61
      %p63 = scmp.ne.s32.totalorder %s52, %s53
      %p64 = scmp.eq.s32.totalorder %s18, 0
      %p65 = por %p63, %p64
      %p66 = scmp.ne.s32.totalorder %s52, %s53
      %p67 = scmp.eq.s32.totalorder %s19, 1
      %p68 = por %p66, %p67
      %p70 = scmp.ne.s32.totalorder %s53, %s69
      %p71 = scmp.eq.s32.totalorder %s19, 0
      %p72 = por %p70, %p71
      %s74 = sadd.s32 %s73, 1
      %p77 = scmp.eq.s32.totalorder %s13, 1
      %p78 = scmp.ne.s32.totalorder %s73, %s75
      %p79 = scmp.eq.s32.totalorder %s13, 0
      %p80 = por %p78, %p79
      %p81 = scmp.ne.s32.totalorder %s73, %s75
      %p82 = scmp.eq.s32.totalorder %s18, 1
      %p83 = por %p81, %p82
      %p84 = scmp.ne.s32.totalorder %s75, %s76
      %p85 = scmp.eq.s32.totalorder %s18, 0
      %p86 = por %p84, %p85
      %p87 = scmp.ne.s32.totalorder %s75, %s76
      %p88 = scmp.eq.s32.totalorder %s19, 1
      %p89 = por %p87, %p88
      %p91 = scmp.ne.s32.totalorder %s76, %s90
      %p92 = scmp.eq.s32.totalorder %s19, 0
      %p93 = por %p91, %p92
      %s95 = sadd.s32 %s94, 1
      %p98 = scmp.eq.s32.totalorder %s13, 1
      %p99 = scmp.ne.s32.totalorder %s94, %s96
      %p100 = scmp.eq.s32.totalorder %s13, 0
      %p101 = por %p99, %p100
      %p102 = scmp.ne.s32.totalorder %s94, %s96
      %p103 = scmp.eq.s32.totalorder %s18, 1
      %p104 = por %p102, %p103
      %p105 = scmp.ne.s32.totalorder %s96, %s97
      %p106 = scmp.eq.s32.totalorder %s18, 0
      %p107 = por %p105, %p106
      %p108 = scmp.ne.s32.totalorder %s96, %s97
      %p109 = scmp.eq.s32.totalorder %s19, 1
      %p110 = por %p108, %p109
      %p112 = scmp.ne.s32.totalorder %s97, %s111
      %p113 = scmp.eq.s32.totalorder %s19, 0
      %p114 = por %p112, %p113
      %s115 = ssub.s32 %s13, %s20
      %p116 = scmp.eq.s32.totalorder %s115, 0
      %s118 = sadd.s32 %s117, 1
      %s119 = scalar_select %p116, %s117, %s118
      %p122 = pneg %p116
      %p123 = scmp.eq.s32.totalorder %s13, 1
      %p124 = por %p122, %p123
      %p125 = scmp.ne.s32.totalorder %s117, %s120
      %p126 = scmp.eq.s32.totalorder %s13, 0
      %p127 = por %p125, %p126
      %p128 = scmp.ne.s32.totalorder %s117, %s120
      %p129 = scmp.eq.s32.totalorder %s18, 1
      %p130 = por %p128, %p129
      %p131 = scmp.ne.s32.totalorder %s120, %s121
      %p132 = scmp.eq.s32.totalorder %s18, 0
      %p133 = por %p131, %p132
      %p134 = scmp.ne.s32.totalorder %s120, %s121
      %p135 = scmp.eq.s32.totalorder %s19, 1
      %p136 = por %p134, %p135
      %p138 = scmp.ne.s32.totalorder %s121, %s137
      %p139 = scmp.eq.s32.totalorder %s19, 0
      %p140 = por %p138, %p139
      %p141 = scmp.le.s32.totalorder 1, %s13
      %p142 = scmp.lt.s32.totalorder %s13, 3
      %p143 = pnand %p141, %p142
      %p144 = pneg %p143
      // Predicated region
      $region9: #{bottleneck_block_nhwc.7} parent=5 // pred_check
        _
      $region10: #{bottleneck_block_nhwc.7} parent=5 // pred_check_branch
        %146 = sbr.rel (%p143) target = $region12
      $region11: #{bottleneck_block_nhwc.7} parent=5 // pred_region
        %s147 = ssub.s32 %s13, 1
        // Predicated region
        $region13: #{bottleneck_block_nhwc.7} parent=11 // pred_check
          %p148 = pneg %p86
        $region14: #{bottleneck_block_nhwc.7} parent=11 // pred_check_branch
          %150 = sbr.rel (%p148) target = $region16
        $region15: #{bottleneck_block_nhwc.7} parent=11 // pred_region
          _
        $region16: #{bottleneck_block_nhwc.7} parent=11 // pred_fallthru
          _
        // Predicated region
        $region17: #{bottleneck_block_nhwc.7} parent=11 // pred_check
          %p151 = pneg %p107
        $region18: #{bottleneck_block_nhwc.7} parent=11 // pred_check_branch
          %153 = sbr.rel (%p151) target = $region20
        $region19: #{bottleneck_block_nhwc.7} parent=11 // pred_region
          _
        $region20: #{bottleneck_block_nhwc.7} parent=11 // pred_fallthru
          _
      $region12: #{bottleneck_block_nhwc.7} parent=5 // pred_fallthru
        _
      %p154 = scmp.lt.s32.totalorder %s13, 2
      // Predicated region
      $region21: #{bottleneck_block_nhwc.7} parent=5 // pred_check
        %p155 = pneg %p154
      $region22: #{bottleneck_block_nhwc.7} parent=5 // pred_check_branch
        %157 = sbr.rel (%p155) target = $region24
      $region23: #{bottleneck_block_nhwc.7} parent=5 // pred_region
        // Predicated region
        $region25: #{bottleneck_block_nhwc.7} parent=23 // pred_check
          %p158 = pneg %p33
        $region26: #{bottleneck_block_nhwc.7} parent=23 // pred_check_branch
          %160 = sbr.rel (%p158) target = $region28
        $region27: #{bottleneck_block_nhwc.7} parent=23 // pred_region
          %s161 = smul.u32 32, %s13
          %p162 = scmp.lt.s32.totalorder %s161, 63
          %s163 = scalar_select %p162, %s161, 63
          %s164 = smul.addr %s163, 4
          %s165 = scalar_lea.vmem %s0, %s164
          %s166 = smul.u32 32, %s13
        $region28: #{bottleneck_block_nhwc.7} parent=23 // pred_fallthru
          _
        // Predicated region
        $region29: #{bottleneck_block_nhwc.7} parent=23 // pred_check
          %p167 = pneg %p59
        $region30: #{bottleneck_block_nhwc.7} parent=23 // pred_check_branch
          %169 = sbr.rel (%p167) target = $region32
        $region31: #{bottleneck_block_nhwc.7} parent=23 // pred_region
          %s170 = smul.u32 32, %s13
          %p171 = scmp.lt.s32.totalorder %s170, 63
          %s172 = scalar_select %p171, %s170, 63
          %s173 = smul.addr %s172, 8
          %s174 = scalar_lea.vmem %s1, %s173
          %s175 = smul.u32 32, %s13
        $region32: #{bottleneck_block_nhwc.7} parent=23 // pred_fallthru
          _
      $region24: #{bottleneck_block_nhwc.7} parent=5 // pred_fallthru
        _
      %p176 = scmp.le.s32.totalorder 1, %s13
      %p177 = scmp.lt.s32.totalorder %s13, 3
      %p178 = pnand %p176, %p177
      %p179 = pneg %p178
      // Predicated region
      $region33: #{bottleneck_block_nhwc.7} parent=5 // pred_check
        _
      $region34: #{bottleneck_block_nhwc.7} parent=5 // pred_check_branch
        %181 = sbr.rel (%p178) target = $region36
      $region35: #{bottleneck_block_nhwc.7} parent=5 // pred_region
        %s182 = ssub.s32 %s13, 1
        %s183 = smul.u32 32, %s18
        %p184 = scmp.lt.s32.totalorder %s183, 63
        %s185 = scalar_select %p184, %s183, 63
        %s186 = smul.addr %s185, 4
        %s187 = scalar_lea.vmem %s0, %s186
        %p188 = pneg %p39
        %p189 = pneg %p36
        %s190 = smul.u32 32, %s18
        %p191 = scmp.lt.s32.totalorder %s190, 63
        %s192 = scalar_select %p191, %s190, 63
        %s193 = smul.addr %s192, 8
        %s194 = scalar_lea.vmem %s1, %s193
        %p195 = pneg %p65
        %p196 = pneg %p62
        %p197 = pneg %p86
        %p198 = pneg %p83
        %p199 = pneg %p107
        %p200 = pneg %p104
        %p201 = pneg %p133
        %p202 = pneg %p130
        %s203 = sand.u32 %s120, 1
        %s204 = scalar_lea.sflag [#allocation3], %s203
        %s205 = sand.u32 %s120, 1
        %s206 = smul.addr %s205, 256
        %s207 = scalar_lea.vmem [#allocation2], %s206
        %s208 = smul.u32 32, %s18
        %p209 = scmp.lt.s32.totalorder %s208, 63
        %s210 = scalar_select %p209, %s208, 63
        %s211 = smul.addr %s210, 4
        %s212 = scalar_lea.vmem %s0, %s211
        %s213 = smul.u32 32, %s18
        %s214 = smul.u32 32, %s18
        %p215 = scmp.lt.s32.totalorder %s214, 63
        %s216 = scalar_select %p215, %s214, 63
        %s217 = smul.addr %s216, 8
        %s218 = scalar_lea.vmem %s1, %s217
        %s219 = smul.u32 32, %s18
        %s220 = smul.u32 32, %s18
        %v221 = vld [vmem:[%s212] sm:$0xf]
        %v222 = vld [vmem:[%s212 + $0x4] sm:$0xf]
        %v223 = vld [vmem:[%s212 + $0x8] sm:$0xf]
        %v224 = vld [vmem:[%s212 + $0xc] sm:$0xf]
        %v225 = vld [vmem:[%s212 + $0x10] sm:$0xf]
        %v226 = vld [vmem:[%s212 + $0x14] sm:$0xf]
        %v227 = vld [vmem:[%s212 + $0x18] sm:$0xf]
        %v228 = vld [vmem:[%s212 + $0x1c] sm:$0xf]
        %v229 = vld [vmem:[%s212 + $0x20] sm:$0xf]
        %v230 = vld [vmem:[%s212 + $0x24] sm:$0xf]
        %v231 = vld [vmem:[%s212 + $0x28] sm:$0xf]
        %v232 = vld [vmem:[%s212 + $0x2c] sm:$0xf]
        %v233 = vld [vmem:[%s212 + $0x30] sm:$0xf]
        %v234 = vld [vmem:[%s212 + $0x34] sm:$0xf]
        %v235 = vld [vmem:[%s212 + $0x38] sm:$0xf]
        %v236 = vld [vmem:[%s212 + $0x3c] sm:$0xf]
        %v237 = vld [vmem:[%s212 + $0x40] sm:$0xf]
        %v238 = vld [vmem:[%s212 + $0x44] sm:$0xf]
        %v239 = vld [vmem:[%s212 + $0x48] sm:$0xf]
        %v240 = vld [vmem:[%s212 + $0x4c] sm:$0xf]
        %v241 = vld [vmem:[%s212 + $0x50] sm:$0xf]
        %v242 = vld [vmem:[%s212 + $0x54] sm:$0xf]
        %v243 = vld [vmem:[%s212 + $0x58] sm:$0xf]
        %v244 = vld [vmem:[%s212 + $0x5c] sm:$0xf]
        %v245 = vld [vmem:[%s212 + $0x60] sm:$0xf]
        %v246 = vld [vmem:[%s212 + $0x64] sm:$0xf]
        %v247 = vld [vmem:[%s212 + $0x68] sm:$0xf]
        %v248 = vld [vmem:[%s212 + $0x6c] sm:$0xf]
        %v249 = vld [vmem:[%s212 + $0x70] sm:$0xf]
        %v250 = vld [vmem:[%s212 + $0x74] sm:$0xf]
        %v251 = vld [vmem:[%s212 + $0x78] sm:$0xf]
        %v252 = vld [vmem:[%s212 + $0x7c] sm:$0xf]
        %v253 = vunpack.c.l.bf16 %v221
        %v254 = vunpack.c.l.bf16 %v222
        %v255 = vunpack.c.l.bf16 %v223
        %v256 = vunpack.c.l.bf16 %v224
        %v257 = vunpack.c.l.bf16 %v225
        %v258 = vunpack.c.l.bf16 %v226
        %v259 = vunpack.c.l.bf16 %v227
        %v260 = vunpack.c.l.bf16 %v228
        %v261 = vunpack.c.l.bf16 %v229
        %v262 = vunpack.c.l.bf16 %v230
        %v263 = vunpack.c.l.bf16 %v231
        %v264 = vunpack.c.l.bf16 %v232
        %v265 = vunpack.c.l.bf16 %v233
        %v266 = vunpack.c.l.bf16 %v234
        %v267 = vunpack.c.l.bf16 %v235
        %v268 = vunpack.c.l.bf16 %v236
        %v269 = vunpack.c.l.bf16 %v237
        %v270 = vunpack.c.l.bf16 %v238
        %v271 = vunpack.c.l.bf16 %v239
        %v272 = vunpack.c.l.bf16 %v240
        %v273 = vunpack.c.l.bf16 %v241
        %v274 = vunpack.c.l.bf16 %v242
        %v275 = vunpack.c.l.bf16 %v243
        %v276 = vunpack.c.l.bf16 %v244
        %v277 = vunpack.c.l.bf16 %v245
        %v278 = vunpack.c.l.bf16 %v246
        %v279 = vunpack.c.l.bf16 %v247
        %v280 = vunpack.c.l.bf16 %v248
        %v281 = vunpack.c.l.bf16 %v249
        %v282 = vunpack.c.l.bf16 %v250
        %v283 = vunpack.c.l.bf16 %v251
        %v284 = vunpack.c.l.bf16 %v252
        %v285 = vld [vmem:[%s2] sm:$0x1]
        %v287 = vlaneseq
        %v288 = vshrl.u32 %v287, 7
        %v289 = vsub.s32 0, %v288
        %v290 = vrot.slane %v285, %v289
        %v292 = vmul.f32 %v253, %v290
        %v293 = vmul.f32 %v254, %v290
        %v294 = vmul.f32 %v255, %v290
        %v295 = vmul.f32 %v256, %v290
        %v296 = vmul.f32 %v257, %v290
        %v297 = vmul.f32 %v258, %v290
        %v298 = vmul.f32 %v259, %v290
        %v299 = vmul.f32 %v260, %v290
        %v300 = vmul.f32 %v261, %v290
        %v301 = vmul.f32 %v262, %v290
        %v302 = vmul.f32 %v263, %v290
        %v303 = vmul.f32 %v264, %v290
        %v304 = vmul.f32 %v265, %v290
        %v305 = vmul.f32 %v266, %v290
        %v306 = vmul.f32 %v267, %v290
        %v307 = vmul.f32 %v268, %v290
        %v308 = vmul.f32 %v269, %v290
        %v309 = vmul.f32 %v270, %v290
        %v310 = vmul.f32 %v271, %v290
        %v311 = vmul.f32 %v272, %v290
        %v312 = vmul.f32 %v273, %v290
        %v313 = vmul.f32 %v274, %v290
        %v314 = vmul.f32 %v275, %v290
        %v315 = vmul.f32 %v276, %v290
        %v316 = vmul.f32 %v277, %v290
        %v317 = vmul.f32 %v278, %v290
        %v318 = vmul.f32 %v279, %v290
        %v319 = vmul.f32 %v280, %v290
        %v320 = vmul.f32 %v281, %v290
        %v321 = vmul.f32 %v282, %v290
        %v322 = vmul.f32 %v283, %v290
        %v323 = vmul.f32 %v284, %v290
        %v324 = vld [vmem:[%s3] sm:$0x1]
        %v326 = vlaneseq
        %v327 = vshrl.u32 %v326, 7
        %v328 = vsub.s32 0, %v327
        %v329 = vrot.slane %v324, %v328
        %v331 = vadd.f32 %v292, %v329
        %v332 = vadd.f32 %v293, %v329
        %v333 = vadd.f32 %v294, %v329
        %v334 = vadd.f32 %v295, %v329
        %v335 = vadd.f32 %v296, %v329
        %v336 = vadd.f32 %v297, %v329
        %v337 = vadd.f32 %v298, %v329
        %v338 = vadd.f32 %v299, %v329
        %v339 = vadd.f32 %v300, %v329
        %v340 = vadd.f32 %v301, %v329
        %v341 = vadd.f32 %v302, %v329
        %v342 = vadd.f32 %v303, %v329
        %v343 = vadd.f32 %v304, %v329
        %v344 = vadd.f32 %v305, %v329
        %v345 = vadd.f32 %v306, %v329
        %v346 = vadd.f32 %v307, %v329
        %v347 = vadd.f32 %v308, %v329
        %v348 = vadd.f32 %v309, %v329
        %v349 = vadd.f32 %v310, %v329
        %v350 = vadd.f32 %v311, %v329
        %v351 = vadd.f32 %v312, %v329
        %v352 = vadd.f32 %v313, %v329
        %v353 = vadd.f32 %v314, %v329
        %v354 = vadd.f32 %v315, %v329
        %v355 = vadd.f32 %v316, %v329
        %v356 = vadd.f32 %v317, %v329
        %v357 = vadd.f32 %v318, %v329
        %v358 = vadd.f32 %v319, %v329
        %v359 = vadd.f32 %v320, %v329
        %v360 = vadd.f32 %v321, %v329
        %v361 = vadd.f32 %v322, %v329
        %v362 = vadd.f32 %v323, %v329
        %v363 = vld [vmem:[%s218] sm:$0xff]
        %v364 = vld [vmem:[%s218 + $0x8] sm:$0xff]
        %v365 = vld [vmem:[%s218 + $0x10] sm:$0xff]
        %v366 = vld [vmem:[%s218 + $0x18] sm:$0xff]
        %v367 = vld [vmem:[%s218 + $0x20] sm:$0xff]
        %v368 = vld [vmem:[%s218 + $0x28] sm:$0xff]
        %v369 = vld [vmem:[%s218 + $0x30] sm:$0xff]
        %v370 = vld [vmem:[%s218 + $0x38] sm:$0xff]
        %v371 = vld [vmem:[%s218 + $0x40] sm:$0xff]
        %v372 = vld [vmem:[%s218 + $0x48] sm:$0xff]
        %v373 = vld [vmem:[%s218 + $0x50] sm:$0xff]
        %v374 = vld [vmem:[%s218 + $0x58] sm:$0xff]
        %v375 = vld [vmem:[%s218 + $0x60] sm:$0xff]
        %v376 = vld [vmem:[%s218 + $0x68] sm:$0xff]
        %v377 = vld [vmem:[%s218 + $0x70] sm:$0xff]
        %v378 = vld [vmem:[%s218 + $0x78] sm:$0xff]
        %v379 = vld [vmem:[%s218 + $0x80] sm:$0xff]
        %v380 = vld [vmem:[%s218 + $0x88] sm:$0xff]
        %v381 = vld [vmem:[%s218 + $0x90] sm:$0xff]
        %v382 = vld [vmem:[%s218 + $0x98] sm:$0xff]
        %v383 = vld [vmem:[%s218 + $0xa0] sm:$0xff]
        %v384 = vld [vmem:[%s218 + $0xa8] sm:$0xff]
        %v385 = vld [vmem:[%s218 + $0xb0] sm:$0xff]
        %v386 = vld [vmem:[%s218 + $0xb8] sm:$0xff]
        %v387 = vld [vmem:[%s218 + $0xc0] sm:$0xff]
        %v388 = vld [vmem:[%s218 + $0xc8] sm:$0xff]
        %v389 = vld [vmem:[%s218 + $0xd0] sm:$0xff]
        %v390 = vld [vmem:[%s218 + $0xd8] sm:$0xff]
        %v391 = vld [vmem:[%s218 + $0xe0] sm:$0xff]
        %v392 = vld [vmem:[%s218 + $0xe8] sm:$0xff]
        %v393 = vld [vmem:[%s218 + $0xf0] sm:$0xff]
        %v394 = vld [vmem:[%s218 + $0xf8] sm:$0xff]
        %v395 = vadd.f32 %v331, %v363
        %v396 = vadd.f32 %v332, %v364
        %v397 = vadd.f32 %v333, %v365
        %v398 = vadd.f32 %v334, %v366
        %v399 = vadd.f32 %v335, %v367
        %v400 = vadd.f32 %v336, %v368
        %v401 = vadd.f32 %v337, %v369
        %v402 = vadd.f32 %v338, %v370
        %v403 = vadd.f32 %v339, %v371
        %v404 = vadd.f32 %v340, %v372
        %v405 = vadd.f32 %v341, %v373
        %v406 = vadd.f32 %v342, %v374
        %v407 = vadd.f32 %v343, %v375
        %v408 = vadd.f32 %v344, %v376
        %v409 = vadd.f32 %v345, %v377
        %v410 = vadd.f32 %v346, %v378
        %v411 = vadd.f32 %v347, %v379
        %v412 = vadd.f32 %v348, %v380
        %v413 = vadd.f32 %v349, %v381
        %v414 = vadd.f32 %v350, %v382
        %v415 = vadd.f32 %v351, %v383
        %v416 = vadd.f32 %v352, %v384
        %v417 = vadd.f32 %v353, %v385
        %v418 = vadd.f32 %v354, %v386
        %v419 = vadd.f32 %v355, %v387
        %v420 = vadd.f32 %v356, %v388
        %v421 = vadd.f32 %v357, %v389
        %v422 = vadd.f32 %v358, %v390
        %v423 = vadd.f32 %v359, %v391
        %v424 = vadd.f32 %v360, %v392
        %v425 = vadd.f32 %v361, %v393
        %v426 = vadd.f32 %v362, %v394
        %v427 = vmax.f32 %v395, 0.0
        %v428 = vmax.f32 %v396, 0.0
        %v429 = vmax.f32 %v397, 0.0
        %v430 = vmax.f32 %v398, 0.0
        %v431 = vmax.f32 %v399, 0.0
        %v432 = vmax.f32 %v400, 0.0
        %v433 = vmax.f32 %v401, 0.0
        %v434 = vmax.f32 %v402, 0.0
        %v435 = vmax.f32 %v403, 0.0
        %v436 = vmax.f32 %v404, 0.0
        %v437 = vmax.f32 %v405, 0.0
        %v438 = vmax.f32 %v406, 0.0
        %v439 = vmax.f32 %v407, 0.0
        %v440 = vmax.f32 %v408, 0.0
        %v441 = vmax.f32 %v409, 0.0
        %v442 = vmax.f32 %v410, 0.0
        %v443 = vmax.f32 %v411, 0.0
        %v444 = vmax.f32 %v412, 0.0
        %v445 = vmax.f32 %v413, 0.0
        %v446 = vmax.f32 %v414, 0.0
        %v447 = vmax.f32 %v415, 0.0
        %v448 = vmax.f32 %v416, 0.0
        %v449 = vmax.f32 %v417, 0.0
        %v450 = vmax.f32 %v418, 0.0
        %v451 = vmax.f32 %v419, 0.0
        %v452 = vmax.f32 %v420, 0.0
        %v453 = vmax.f32 %v421, 0.0
        %v454 = vmax.f32 %v422, 0.0
        %v455 = vmax.f32 %v423, 0.0
        %v456 = vmax.f32 %v424, 0.0
        %v457 = vmax.f32 %v425, 0.0
        %v458 = vmax.f32 %v426, 0.0
        %459 = vst [vmem:[%s207] sm:$0xff] %v427
        %460 = vst [vmem:[%s207 + $0x8] sm:$0xff] %v428
        %461 = vst [vmem:[%s207 + $0x10] sm:$0xff] %v429
        %462 = vst [vmem:[%s207 + $0x18] sm:$0xff] %v430
        %463 = vst [vmem:[%s207 + $0x20] sm:$0xff] %v431
        %464 = vst [vmem:[%s207 + $0x28] sm:$0xff] %v432
        %465 = vst [vmem:[%s207 + $0x30] sm:$0xff] %v433
        %466 = vst [vmem:[%s207 + $0x38] sm:$0xff] %v434
        %467 = vst [vmem:[%s207 + $0x40] sm:$0xff] %v435
        %468 = vst [vmem:[%s207 + $0x48] sm:$0xff] %v436
        %469 = vst [vmem:[%s207 + $0x50] sm:$0xff] %v437
        %470 = vst [vmem:[%s207 + $0x58] sm:$0xff] %v438
        %471 = vst [vmem:[%s207 + $0x60] sm:$0xff] %v439
        %472 = vst [vmem:[%s207 + $0x68] sm:$0xff] %v440
        %473 = vst [vmem:[%s207 + $0x70] sm:$0xff] %v441
        %474 = vst [vmem:[%s207 + $0x78] sm:$0xff] %v442
        %475 = vst [vmem:[%s207 + $0x80] sm:$0xff] %v443
        %476 = vst [vmem:[%s207 + $0x88] sm:$0xff] %v444
        %477 = vst [vmem:[%s207 + $0x90] sm:$0xff] %v445
        %478 = vst [vmem:[%s207 + $0x98] sm:$0xff] %v446
        %479 = vst [vmem:[%s207 + $0xa0] sm:$0xff] %v447
        %480 = vst [vmem:[%s207 + $0xa8] sm:$0xff] %v448
        %481 = vst [vmem:[%s207 + $0xb0] sm:$0xff] %v449
        %482 = vst [vmem:[%s207 + $0xb8] sm:$0xff] %v450
        %483 = vst [vmem:[%s207 + $0xc0] sm:$0xff] %v451
        %484 = vst [vmem:[%s207 + $0xc8] sm:$0xff] %v452
        %485 = vst [vmem:[%s207 + $0xd0] sm:$0xff] %v453
        %486 = vst [vmem:[%s207 + $0xd8] sm:$0xff] %v454
        %487 = vst [vmem:[%s207 + $0xe0] sm:$0xff] %v455
        %488 = vst [vmem:[%s207 + $0xe8] sm:$0xff] %v456
        %489 = vst [vmem:[%s207 + $0xf0] sm:$0xff] %v457
        %490 = vst [vmem:[%s207 + $0xf8] sm:$0xff] %v458
        %s491 = sand.u32 %s120, 1
        %s492 = scalar_lea.sflag [#allocation3], %s491
        %s493 = sand.u32 %s120, 1
        %s494 = smul.addr %s493, 256
        %s495 = scalar_lea.vmem [#allocation2], %s494
        // Predicated region
        $region37: #{bottleneck_block_nhwc.7} parent=35 // pred_check
          %p496 = pneg %p130
        $region38: #{bottleneck_block_nhwc.7} parent=35 // pred_check_branch
          %498 = sbr.rel (%p496) target = $region40
        $region39: #{bottleneck_block_nhwc.7} parent=35 // pred_region
          %s499 = smul.u32 32, %s18
          %s501 = ssub.s32 4096, 4096
          %502 = vsyncadd %s492, %s501
          %s503 = smul.addr %s499, 128
          %s504 = scalar_lea.hbm %s4, %s503
          %s505 = sshll.u32 %s495, 4
          %s506 = int_to_ptr.vmem [resolvable:$true] %s505
          %511 = dma.vmem_to_hbm [thread:$0]  %s506, 4096, %s504, %s492, 128, 128, 8
        $region40: #{bottleneck_block_nhwc.7} parent=35 // pred_fallthru
          _
      $region36: #{bottleneck_block_nhwc.7} parent=5 // pred_fallthru
        _
      %p512 = scmp.le.s32.totalorder 2, %s13
      // Predicated region
      $region41: #{bottleneck_block_nhwc.7} parent=5 // pred_check
        %p513 = pneg %p512
      $region42: #{bottleneck_block_nhwc.7} parent=5 // pred_check_branch
        %515 = sbr.rel (%p513) target = $region44
      $region43: #{bottleneck_block_nhwc.7} parent=5 // pred_region
        %s516 = ssub.s32 %s13, 2
        // Predicated region
        $region45: #{bottleneck_block_nhwc.7} parent=43 // pred_check
          %p517 = pneg %p136
        $region46: #{bottleneck_block_nhwc.7} parent=43 // pred_check_branch
          %519 = sbr.rel (%p517) target = $region48
        $region47: #{bottleneck_block_nhwc.7} parent=43 // pred_region
          %s520 = sand.u32 %s121, 1
          %s521 = scalar_lea.sflag [#allocation3], %s520
          %s522 = sand.u32 %s121, 1
          %s523 = smul.addr %s522, 256
          %s524 = scalar_lea.vmem [#allocation2], %s523
          %525 = dma.done %s521, 4096
        $region48: #{bottleneck_block_nhwc.7} parent=43 // pred_fallthru
          _
      $region44: #{bottleneck_block_nhwc.7} parent=5 // pred_fallthru
        _
    $region6: #{bottleneck_block_nhwc.7} parent=1 // loop_footer
      %s17 = sadd.s32 1, %s13
    $region7: #{bottleneck_block_nhwc.7} parent=1 // loop_footer_branch
      %12 = sbr.rel target = $region3
    $region8: #{bottleneck_block_nhwc.7} parent=1 // loop_exit
      _
    %526 = vsyncpa [#allocation3], 1
    %s527 = scalar_lea.sflag [#allocation3], 1
    %528 = vsyncpa %s527, 1

// kernel: bottleneck_block_nhwc.5
$region0: #{bottleneck_block_nhwc.5}
  #allocation0 [shape = 'u32[]', space=smem, size = 0x4, offset = 0x4, fixed_abs, tag = 'smem constant byte address 0x4 - core index']
  #allocation1 [shape = 'u32[144,128]{1,0:T(1,128)}', space=vmem, size = 0x12000, scoped, tag = 'internal scratch']
  #allocation2 [shape = 'f32[18,18,32]{2,1,0:T(8,128)}', space=vmem, size = 0x36000, scoped, tag = 'scratch operand']
  %s0 = inlined_call_operand.vmem [shape: bf16[512,32], index: 0, kind: input, shape index: {}]
  %s1 = inlined_call_operand.vmem [shape: f32[1,32], index: 1, kind: input, shape index: {}]
  %s2 = inlined_call_operand.vmem [shape: f32[1,32], index: 2, kind: input, shape index: {}]
  %s3 = inlined_call_operand.vmem [shape: bf16[9,32,32], index: 3, kind: input, shape index: {}]
  %s4 = inlined_call_operand.vmem [shape: bf16[512,32], index: 4, kind: output, shape index: {0}]
  %s5 = inlined_call_operand.vmem [shape: f32[2,2,32], index: 5, kind: output, shape index: {1}]
  %6 = xla_tuple %s4, %s5
  %s7 = sld [smem:[#allocation0]]
  $region57: #{bottleneck_block_nhwc.5} parent=0
    _
  %s9 = ssub.s32 1, %s7
  %s10 = scalar_select 0, %s9, %s7
  loop: start=0, step=1, limit=4
  $region2: #{bottleneck_block_nhwc.5} parent=0 // loop_pre_header
    _
  $region3: #{bottleneck_block_nhwc.5} parent=0 // loop_header
    %s12 = sphi 0, %s16
    %p13 = scmp.ge.s32.totalorder %s12, 4
    %s22 = sphi 0, %s24
    %s25 = sphi 0, %s22
    %s26 = sphi 0, %s25
    %s42 = sphi 0, %s26
    %s46 = sphi 0, %s46
    %s48 = sphi 0, %s46
    %s49 = sphi 0, %s48
    %s63 = sphi 0, %s49
    %s67 = sphi 0, %s67
    %s69 = sphi 0, %s67
    %s70 = sphi 0, %s69
    %s84 = sphi 0, %s70
    %s88 = sphi 0, %s88
    %s90 = sphi 0, %s88
    %s91 = sphi 0, %s90
    %s105 = sphi 0, %s91
    %s111 = sphi 0, %s113
    %s114 = sphi 0, %s111
    %s115 = sphi 0, %s114
    %s131 = sphi 0, %s115
    %s137 = sphi 0, %s139
    %s140 = sphi 0, %s137
    %s141 = sphi 0, %s140
    %s157 = sphi 0, %s141
  $region4: #{bottleneck_block_nhwc.5} parent=0 // loop_header_branch
    %15 = sbr.rel (%p13) target = $region8
  $region5: #{bottleneck_block_nhwc.5} parent=0 // loop_body
    %s17 = ssub.s32 %s12, 1
    %s18 = ssub.s32 %s12, 2
    %s19 = sadd.s32 %s12, 1
    %s20 = ssub.s32 %s12, %s19
    %p21 = scmp.eq.s32.totalorder %s20, 0
    %s23 = sadd.s32 %s22, 1
    %s24 = scalar_select %p21, %s22, %s23
    %p27 = pneg %p21
    %p28 = scmp.eq.s32.totalorder %s12, 1
    %p29 = por %p27, %p28
    %p30 = scmp.ne.s32.totalorder %s22, %s25
    %p31 = scmp.eq.s32.totalorder %s12, 0
    %p32 = por %p30, %p31
    %p33 = scmp.ne.s32.totalorder %s22, %s25
    %p34 = scmp.eq.s32.totalorder %s17, 1
    %p35 = por %p33, %p34
    %p36 = scmp.ne.s32.totalorder %s25, %s26
    %p37 = scmp.eq.s32.totalorder %s17, 0
    %p38 = por %p36, %p37
    %p39 = scmp.ne.s32.totalorder %s25, %s26
    %p40 = scmp.eq.s32.totalorder %s18, 1
    %p41 = por %p39, %p40
    %p43 = scmp.ne.s32.totalorder %s26, %s42
    %p44 = scmp.eq.s32.totalorder %s18, 0
    %p45 = por %p43, %p44
    %s47 = sadd.s32 %s46, 1
    %p50 = scmp.eq.s32.totalorder %s12, 1
    %p51 = scmp.ne.s32.totalorder %s46, %s48
    %p52 = scmp.eq.s32.totalorder %s12, 0
    %p53 = por %p51, %p52
    %p54 = scmp.ne.s32.totalorder %s46, %s48
    %p55 = scmp.eq.s32.totalorder %s17, 1
    %p56 = por %p54, %p55
    %p57 = scmp.ne.s32.totalorder %s48, %s49
    %p58 = scmp.eq.s32.totalorder %s17, 0
    %p59 = por %p57, %p58
    %p60 = scmp.ne.s32.totalorder %s48, %s49
    %p61 = scmp.eq.s32.totalorder %s18, 1
    %p62 = por %p60, %p61
    %p64 = scmp.ne.s32.totalorder %s49, %s63
    %p65 = scmp.eq.s32.totalorder %s18, 0
    %p66 = por %p64, %p65
    %s68 = sadd.s32 %s67, 1
    %p71 = scmp.eq.s32.totalorder %s12, 1
    %p72 = scmp.ne.s32.totalorder %s67, %s69
    %p73 = scmp.eq.s32.totalorder %s12, 0
    %p74 = por %p72, %p73
    %p75 = scmp.ne.s32.totalorder %s67, %s69
    %p76 = scmp.eq.s32.totalorder %s17, 1
    %p77 = por %p75, %p76
    %p78 = scmp.ne.s32.totalorder %s69, %s70
    %p79 = scmp.eq.s32.totalorder %s17, 0
    %p80 = por %p78, %p79
    %p81 = scmp.ne.s32.totalorder %s69, %s70
    %p82 = scmp.eq.s32.totalorder %s18, 1
    %p83 = por %p81, %p82
    %p85 = scmp.ne.s32.totalorder %s70, %s84
    %p86 = scmp.eq.s32.totalorder %s18, 0
    %p87 = por %p85, %p86
    %s89 = sadd.s32 %s88, 1
    %p92 = scmp.eq.s32.totalorder %s12, 1
    %p93 = scmp.ne.s32.totalorder %s88, %s90
    %p94 = scmp.eq.s32.totalorder %s12, 0
    %p95 = por %p93, %p94
    %p96 = scmp.ne.s32.totalorder %s88, %s90
    %p97 = scmp.eq.s32.totalorder %s17, 1
    %p98 = por %p96, %p97
    %p99 = scmp.ne.s32.totalorder %s90, %s91
    %p100 = scmp.eq.s32.totalorder %s17, 0
    %p101 = por %p99, %p100
    %p102 = scmp.ne.s32.totalorder %s90, %s91
    %p103 = scmp.eq.s32.totalorder %s18, 1
    %p104 = por %p102, %p103
    %p106 = scmp.ne.s32.totalorder %s91, %s105
    %p107 = scmp.eq.s32.totalorder %s18, 0
    %p108 = por %p106, %p107
    %s109 = ssub.s32 %s12, %s19
    %p110 = scmp.eq.s32.totalorder %s109, 0
    %s112 = sadd.s32 %s111, 1
    %s113 = scalar_select %p110, %s111, %s112
    %p116 = pneg %p110
    %p117 = scmp.eq.s32.totalorder %s12, 1
    %p118 = por %p116, %p117
    %p119 = scmp.ne.s32.totalorder %s111, %s114
    %p120 = scmp.eq.s32.totalorder %s12, 0
    %p121 = por %p119, %p120
    %p122 = scmp.ne.s32.totalorder %s111, %s114
    %p123 = scmp.eq.s32.totalorder %s17, 1
    %p124 = por %p122, %p123
    %p125 = scmp.ne.s32.totalorder %s114, %s115
    %p126 = scmp.eq.s32.totalorder %s17, 0
    %p127 = por %p125, %p126
    %p128 = scmp.ne.s32.totalorder %s114, %s115
    %p129 = scmp.eq.s32.totalorder %s18, 1
    %p130 = por %p128, %p129
    %p132 = scmp.ne.s32.totalorder %s115, %s131
    %p133 = scmp.eq.s32.totalorder %s18, 0
    %p134 = por %p132, %p133
    %s135 = ssub.s32 %s12, %s19
    %p136 = scmp.eq.s32.totalorder %s135, 0
    %s138 = sadd.s32 %s137, 1
    %s139 = scalar_select %p136, %s137, %s138
    %p142 = pneg %p136
    %p143 = scmp.eq.s32.totalorder %s12, 1
    %p144 = por %p142, %p143
    %p145 = scmp.ne.s32.totalorder %s137, %s140
    %p146 = scmp.eq.s32.totalorder %s12, 0
    %p147 = por %p145, %p146
    %p148 = scmp.ne.s32.totalorder %s137, %s140
    %p149 = scmp.eq.s32.totalorder %s17, 1
    %p150 = por %p148, %p149
    %p151 = scmp.ne.s32.totalorder %s140, %s141
    %p152 = scmp.eq.s32.totalorder %s17, 0
    %p153 = por %p151, %p152
    %p154 = scmp.ne.s32.totalorder %s140, %s141
    %p155 = scmp.eq.s32.totalorder %s18, 1
    %p156 = por %p154, %p155
    %p158 = scmp.ne.s32.totalorder %s141, %s157
    %p159 = scmp.eq.s32.totalorder %s18, 0
    %p160 = por %p158, %p159
    %p161 = scmp.le.s32.totalorder 1, %s12
    %p162 = scmp.lt.s32.totalorder %s12, 3
    %p163 = pnand %p161, %p162
    %p164 = pneg %p163
    // Predicated region
    $region9: #{bottleneck_block_nhwc.5} parent=5 // pred_check
      _
    $region10: #{bottleneck_block_nhwc.5} parent=5 // pred_check_branch
      %166 = sbr.rel (%p163) target = $region12
    $region11: #{bottleneck_block_nhwc.5} parent=5 // pred_region
      %s167 = ssub.s32 %s12, 1
      // Predicated region
      $region13: #{bottleneck_block_nhwc.5} parent=11 // pred_check
        %p168 = pneg %p59
      $region14: #{bottleneck_block_nhwc.5} parent=11 // pred_check_branch
        %170 = sbr.rel (%p168) target = $region16
      $region15: #{bottleneck_block_nhwc.5} parent=11 // pred_region
        _
      $region16: #{bottleneck_block_nhwc.5} parent=11 // pred_fallthru
        _
      // Predicated region
      $region17: #{bottleneck_block_nhwc.5} parent=11 // pred_check
        %p171 = pneg %p80
      $region18: #{bottleneck_block_nhwc.5} parent=11 // pred_check_branch
        %173 = sbr.rel (%p171) target = $region20
      $region19: #{bottleneck_block_nhwc.5} parent=11 // pred_region
        _
      $region20: #{bottleneck_block_nhwc.5} parent=11 // pred_fallthru
        _
      // Predicated region
      $region21: #{bottleneck_block_nhwc.5} parent=11 // pred_check
        %p174 = pneg %p101
      $region22: #{bottleneck_block_nhwc.5} parent=11 // pred_check_branch
        %176 = sbr.rel (%p174) target = $region24
      $region23: #{bottleneck_block_nhwc.5} parent=11 // pred_region
        _
      $region24: #{bottleneck_block_nhwc.5} parent=11 // pred_fallthru
        _
    $region12: #{bottleneck_block_nhwc.5} parent=5 // pred_fallthru
      _
    %p177 = scmp.lt.s32.totalorder %s12, 2
    // Predicated region
    $region25: #{bottleneck_block_nhwc.5} parent=5 // pred_check
      %p178 = pneg %p177
    $region26: #{bottleneck_block_nhwc.5} parent=5 // pred_check_branch
      %180 = sbr.rel (%p178) target = $region28
    $region27: #{bottleneck_block_nhwc.5} parent=5 // pred_region
      // Predicated region
      $region29: #{bottleneck_block_nhwc.5} parent=27 // pred_check
        %p181 = pneg %p32
      $region30: #{bottleneck_block_nhwc.5} parent=27 // pred_check_branch
        %183 = sbr.rel (%p181) target = $region32
      $region31: #{bottleneck_block_nhwc.5} parent=27 // pred_region
        %s184 = smul.u32 32, %s12
        %p185 = scmp.lt.s32.totalorder %s184, 63
        %s186 = scalar_select %p185, %s184, 63
        %s187 = smul.addr %s186, 4
        %s188 = scalar_lea.vmem %s0, %s187
        %s189 = smul.u32 32, %s12
      $region32: #{bottleneck_block_nhwc.5} parent=27 // pred_fallthru
        _
    $region28: #{bottleneck_block_nhwc.5} parent=5 // pred_fallthru
      _
    %p190 = scmp.le.s32.totalorder 1, %s12
    %p191 = scmp.lt.s32.totalorder %s12, 3
    %p192 = pnand %p190, %p191
    %p193 = pneg %p192
    // Predicated region
    $region33: #{bottleneck_block_nhwc.5} parent=5 // pred_check
      _
    $region34: #{bottleneck_block_nhwc.5} parent=5 // pred_check_branch
      %195 = sbr.rel (%p192) target = $region36
    $region35: #{bottleneck_block_nhwc.5} parent=5 // pred_region
      %s196 = ssub.s32 %s12, 1
      %s197 = smul.u32 32, %s17
      %p198 = scmp.lt.s32.totalorder %s197, 63
      %s199 = scalar_select %p198, %s197, 63
      %s200 = smul.addr %s199, 4
      %s201 = scalar_lea.vmem %s0, %s200
      %p202 = pneg %p38
      %p203 = pneg %p35
      %p204 = pneg %p59
      %p205 = pneg %p56
      %p206 = pneg %p80
      %p207 = pneg %p77
      %p208 = pneg %p101
      %p209 = pneg %p98
      %p210 = pneg %p127
      %p211 = pneg %p124
      %s212 = smul.u32 32, %s17
      %p213 = scmp.lt.s32.totalorder %s212, 63
      %s214 = scalar_select %p213, %s212, 63
      %s215 = smul.addr %s214, 4
      %s216 = scalar_lea.vmem %s4, %s215
      %p217 = pneg %p153
      %p218 = pneg %p150
      %p219 = scmp.lt.s32.totalorder %s17, 1
      %s220 = scalar_select %p219, %s17, 1
      %s221 = smul.addr %s220, 2
      %s222 = scalar_lea.vmem %s5, %s221
      %s223 = smul.u32 32, %s17
      %p224 = scmp.lt.s32.totalorder %s223, 63
      %s225 = scalar_select %p224, %s223, 63
      %s226 = smul.addr %s225, 4
      %s227 = scalar_lea.vmem %s0, %s226
      %s228 = smul.u32 32, %s17
      %s229 = smul.u32 32, %s17
      %p230 = scmp.lt.s32.totalorder %s229, 63
      %s231 = scalar_select %p230, %s229, 63
      %s232 = smul.addr %s231, 4
      %s233 = scalar_lea.vmem %s4, %s232
      %s234 = smul.u32 32, %s17
      %p235 = scmp.lt.s32.totalorder %s17, 1
      %s236 = scalar_select %p235, %s17, 1
      %s237 = smul.addr %s236, 2
      %s238 = scalar_lea.vmem %s5, %s237
      %vm240 = vcmask 261120
      %241 = vst.msk [vmem:[#allocation2] sm:$0xff] %vm240, 0.0
      %242 = vst.msk [vmem:[#allocation2 + $0x8] sm:$0xff] %vm240, 0.0
      %vm243 = vcmask 254976
      %244 = vst.msk [vmem:[#allocation2 + $0x10] sm:$0x3] %vm243, 0.0
      %s245 = scalar_lea.vmem [#allocation2], 408
      %246 = vst.msk [vmem:[%s245] sm:$0xff] %vm240, 0.0
      %247 = vst.msk [vmem:[%s245 + $0x8] sm:$0xff] %vm240, 0.0
      %248 = vst.msk [vmem:[%s245 + $0x10] sm:$0x3] %vm243, 0.0
      %s249 = scalar_lea.vmem [#allocation2], 24
      %vm250 = vcmask 253952
      %251 = vst.msk [vmem:[%s249] sm:$0x1] %vm250, 0.0
      %252 = vst.msk [vmem:[%s249 + $0x18] sm:$0x1] %vm250, 0.0
      %253 = vst.msk [vmem:[%s249 + $0x30] sm:$0x1] %vm250, 0.0
      %254 = vst.msk [vmem:[%s249 + $0x48] sm:$0x1] %vm250, 0.0
      %255 = vst.msk [vmem:[%s249 + $0x60] sm:$0x1] %vm250, 0.0
      %256 = vst.msk [vmem:[%s249 + $0x78] sm:$0x1] %vm250, 0.0
      %257 = vst.msk [vmem:[%s249 + $0x90] sm:$0x1] %vm250, 0.0
      %258 = vst.msk [vmem:[%s249 + $0xa8] sm:$0x1] %vm250, 0.0
      %259 = vst.msk [vmem:[%s249 + $0xc0] sm:$0x1] %vm250, 0.0
      %260 = vst.msk [vmem:[%s249 + $0xd8] sm:$0x1] %vm250, 0.0
      %261 = vst.msk [vmem:[%s249 + $0xf0] sm:$0x1] %vm250, 0.0
      %262 = vst.msk [vmem:[%s249 + $0x108] sm:$0x1] %vm250, 0.0
      %263 = vst.msk [vmem:[%s249 + $0x120] sm:$0x1] %vm250, 0.0
      %264 = vst.msk [vmem:[%s249 + $0x138] sm:$0x1] %vm250, 0.0
      %265 = vst.msk [vmem:[%s249 + $0x150] sm:$0x1] %vm250, 0.0
      %266 = vst.msk [vmem:[%s249 + $0x168] sm:$0x1] %vm250, 0.0
      %267 = vst.msk [vmem:[%s249 + $0x11] sm:$0x1] %vm250, 0.0
      %268 = vst.msk [vmem:[%s249 + $0x29] sm:$0x1] %vm250, 0.0
      %269 = vst.msk [vmem:[%s249 + $0x41] sm:$0x1] %vm250, 0.0
      %270 = vst.msk [vmem:[%s249 + $0x59] sm:$0x1] %vm250, 0.0
      %271 = vst.msk [vmem:[%s249 + $0x71] sm:$0x1] %vm250, 0.0
      %272 = vst.msk [vmem:[%s249 + $0x89] sm:$0x1] %vm250, 0.0
      %273 = vst.msk [vmem:[%s249 + $0xa1] sm:$0x1] %vm250, 0.0
      %274 = vst.msk [vmem:[%s249 + $0xb9] sm:$0x1] %vm250, 0.0
      %275 = vst.msk [vmem:[%s249 + $0xd1] sm:$0x1] %vm250, 0.0
      %276 = vst.msk [vmem:[%s249 + $0xe9] sm:$0x1] %vm250, 0.0
      %277 = vst.msk [vmem:[%s249 + $0x101] sm:$0x1] %vm250, 0.0
      %278 = vst.msk [vmem:[%s249 + $0x119] sm:$0x1] %vm250, 0.0
      %279 = vst.msk [vmem:[%s249 + $0x131] sm:$0x1] %vm250, 0.0
      %280 = vst.msk [vmem:[%s249 + $0x149] sm:$0x1] %vm250, 0.0
      %281 = vst.msk [vmem:[%s249 + $0x161] sm:$0x1] %vm250, 0.0
      %282 = vst.msk [vmem:[%s249 + $0x179] sm:$0x1] %vm250, 0.0
      %v283 = vld [vmem:[%s227] sm:$0xf]
      %v284 = vld [vmem:[%s227 + $0x4] sm:$0xf]
      %v285 = vld [vmem:[%s227 + $0x8] sm:$0xf]
      %v286 = vld [vmem:[%s227 + $0xc] sm:$0xf]
      %v287 = vld [vmem:[%s227 + $0x10] sm:$0xf]
      %v288 = vld [vmem:[%s227 + $0x14] sm:$0xf]
      %v289 = vld [vmem:[%s227 + $0x18] sm:$0xf]
      %v290 = vld [vmem:[%s227 + $0x1c] sm:$0xf]
      %v291 = vld [vmem:[%s227 + $0x20] sm:$0xf]
      %v292 = vld [vmem:[%s227 + $0x24] sm:$0xf]
      %v293 = vld [vmem:[%s227 + $0x28] sm:$0xf]
      %v294 = vld [vmem:[%s227 + $0x2c] sm:$0xf]
      %v295 = vld [vmem:[%s227 + $0x30] sm:$0xf]
      %v296 = vld [vmem:[%s227 + $0x34] sm:$0xf]
      %v297 = vld [vmem:[%s227 + $0x38] sm:$0xf]
      %v298 = vld [vmem:[%s227 + $0x3c] sm:$0xf]
      %v299 = vld [vmem:[%s227 + $0x40] sm:$0xf]
      %v300 = vld [vmem:[%s227 + $0x44] sm:$0xf]
      %v301 = vld [vmem:[%s227 + $0x48] sm:$0xf]
      %v302 = vld [vmem:[%s227 + $0x4c] sm:$0xf]
      %v303 = vld [vmem:[%s227 + $0x50] sm:$0xf]
      %v304 = vld [vmem:[%s227 + $0x54] sm:$0xf]
      %v305 = vld [vmem:[%s227 + $0x58] sm:$0xf]
      %v306 = vld [vmem:[%s227 + $0x5c] sm:$0xf]
      %v307 = vld [vmem:[%s227 + $0x60] sm:$0xf]
      %v308 = vld [vmem:[%s227 + $0x64] sm:$0xf]
      %v309 = vld [vmem:[%s227 + $0x68] sm:$0xf]
      %v310 = vld [vmem:[%s227 + $0x6c] sm:$0xf]
      %v311 = vld [vmem:[%s227 + $0x70] sm:$0xf]
      %v312 = vld [vmem:[%s227 + $0x74] sm:$0xf]
      %v313 = vld [vmem:[%s227 + $0x78] sm:$0xf]
      %v314 = vld [vmem:[%s227 + $0x7c] sm:$0xf]
      %v315 = vunpack.c.l.bf16 %v283
      %v316 = vunpack.c.l.bf16 %v284
      %v317 = vunpack.c.l.bf16 %v285
      %v318 = vunpack.c.l.bf16 %v286
      %v319 = vunpack.c.l.bf16 %v287
      %v320 = vunpack.c.l.bf16 %v288
      %v321 = vunpack.c.l.bf16 %v289
      %v322 = vunpack.c.l.bf16 %v290
      %v323 = vunpack.c.l.bf16 %v291
      %v324 = vunpack.c.l.bf16 %v292
      %v325 = vunpack.c.l.bf16 %v293
      %v326 = vunpack.c.l.bf16 %v294
      %v327 = vunpack.c.l.bf16 %v295
      %v328 = vunpack.c.l.bf16 %v296
      %v329 = vunpack.c.l.bf16 %v297
      %v330 = vunpack.c.l.bf16 %v298
      %v331 = vunpack.c.l.bf16 %v299
      %v332 = vunpack.c.l.bf16 %v300
      %v333 = vunpack.c.l.bf16 %v301
      %v334 = vunpack.c.l.bf16 %v302
      %v335 = vunpack.c.l.bf16 %v303
      %v336 = vunpack.c.l.bf16 %v304
      %v337 = vunpack.c.l.bf16 %v305
      %v338 = vunpack.c.l.bf16 %v306
      %v339 = vunpack.c.l.bf16 %v307
      %v340 = vunpack.c.l.bf16 %v308
      %v341 = vunpack.c.l.bf16 %v309
      %v342 = vunpack.c.l.bf16 %v310
      %v343 = vunpack.c.l.bf16 %v311
      %v344 = vunpack.c.l.bf16 %v312
      %v345 = vunpack.c.l.bf16 %v313
      %v346 = vunpack.c.l.bf16 %v314
      %v347 = vld [vmem:[%s1] sm:$0x1]
      %v349 = vlaneseq
      %v350 = vshrl.u32 %v349, 7
      %v351 = vsub.s32 0, %v350
      %v352 = vrot.slane %v347, %v351
      %v354 = vmul.f32 %v315, %v352
      %v355 = vmul.f32 %v316, %v352
      %v356 = vmul.f32 %v317, %v352
      %v357 = vmul.f32 %v318, %v352
      %v358 = vmul.f32 %v319, %v352
      %v359 = vmul.f32 %v320, %v352
      %v360 = vmul.f32 %v321, %v352
      %v361 = vmul.f32 %v322, %v352
      %v362 = vmul.f32 %v323, %v352
      %v363 = vmul.f32 %v324, %v352
      %v364 = vmul.f32 %v325, %v352
      %v365 = vmul.f32 %v326, %v352
      %v366 = vmul.f32 %v327, %v352
      %v367 = vmul.f32 %v328, %v352
      %v368 = vmul.f32 %v329, %v352
      %v369 = vmul.f32 %v330, %v352
      %v370 = vmul.f32 %v331, %v352
      %v371 = vmul.f32 %v332, %v352
      %v372 = vmul.f32 %v333, %v352
      %v373 = vmul.f32 %v334, %v352
      %v374 = vmul.f32 %v335, %v352
      %v375 = vmul.f32 %v336, %v352
      %v376 = vmul.f32 %v337, %v352
      %v377 = vmul.f32 %v338, %v352
      %v378 = vmul.f32 %v339, %v352
      %v379 = vmul.f32 %v340, %v352
      %v380 = vmul.f32 %v341, %v352
      %v381 = vmul.f32 %v342, %v352
      %v382 = vmul.f32 %v343, %v352
      %v383 = vmul.f32 %v344, %v352
      %v384 = vmul.f32 %v345, %v352
      %v385 = vmul.f32 %v346, %v352
      %v386 = vld [vmem:[%s2] sm:$0x1]
      %v388 = vlaneseq
      %v389 = vshrl.u32 %v388, 7
      %v390 = vsub.s32 0, %v389
      %v391 = vrot.slane %v386, %v390
      %v393 = vadd.f32 %v354, %v391
      %v394 = vadd.f32 %v355, %v391
      %v395 = vadd.f32 %v356, %v391
      %v396 = vadd.f32 %v357, %v391
      %v397 = vadd.f32 %v358, %v391
      %v398 = vadd.f32 %v359, %v391
      %v399 = vadd.f32 %v360, %v391
      %v400 = vadd.f32 %v361, %v391
      %v401 = vadd.f32 %v362, %v391
      %v402 = vadd.f32 %v363, %v391
      %v403 = vadd.f32 %v364, %v391
      %v404 = vadd.f32 %v365, %v391
      %v405 = vadd.f32 %v366, %v391
      %v406 = vadd.f32 %v367, %v391
      %v407 = vadd.f32 %v368, %v391
      %v408 = vadd.f32 %v369, %v391
      %v409 = vadd.f32 %v370, %v391
      %v410 = vadd.f32 %v371, %v391
      %v411 = vadd.f32 %v372, %v391
      %v412 = vadd.f32 %v373, %v391
      %v413 = vadd.f32 %v374, %v391
      %v414 = vadd.f32 %v375, %v391
      %v415 = vadd.f32 %v376, %v391
      %v416 = vadd.f32 %v377, %v391
      %v417 = vadd.f32 %v378, %v391
      %v418 = vadd.f32 %v379, %v391
      %v419 = vadd.f32 %v380, %v391
      %v420 = vadd.f32 %v381, %v391
      %v421 = vadd.f32 %v382, %v391
      %v422 = vadd.f32 %v383, %v391
      %v423 = vadd.f32 %v384, %v391
      %v424 = vadd.f32 %v385, %v391
      %v425 = vmax.f32 %v393, 0.0
      %v426 = vmax.f32 %v394, 0.0
      %v427 = vmax.f32 %v395, 0.0
      %v428 = vmax.f32 %v396, 0.0
      %v429 = vmax.f32 %v397, 0.0
      %v430 = vmax.f32 %v398, 0.0
      %v431 = vmax.f32 %v399, 0.0
      %v432 = vmax.f32 %v400, 0.0
      %v433 = vmax.f32 %v401, 0.0
      %v434 = vmax.f32 %v402, 0.0
      %v435 = vmax.f32 %v403, 0.0
      %v436 = vmax.f32 %v404, 0.0
      %v437 = vmax.f32 %v405, 0.0
      %v438 = vmax.f32 %v406, 0.0
      %v439 = vmax.f32 %v407, 0.0
      %v440 = vmax.f32 %v408, 0.0
      %v441 = vmax.f32 %v409, 0.0
      %v442 = vmax.f32 %v410, 0.0
      %v443 = vmax.f32 %v411, 0.0
      %v444 = vmax.f32 %v412, 0.0
      %v445 = vmax.f32 %v413, 0.0
      %v446 = vmax.f32 %v414, 0.0
      %v447 = vmax.f32 %v415, 0.0
      %v448 = vmax.f32 %v416, 0.0
      %v449 = vmax.f32 %v417, 0.0
      %v450 = vmax.f32 %v418, 0.0
      %v451 = vmax.f32 %v419, 0.0
      %v452 = vmax.f32 %v420, 0.0
      %v453 = vmax.f32 %v421, 0.0
      %v454 = vmax.f32 %v422, 0.0
      %v455 = vmax.f32 %v423, 0.0
      %v456 = vmax.f32 %v424, 0.0
      %457 = vst.msk [vmem:[%s249 + $0x1] sm:$0xff] %vm240, %v425
      %458 = vst.msk [vmem:[%s249 + $0x9] sm:$0xff] %vm240, %v426
      %459 = vst.msk [vmem:[%s249 + $0x19] sm:$0xff] %vm240, %v427
      %460 = vst.msk [vmem:[%s249 + $0x21] sm:$0xff] %vm240, %v428
      %461 = vst.msk [vmem:[%s249 + $0x31] sm:$0xff] %vm240, %v429
      %462 = vst.msk [vmem:[%s249 + $0x39] sm:$0xff] %vm240, %v430
      %463 = vst.msk [vmem:[%s249 + $0x49] sm:$0xff] %vm240, %v431
      %464 = vst.msk [vmem:[%s249 + $0x51] sm:$0xff] %vm240, %v432
      %465 = vst.msk [vmem:[%s249 + $0x61] sm:$0xff] %vm240, %v433
      %466 = vst.msk [vmem:[%s249 + $0x69] sm:$0xff] %vm240, %v434
      %467 = vst.msk [vmem:[%s249 + $0x79] sm:$0xff] %vm240, %v435
      %468 = vst.msk [vmem:[%s249 + $0x81] sm:$0xff] %vm240, %v436
      %469 = vst.msk [vmem:[%s249 + $0x91] sm:$0xff] %vm240, %v437
      %470 = vst.msk [vmem:[%s249 + $0x99] sm:$0xff] %vm240, %v438
      %471 = vst.msk [vmem:[%s249 + $0xa9] sm:$0xff] %vm240, %v439
      %472 = vst.msk [vmem:[%s249 + $0xb1] sm:$0xff] %vm240, %v440
      %473 = vst.msk [vmem:[%s249 + $0xc1] sm:$0xff] %vm240, %v441
      %474 = vst.msk [vmem:[%s249 + $0xc9] sm:$0xff] %vm240, %v442
      %475 = vst.msk [vmem:[%s249 + $0xd9] sm:$0xff] %vm240, %v443
      %476 = vst.msk [vmem:[%s249 + $0xe1] sm:$0xff] %vm240, %v444
      %477 = vst.msk [vmem:[%s249 + $0xf1] sm:$0xff] %vm240, %v445
      %478 = vst.msk [vmem:[%s249 + $0xf9] sm:$0xff] %vm240, %v446
      %479 = vst.msk [vmem:[%s249 + $0x109] sm:$0xff] %vm240, %v447
      %480 = vst.msk [vmem:[%s249 + $0x111] sm:$0xff] %vm240, %v448
      %481 = vst.msk [vmem:[%s249 + $0x121] sm:$0xff] %vm240, %v449
      %482 = vst.msk [vmem:[%s249 + $0x129] sm:$0xff] %vm240, %v450
      %483 = vst.msk [vmem:[%s249 + $0x139] sm:$0xff] %vm240, %v451
      %484 = vst.msk [vmem:[%s249 + $0x141] sm:$0xff] %vm240, %v452
      %485 = vst.msk [vmem:[%s249 + $0x151] sm:$0xff] %vm240, %v453
      %486 = vst.msk [vmem:[%s249 + $0x159] sm:$0xff] %vm240, %v454
      %487 = vst.msk [vmem:[%s249 + $0x169] sm:$0xff] %vm240, %v455
      %488 = vst.msk [vmem:[%s249 + $0x171] sm:$0xff] %vm240, %v456
      %v489 = vld [vmem:[#allocation2] sm:$0xff]
      %v490 = vld [vmem:[#allocation2 + $0x8] sm:$0xff]
      %v491 = vld [vmem:[#allocation2 + $0x18] sm:$0xff]
      %v492 = vld [vmem:[#allocation2 + $0x20] sm:$0xff]
      %v493 = vld [vmem:[#allocation2 + $0x30] sm:$0xff]
      %v494 = vld [vmem:[#allocation2 + $0x38] sm:$0xff]
      %v495 = vld [vmem:[#allocation2 + $0x48] sm:$0xff]
      %v496 = vld [vmem:[#allocation2 + $0x50] sm:$0xff]
      %v497 = vld [vmem:[#allocation2 + $0x60] sm:$0xff]
      %v498 = vld [vmem:[#allocation2 + $0x68] sm:$0xff]
      %v499 = vld [vmem:[#allocation2 + $0x78] sm:$0xff]
      %v500 = vld [vmem:[#allocation2 + $0x80] sm:$0xff]
      %v501 = vld [vmem:[#allocation2 + $0x90] sm:$0xff]
      %v502 = vld [vmem:[#allocation2 + $0x98] sm:$0xff]
      %v503 = vld [vmem:[#allocation2 + $0xa8] sm:$0xff]
      %v504 = vld [vmem:[#allocation2 + $0xb0] sm:$0xff]
      %v505 = vld [vmem:[#allocation2 + $0xc0] sm:$0xff]
      %v506 = vld [vmem:[#allocation2 + $0xc8] sm:$0xff]
      %v507 = vld [vmem:[#allocation2 + $0xd8] sm:$0xff]
      %v508 = vld [vmem:[#allocation2 + $0xe0] sm:$0xff]
      %v509 = vld [vmem:[#allocation2 + $0xf0] sm:$0xff]
      %v510 = vld [vmem:[#allocation2 + $0xf8] sm:$0xff]
      %v511 = vld [vmem:[#allocation2 + $0x108] sm:$0xff]
      %v512 = vld [vmem:[#allocation2 + $0x110] sm:$0xff]
      %v513 = vld [vmem:[#allocation2 + $0x120] sm:$0xff]
      %v514 = vld [vmem:[#allocation2 + $0x128] sm:$0xff]
      %v515 = vld [vmem:[#allocation2 + $0x138] sm:$0xff]
      %v516 = vld [vmem:[#allocation2 + $0x140] sm:$0xff]
      %v517 = vld [vmem:[#allocation2 + $0x150] sm:$0xff]
      %v518 = vld [vmem:[#allocation2 + $0x158] sm:$0xff]
      %v519 = vld [vmem:[#allocation2 + $0x168] sm:$0xff]
      %v520 = vld [vmem:[#allocation2 + $0x170] sm:$0xff]
      %v521 = vpack.c.bf16 %v490, %v489
      %v522 = vpack.c.bf16 %v492, %v491
      %v523 = vpack.c.bf16 %v494, %v493
      %v524 = vpack.c.bf16 %v496, %v495
      %v525 = vpack.c.bf16 %v498, %v497
      %v526 = vpack.c.bf16 %v500, %v499
      %v527 = vpack.c.bf16 %v502, %v501
      %v528 = vpack.c.bf16 %v504, %v503
      %v529 = vpack.c.bf16 %v506, %v505
      %v530 = vpack.c.bf16 %v508, %v507
      %v531 = vpack.c.bf16 %v510, %v509
      %v532 = vpack.c.bf16 %v512, %v511
      %v533 = vpack.c.bf16 %v514, %v513
      %v534 = vpack.c.bf16 %v516, %v515
      %v535 = vpack.c.bf16 %v518, %v517
      %v536 = vpack.c.bf16 %v520, %v519
      %v537 = vld [vmem:[%s3] sm:$0xf]
      %v538 = vld [vmem:[%s3 + $0x4] sm:$0xf]
      %v539 = vld [vmem:[%s3 + $0x8] sm:$0xf]
      %v540 = vld [vmem:[%s3 + $0xc] sm:$0xf]
      %v541 = vld [vmem:[#allocation2 + $0x1] sm:$0xff]
      %v542 = vld [vmem:[#allocation2 + $0x9] sm:$0xff]
      %v543 = vld [vmem:[#allocation2 + $0x19] sm:$0xff]
      %v544 = vld [vmem:[#allocation2 + $0x21] sm:$0xff]
      %v545 = vld [vmem:[#allocation2 + $0x31] sm:$0xff]
      %v546 = vld [vmem:[#allocation2 + $0x39] sm:$0xff]
      %v547 = vld [vmem:[#allocation2 + $0x49] sm:$0xff]
      %v548 = vld [vmem:[#allocation2 + $0x51] sm:$0xff]
      %v549 = vld [vmem:[#allocation2 + $0x61] sm:$0xff]
      %v550 = vld [vmem:[#allocation2 + $0x69] sm:$0xff]
      %v551 = vld [vmem:[#allocation2 + $0x79] sm:$0xff]
      %v552 = vld [vmem:[#allocation2 + $0x81] sm:$0xff]
      %v553 = vld [vmem:[#allocation2 + $0x91] sm:$0xff]
      %v554 = vld [vmem:[#allocation2 + $0x99] sm:$0xff]
      %v555 = vld [vmem:[#allocation2 + $0xa9] sm:$0xff]
      %v556 = vld [vmem:[#allocation2 + $0xb1] sm:$0xff]
      %v557 = vld [vmem:[#allocation2 + $0xc1] sm:$0xff]
      %v558 = vld [vmem:[#allocation2 + $0xc9] sm:$0xff]
      %v559 = vld [vmem:[#allocation2 + $0xd9] sm:$0xff]
      %v560 = vld [vmem:[#allocation2 + $0xe1] sm:$0xff]
      %v561 = vld [vmem:[#allocation2 + $0xf1] sm:$0xff]
      %v562 = vld [vmem:[#allocation2 + $0xf9] sm:$0xff]
      %v563 = vld [vmem:[#allocation2 + $0x109] sm:$0xff]
      %v564 = vld [vmem:[#allocation2 + $0x111] sm:$0xff]
      %v565 = vld [vmem:[#allocation2 + $0x121] sm:$0xff]
      %v566 = vld [vmem:[#allocation2 + $0x129] sm:$0xff]
      %v567 = vld [vmem:[#allocation2 + $0x139] sm:$0xff]
      %v568 = vld [vmem:[#allocation2 + $0x141] sm:$0xff]
      %v569 = vld [vmem:[#allocation2 + $0x151] sm:$0xff]
      %v570 = vld [vmem:[#allocation2 + $0x159] sm:$0xff]
      %v571 = vld [vmem:[#allocation2 + $0x169] sm:$0xff]
      %v572 = vld [vmem:[#allocation2 + $0x171] sm:$0xff]
      %v573 = vpack.c.bf16 %v542, %v541
      %v574 = vpack.c.bf16 %v544, %v543
      %v575 = vpack.c.bf16 %v546, %v545
      %v576 = vpack.c.bf16 %v548, %v547
      %v577 = vpack.c.bf16 %v550, %v549
      %v578 = vpack.c.bf16 %v552, %v551
      %v579 = vpack.c.bf16 %v554, %v553
      %v580 = vpack.c.bf16 %v556, %v555
      %v581 = vpack.c.bf16 %v558, %v557
      %v582 = vpack.c.bf16 %v560, %v559
      %v583 = vpack.c.bf16 %v562, %v561
      %v584 = vpack.c.bf16 %v564, %v563
      %v585 = vpack.c.bf16 %v566, %v565
      %v586 = vpack.c.bf16 %v568, %v567
      %v587 = vpack.c.bf16 %v570, %v569
      %v588 = vpack.c.bf16 %v572, %v571
      %s589 = scalar_lea.vmem %s3, 16
      %v590 = vld [vmem:[%s589] sm:$0xf]
      %v591 = vld [vmem:[%s589 + $0x4] sm:$0xf]
      %v592 = vld [vmem:[%s589 + $0x8] sm:$0xf]
      %v593 = vld [vmem:[%s589 + $0xc] sm:$0xf]
      %v598 = vunpack.c.l.b16 %v590
      %v599 = vunpack.c.l.b16 %v591
      %v600 = vunpack.c.l.b16 %v592
      %v601 = vunpack.c.l.b16 %v593
      %v602 = vpack.c.b16 %v599, %v598
      %v603 = vpack.c.b16 %v601, %v600
      %v607 = vsel %vm240, %v573, 0
      %v610 = vsel %vm240, %v574, 0
      %v613 = vsel %vm240, %v575, 0
      %v616 = vsel %vm240, %v576, 0
      %v619 = vsel %vm240, %v577, 0
      %v622 = vsel %vm240, %v578, 0
      %v625 = vsel %vm240, %v579, 0
      %v628 = vsel %vm240, %v580, 0
      %v631 = vsel %vm240, %v581, 0
      %v634 = vsel %vm240, %v582, 0
      %v637 = vsel %vm240, %v583, 0
      %v640 = vsel %vm240, %v584, 0
      %v643 = vsel %vm240, %v585, 0
      %v646 = vsel %vm240, %v586, 0
      %v649 = vsel %vm240, %v587, 0
      %v652 = vsel %vm240, %v588, 0
      %654 = vmatprep.subr.bf16.mxu0 0
      %655 = vmatpush1.bf16.msra.mxu0 0
      %656 = vmatprep.subr.bf16.mxu0 0
      %657 = vmatpush1.bf16.msra.mxu0 0
      %658 = vmatprep.subr.bf16.mxu0 0
      %659 = vmatpush1.bf16.msra.mxu0 0
      %660 = vmatprep.subr.bf16.mxu0 0
      %661 = vmatpush1.bf16.msra.mxu0 0
      %662 = vmatprep.subr.bf16.mxu0 0
      %663 = vmatpush1.bf16.msra.mxu0 0
      %664 = vmatprep.subr.bf16.mxu0 0
      %665 = vmatpush1.bf16.msra.mxu0 0
      %666 = vmatprep.subr.bf16.mxu0 0
      %667 = vmatpush1.bf16.msra.mxu0 %v603
      %668 = vmatprep.subr.bf16.mxu0 0
      %669 = vmatpush1.bf16.msra.mxu0 %v602
      %670 = vmatprep.subr.bf16.mxu0 0
      %671 = vmatpush2.bf16.msra.mxu0 0
      %672 = vmatprep.subr.bf16.mxu0 0
      %673 = vmatpush2.bf16.msra.mxu0 0
      %674 = vmatprep.subr.bf16.mxu0 0
      %675 = vmatpush2.bf16.msra.mxu0 0
      %676 = vmatprep.subr.bf16.mxu0 0
      %677 = vmatpush2.bf16.msra.mxu0 0
      %678 = vmatprep.subr.bf16.mxu0 0
      %679 = vmatpush2.bf16.msra.mxu0 0
      %680 = vmatprep.subr.bf16.mxu0 0
      %681 = vmatpush2.bf16.msra.mxu0 0
      %682 = vmatprep.subr.bf16.mxu0 0
      %683 = vmatpush2.bf16.msra.mxu0 0
      %684 = vmatprep.subr.bf16.mxu0 0
      %685 = vmatpush2.bf16.msra.mxu0 0
      %686 = vmatprep.mubr.bf16.mxu0 0
      %687 = vmatmul.mubr.bf16.gmra.mxu0 %v607
      %v688 = vpop.f32.mrf.mxu0
      %v689 = vadd.f32 0.0, %v688
      %v690 = vpop.f32.mrf.mxu0
      %v691 = vpop.f32.mrf.mxu0
      %v692 = vadd.f32 0.0, %v691
      %v693 = vpop.f32.mrf.mxu0
      %694 = vmatprep.mubr.bf16.mxu0 0
      %695 = vmatmul.mubr.bf16.gmra.mxu0 %v610
      %v696 = vpop.f32.mrf.mxu0
      %v697 = vadd.f32 0.0, %v696
      %v698 = vpop.f32.mrf.mxu0
      %v699 = vpop.f32.mrf.mxu0
      %v700 = vadd.f32 0.0, %v699
      %v701 = vpop.f32.mrf.mxu0
      %702 = vmatprep.mubr.bf16.mxu0 0
      %703 = vmatmul.mubr.bf16.gmra.mxu0 %v613
      %v704 = vpop.f32.mrf.mxu0
      %v705 = vadd.f32 0.0, %v704
      %v706 = vpop.f32.mrf.mxu0
      %v707 = vpop.f32.mrf.mxu0
      %v708 = vadd.f32 0.0, %v707
      %v709 = vpop.f32.mrf.mxu0
      %710 = vmatprep.mubr.bf16.mxu0 0
      %711 = vmatmul.mubr.bf16.gmra.mxu0 %v616
      %v712 = vpop.f32.mrf.mxu0
      %v713 = vadd.f32 0.0, %v712
      %v714 = vpop.f32.mrf.mxu0
      %v715 = vpop.f32.mrf.mxu0
      %v716 = vadd.f32 0.0, %v715
      %v717 = vpop.f32.mrf.mxu0
      %718 = vmatprep.mubr.bf16.mxu0 0
      %719 = vmatmul.mubr.bf16.gmra.mxu0 %v619
      %v720 = vpop.f32.mrf.mxu0
      %v721 = vadd.f32 0.0, %v720
      %v722 = vpop.f32.mrf.mxu0
      %v723 = vpop.f32.mrf.mxu0
      %v724 = vadd.f32 0.0, %v723
      %v725 = vpop.f32.mrf.mxu0
      %726 = vmatprep.mubr.bf16.mxu0 0
      %727 = vmatmul.mubr.bf16.gmra.mxu0 %v622
      %v728 = vpop.f32.mrf.mxu0
      %v729 = vadd.f32 0.0, %v728
      %v730 = vpop.f32.mrf.mxu0
      %v731 = vpop.f32.mrf.mxu0
      %v732 = vadd.f32 0.0, %v731
      %v733 = vpop.f32.mrf.mxu0
      %734 = vmatprep.mubr.bf16.mxu0 0
      %735 = vmatmul.mubr.bf16.gmra.mxu0 %v625
      %v736 = vpop.f32.mrf.mxu0
      %v737 = vadd.f32 0.0, %v736
      %v738 = vpop.f32.mrf.mxu0
      %v739 = vpop.f32.mrf.mxu0
      %v740 = vadd.f32 0.0, %v739
      %v741 = vpop.f32.mrf.mxu0
      %742 = vmatprep.mubr.bf16.mxu0 0
      %743 = vmatmul.mubr.bf16.gmra.mxu0 %v628
      %v744 = vpop.f32.mrf.mxu0
      %v745 = vadd.f32 0.0, %v744
      %v746 = vpop.f32.mrf.mxu0
      %v747 = vpop.f32.mrf.mxu0
      %v748 = vadd.f32 0.0, %v747
      %v749 = vpop.f32.mrf.mxu0
      %750 = vmatprep.mubr.bf16.mxu0 0
      %751 = vmatmul.mubr.bf16.gmra.mxu0 %v631
      %v752 = vpop.f32.mrf.mxu0
      %v753 = vadd.f32 0.0, %v752
      %v754 = vpop.f32.mrf.mxu0
      %v755 = vpop.f32.mrf.mxu0
      %v756 = vadd.f32 0.0, %v755
      %v757 = vpop.f32.mrf.mxu0
      %758 = vmatprep.mubr.bf16.mxu0 0
      %759 = vmatmul.mubr.bf16.gmra.mxu0 %v634
      %v760 = vpop.f32.mrf.mxu0
      %v761 = vadd.f32 0.0, %v760
      %v762 = vpop.f32.mrf.mxu0
      %v763 = vpop.f32.mrf.mxu0
      %v764 = vadd.f32 0.0, %v763
      %v765 = vpop.f32.mrf.mxu0
      %766 = vmatprep.mubr.bf16.mxu0 0
      %767 = vmatmul.mubr.bf16.gmra.mxu0 %v637
      %v768 = vpop.f32.mrf.mxu0
      %v769 = vadd.f32 0.0, %v768
      %v770 = vpop.f32.mrf.mxu0
      %v771 = vpop.f32.mrf.mxu0
      %v772 = vadd.f32 0.0, %v771
      %v773 = vpop.f32.mrf.mxu0
      %774 = vmatprep.mubr.bf16.mxu0 0
      %775 = vmatmul.mubr.bf16.gmra.mxu0 %v640
      %v776 = vpop.f32.mrf.mxu0
      %v777 = vadd.f32 0.0, %v776
      %v778 = vpop.f32.mrf.mxu0
      %v779 = vpop.f32.mrf.mxu0
      %v780 = vadd.f32 0.0, %v779
      %v781 = vpop.f32.mrf.mxu0
      %782 = vmatprep.mubr.bf16.mxu0 0
      %783 = vmatmul.mubr.bf16.gmra.mxu0 %v643
      %v784 = vpop.f32.mrf.mxu0
      %v785 = vadd.f32 0.0, %v784
      %v786 = vpop.f32.mrf.mxu0
      %v787 = vpop.f32.mrf.mxu0
      %v788 = vadd.f32 0.0, %v787
      %v789 = vpop.f32.mrf.mxu0
      %790 = vmatprep.mubr.bf16.mxu0 0
      %791 = vmatmul.mubr.bf16.gmra.mxu0 %v646
      %v792 = vpop.f32.mrf.mxu0
      %v793 = vadd.f32 0.0, %v792
      %v794 = vpop.f32.mrf.mxu0
      %v795 = vpop.f32.mrf.mxu0
      %v796 = vadd.f32 0.0, %v795
      %v797 = vpop.f32.mrf.mxu0
      %798 = vmatprep.mubr.bf16.mxu0 0
      %799 = vmatmul.mubr.bf16.gmra.mxu0 %v649
      %v800 = vpop.f32.mrf.mxu0
      %v801 = vadd.f32 0.0, %v800
      %v802 = vpop.f32.mrf.mxu0
      %v803 = vpop.f32.mrf.mxu0
      %v804 = vadd.f32 0.0, %v803
      %v805 = vpop.f32.mrf.mxu0
      %806 = vmatprep.mubr.bf16.mxu0 0
      %807 = vmatmul.mubr.bf16.gmra.mxu0 %v652
      %v808 = vpop.f32.mrf.mxu0
      %v809 = vadd.f32 0.0, %v808
      %v810 = vpop.f32.mrf.mxu0
      %v811 = vpop.f32.mrf.mxu0
      %v812 = vadd.f32 0.0, %v811
      %v813 = vpop.f32.mrf.mxu0
      %814 = vdwg.mxu0
      %v819 = vunpack.c.l.b16 %v537
      %v820 = vunpack.c.l.b16 %v538
      %v821 = vunpack.c.l.b16 %v539
      %v822 = vunpack.c.l.b16 %v540
      %v823 = vpack.c.b16 %v820, %v819
      %v824 = vpack.c.b16 %v822, %v821
      %v828 = vsel %vm240, %v521, 0
      %v831 = vsel %vm240, %v522, 0
      %v834 = vsel %vm240, %v523, 0
      %v837 = vsel %vm240, %v524, 0
      %v840 = vsel %vm240, %v525, 0
      %v843 = vsel %vm240, %v526, 0
      %v846 = vsel %vm240, %v527, 0
      %v849 = vsel %vm240, %v528, 0
      %v852 = vsel %vm240, %v529, 0
      %v855 = vsel %vm240, %v530, 0
      %v858 = vsel %vm240, %v531, 0
      %v861 = vsel %vm240, %v532, 0
      %v864 = vsel %vm240, %v533, 0
      %v867 = vsel %vm240, %v534, 0
      %v870 = vsel %vm240, %v535, 0
      %v873 = vsel %vm240, %v536, 0
      %875 = vmatprep.subr.bf16.mxu0 0
      %876 = vmatpush1.bf16.msra.mxu0 0
      %877 = vmatprep.subr.bf16.mxu0 0
      %878 = vmatpush1.bf16.msra.mxu0 0
      %879 = vmatprep.subr.bf16.mxu0 0
      %880 = vmatpush1.bf16.msra.mxu0 0
      %881 = vmatprep.subr.bf16.mxu0 0
      %882 = vmatpush1.bf16.msra.mxu0 0
      %883 = vmatprep.subr.bf16.mxu0 0
      %884 = vmatpush1.bf16.msra.mxu0 0
      %885 = vmatprep.subr.bf16.mxu0 0
      %886 = vmatpush1.bf16.msra.mxu0 0
      %887 = vmatprep.subr.bf16.mxu0 0
      %888 = vmatpush1.bf16.msra.mxu0 %v824
      %889 = vmatprep.subr.bf16.mxu0 0
      %890 = vmatpush1.bf16.msra.mxu0 %v823
      %891 = vmatprep.subr.bf16.mxu0 0
      %892 = vmatpush2.bf16.msra.mxu0 0
      %893 = vmatprep.subr.bf16.mxu0 0
      %894 = vmatpush2.bf16.msra.mxu0 0
      %895 = vmatprep.subr.bf16.mxu0 0
      %896 = vmatpush2.bf16.msra.mxu0 0
      %897 = vmatprep.subr.bf16.mxu0 0
      %898 = vmatpush2.bf16.msra.mxu0 0
      %899 = vmatprep.subr.bf16.mxu0 0
      %900 = vmatpush2.bf16.msra.mxu0 0
      %901 = vmatprep.subr.bf16.mxu0 0
      %902 = vmatpush2.bf16.msra.mxu0 0
      %903 = vmatprep.subr.bf16.mxu0 0
      %904 = vmatpush2.bf16.msra.mxu0 0
      %905 = vmatprep.subr.bf16.mxu0 0
      %906 = vmatpush2.bf16.msra.mxu0 0
      %907 = vmatprep.mubr.bf16.mxu0 0
      %908 = vmatmul.mubr.bf16.gmra.mxu0 %v828
      %v909 = vpop.f32.mrf.mxu0
      %v910 = vadd.f32 %v689, %v909
      %v911 = vpop.f32.mrf.mxu0
      %v912 = vpop.f32.mrf.mxu0
      %v913 = vadd.f32 %v692, %v912
      %v914 = vpop.f32.mrf.mxu0
      %915 = vmatprep.mubr.bf16.mxu0 0
      %916 = vmatmul.mubr.bf16.gmra.mxu0 %v831
      %v917 = vpop.f32.mrf.mxu0
      %v918 = vadd.f32 %v697, %v917
      %v919 = vpop.f32.mrf.mxu0
      %v920 = vpop.f32.mrf.mxu0
      %v921 = vadd.f32 %v700, %v920
      %v922 = vpop.f32.mrf.mxu0
      %923 = vmatprep.mubr.bf16.mxu0 0
      %924 = vmatmul.mubr.bf16.gmra.mxu0 %v834
      %v925 = vpop.f32.mrf.mxu0
      %v926 = vadd.f32 %v705, %v925
      %v927 = vpop.f32.mrf.mxu0
      %v928 = vpop.f32.mrf.mxu0
      %v929 = vadd.f32 %v708, %v928
      %v930 = vpop.f32.mrf.mxu0
      %931 = vmatprep.mubr.bf16.mxu0 0
      %932 = vmatmul.mubr.bf16.gmra.mxu0 %v837
      %v933 = vpop.f32.mrf.mxu0
      %v934 = vadd.f32 %v713, %v933
      %v935 = vpop.f32.mrf.mxu0
      %v936 = vpop.f32.mrf.mxu0
      %v937 = vadd.f32 %v716, %v936
      %v938 = vpop.f32.mrf.mxu0
      %939 = vmatprep.mubr.bf16.mxu0 0
      %940 = vmatmul.mubr.bf16.gmra.mxu0 %v840
      %v941 = vpop.f32.mrf.mxu0
      %v942 = vadd.f32 %v721, %v941
      %v943 = vpop.f32.mrf.mxu0
      %v944 = vpop.f32.mrf.mxu0
      %v945 = vadd.f32 %v724, %v944
      %v946 = vpop.f32.mrf.mxu0
      %947 = vmatprep.mubr.bf16.mxu0 0
      %948 = vmatmul.mubr.bf16.gmra.mxu0 %v843
      %v949 = vpop.f32.mrf.mxu0
      %v950 = vadd.f32 %v729, %v949
      %v951 = vpop.f32.mrf.mxu0
      %v952 = vpop.f32.mrf.mxu0
      %v953 = vadd.f32 %v732, %v952
      %v954 = vpop.f32.mrf.mxu0
      %955 = vmatprep.mubr.bf16.mxu0 0
      %956 = vmatmul.mubr.bf16.gmra.mxu0 %v846
      %v957 = vpop.f32.mrf.mxu0
      %v958 = vadd.f32 %v737, %v957
      %v959 = vpop.f32.mrf.mxu0
      %v960 = vpop.f32.mrf.mxu0
      %v961 = vadd.f32 %v740, %v960
      %v962 = vpop.f32.mrf.mxu0
      %963 = vmatprep.mubr.bf16.mxu0 0
      %964 = vmatmul.mubr.bf16.gmra.mxu0 %v849
      %v965 = vpop.f32.mrf.mxu0
      %v966 = vadd.f32 %v745, %v965
      %v967 = vpop.f32.mrf.mxu0
      %v968 = vpop.f32.mrf.mxu0
      %v969 = vadd.f32 %v748, %v968
      %v970 = vpop.f32.mrf.mxu0
      %971 = vmatprep.mubr.bf16.mxu0 0
      %972 = vmatmul.mubr.bf16.gmra.mxu0 %v852
      %v973 = vpop.f32.mrf.mxu0
      %v974 = vadd.f32 %v753, %v973
      %v975 = vpop.f32.mrf.mxu0
      %v976 = vpop.f32.mrf.mxu0
      %v977 = vadd.f32 %v756, %v976
      %v978 = vpop.f32.mrf.mxu0
      %979 = vmatprep.mubr.bf16.mxu0 0
      %980 = vmatmul.mubr.bf16.gmra.mxu0 %v855
      %v981 = vpop.f32.mrf.mxu0
      %v982 = vadd.f32 %v761, %v981
      %v983 = vpop.f32.mrf.mxu0
      %v984 = vpop.f32.mrf.mxu0
      %v985 = vadd.f32 %v764, %v984
      %v986 = vpop.f32.mrf.mxu0
      %987 = vmatprep.mubr.bf16.mxu0 0
      %988 = vmatmul.mubr.bf16.gmra.mxu0 %v858
      %v989 = vpop.f32.mrf.mxu0
      %v990 = vadd.f32 %v769, %v989
      %v991 = vpop.f32.mrf.mxu0
      %v992 = vpop.f32.mrf.mxu0
      %v993 = vadd.f32 %v772, %v992
      %v994 = vpop.f32.mrf.mxu0
      %995 = vmatprep.mubr.bf16.mxu0 0
      %996 = vmatmul.mubr.bf16.gmra.mxu0 %v861
      %v997 = vpop.f32.mrf.mxu0
      %v998 = vadd.f32 %v777, %v997
      %v999 = vpop.f32.mrf.mxu0
      %v1000 = vpop.f32.mrf.mxu0
      %v1001 = vadd.f32 %v780, %v1000
      %v1002 = vpop.f32.mrf.mxu0
      %1003 = vmatprep.mubr.bf16.mxu0 0
      %1004 = vmatmul.mubr.bf16.gmra.mxu0 %v864
      %v1005 = vpop.f32.mrf.mxu0
      %v1006 = vadd.f32 %v785, %v1005
      %v1007 = vpop.f32.mrf.mxu0
      %v1008 = vpop.f32.mrf.mxu0
      %v1009 = vadd.f32 %v788, %v1008
      %v1010 = vpop.f32.mrf.mxu0
      %1011 = vmatprep.mubr.bf16.mxu0 0
      %1012 = vmatmul.mubr.bf16.gmra.mxu0 %v867
      %v1013 = vpop.f32.mrf.mxu0
      %v1014 = vadd.f32 %v793, %v1013
      %v1015 = vpop.f32.mrf.mxu0
      %v1016 = vpop.f32.mrf.mxu0
      %v1017 = vadd.f32 %v796, %v1016
      %v1018 = vpop.f32.mrf.mxu0
      %1019 = vmatprep.mubr.bf16.mxu0 0
      %1020 = vmatmul.mubr.bf16.gmra.mxu0 %v870
      %v1021 = vpop.f32.mrf.mxu0
      %v1022 = vadd.f32 %v801, %v1021
      %v1023 = vpop.f32.mrf.mxu0
      %v1024 = vpop.f32.mrf.mxu0
      %v1025 = vadd.f32 %v804, %v1024
      %v1026 = vpop.f32.mrf.mxu0
      %1027 = vmatprep.mubr.bf16.mxu0 0
      %1028 = vmatmul.mubr.bf16.gmra.mxu0 %v873
      %v1029 = vpop.f32.mrf.mxu0
      %v1030 = vadd.f32 %v809, %v1029
      %v1031 = vpop.f32.mrf.mxu0
      %v1032 = vpop.f32.mrf.mxu0
      %v1033 = vadd.f32 %v812, %v1032
      %v1034 = vpop.f32.mrf.mxu0
      %1035 = vdwg.mxu0
      %v1036 = vld [vmem:[#allocation2 + $0x2] sm:$0xff]
      %v1037 = vld [vmem:[#allocation2 + $0xa] sm:$0xff]
      %v1038 = vld [vmem:[#allocation2 + $0x1a] sm:$0xff]
      %v1039 = vld [vmem:[#allocation2 + $0x22] sm:$0xff]
      %v1040 = vld [vmem:[#allocation2 + $0x32] sm:$0xff]
      %v1041 = vld [vmem:[#allocation2 + $0x3a] sm:$0xff]
      %v1042 = vld [vmem:[#allocation2 + $0x4a] sm:$0xff]
      %v1043 = vld [vmem:[#allocation2 + $0x52] sm:$0xff]
      %v1044 = vld [vmem:[#allocation2 + $0x62] sm:$0xff]
      %v1045 = vld [vmem:[#allocation2 + $0x6a] sm:$0xff]
      %v1046 = vld [vmem:[#allocation2 + $0x7a] sm:$0xff]
      %v1047 = vld [vmem:[#allocation2 + $0x82] sm:$0xff]
      %v1048 = vld [vmem:[#allocation2 + $0x92] sm:$0xff]
      %v1049 = vld [vmem:[#allocation2 + $0x9a] sm:$0xff]
      %v1050 = vld [vmem:[#allocation2 + $0xaa] sm:$0xff]
      %v1051 = vld [vmem:[#allocation2 + $0xb2] sm:$0xff]
      %v1052 = vld [vmem:[#allocation2 + $0xc2] sm:$0xff]
      %v1053 = vld [vmem:[#allocation2 + $0xca] sm:$0xff]
      %v1054 = vld [vmem:[#allocation2 + $0xda] sm:$0xff]
      %v1055 = vld [vmem:[#allocation2 + $0xe2] sm:$0xff]
      %v1056 = vld [vmem:[#allocation2 + $0xf2] sm:$0xff]
      %v1057 = vld [vmem:[#allocation2 + $0xfa] sm:$0xff]
      %v1058 = vld [vmem:[#allocation2 + $0x10a] sm:$0xff]
      %v1059 = vld [vmem:[#allocation2 + $0x112] sm:$0xff]
      %v1060 = vld [vmem:[#allocation2 + $0x122] sm:$0xff]
      %v1061 = vld [vmem:[#allocation2 + $0x12a] sm:$0xff]
      %v1062 = vld [vmem:[#allocation2 + $0x13a] sm:$0xff]
      %v1063 = vld [vmem:[#allocation2 + $0x142] sm:$0xff]
      %v1064 = vld [vmem:[#allocation2 + $0x152] sm:$0xff]
      %v1065 = vld [vmem:[#allocation2 + $0x15a] sm:$0xff]
      %v1066 = vld [vmem:[#allocation2 + $0x16a] sm:$0xff]
      %v1067 = vld [vmem:[#allocation2 + $0x172] sm:$0xff]
      %v1068 = vpack.c.bf16 %v1037, %v1036
      %v1069 = vpack.c.bf16 %v1039, %v1038
      %v1070 = vpack.c.bf16 %v1041, %v1040
      %v1071 = vpack.c.bf16 %v1043, %v1042
      %v1072 = vpack.c.bf16 %v1045, %v1044
      %v1073 = vpack.c.bf16 %v1047, %v1046
      %v1074 = vpack.c.bf16 %v1049, %v1048
      %v1075 = vpack.c.bf16 %v1051, %v1050
      %v1076 = vpack.c.bf16 %v1053, %v1052
      %v1077 = vpack.c.bf16 %v1055, %v1054
      %v1078 = vpack.c.bf16 %v1057, %v1056
      %v1079 = vpack.c.bf16 %v1059, %v1058
      %v1080 = vpack.c.bf16 %v1061, %v1060
      %v1081 = vpack.c.bf16 %v1063, %v1062
      %v1082 = vpack.c.bf16 %v1065, %v1064
      %v1083 = vpack.c.bf16 %v1067, %v1066
      %s1084 = scalar_lea.vmem %s3, 32
      %v1085 = vld [vmem:[%s1084] sm:$0xf]
      %v1086 = vld [vmem:[%s1084 + $0x4] sm:$0xf]
      %v1087 = vld [vmem:[%s1084 + $0x8] sm:$0xf]
      %v1088 = vld [vmem:[%s1084 + $0xc] sm:$0xf]
      %v1093 = vunpack.c.l.b16 %v1085
      %v1094 = vunpack.c.l.b16 %v1086
      %v1095 = vunpack.c.l.b16 %v1087
      %v1096 = vunpack.c.l.b16 %v1088
      %v1097 = vpack.c.b16 %v1094, %v1093
      %v1098 = vpack.c.b16 %v1096, %v1095
      %v1102 = vsel %vm240, %v1068, 0
      %v1105 = vsel %vm240, %v1069, 0
      %v1108 = vsel %vm240, %v1070, 0
      %v1111 = vsel %vm240, %v1071, 0
      %v1114 = vsel %vm240, %v1072, 0
      %v1117 = vsel %vm240, %v1073, 0
      %v1120 = vsel %vm240, %v1074, 0
      %v1123 = vsel %vm240, %v1075, 0
      %v1126 = vsel %vm240, %v1076, 0
      %v1129 = vsel %vm240, %v1077, 0
      %v1132 = vsel %vm240, %v1078, 0
      %v1135 = vsel %vm240, %v1079, 0
      %v1138 = vsel %vm240, %v1080, 0
      %v1141 = vsel %vm240, %v1081, 0
      %v1144 = vsel %vm240, %v1082, 0
      %v1147 = vsel %vm240, %v1083, 0
      %1149 = vmatprep.subr.bf16.mxu0 0
      %1150 = vmatpush1.bf16.msra.mxu0 0
      %1151 = vmatprep.subr.bf16.mxu0 0
      %1152 = vmatpush1.bf16.msra.mxu0 0
      %1153 = vmatprep.subr.bf16.mxu0 0
      %1154 = vmatpush1.bf16.msra.mxu0 0
      %1155 = vmatprep.subr.bf16.mxu0 0
      %1156 = vmatpush1.bf16.msra.mxu0 0
      %1157 = vmatprep.subr.bf16.mxu0 0
      %1158 = vmatpush1.bf16.msra.mxu0 0
      %1159 = vmatprep.subr.bf16.mxu0 0
      %1160 = vmatpush1.bf16.msra.mxu0 0
      %1161 = vmatprep.subr.bf16.mxu0 0
      %1162 = vmatpush1.bf16.msra.mxu0 %v1098
      %1163 = vmatprep.subr.bf16.mxu0 0
      %1164 = vmatpush1.bf16.msra.mxu0 %v1097
      %1165 = vmatprep.subr.bf16.mxu0 0
      %1166 = vmatpush2.bf16.msra.mxu0 0
      %1167 = vmatprep.subr.bf16.mxu0 0
      %1168 = vmatpush2.bf16.msra.mxu0 0
      %1169 = vmatprep.subr.bf16.mxu0 0
      %1170 = vmatpush2.bf16.msra.mxu0 0
      %1171 = vmatprep.subr.bf16.mxu0 0
      %1172 = vmatpush2.bf16.msra.mxu0 0
      %1173 = vmatprep.subr.bf16.mxu0 0
      %1174 = vmatpush2.bf16.msra.mxu0 0
      %1175 = vmatprep.subr.bf16.mxu0 0
      %1176 = vmatpush2.bf16.msra.mxu0 0
      %1177 = vmatprep.subr.bf16.mxu0 0
      %1178 = vmatpush2.bf16.msra.mxu0 0
      %1179 = vmatprep.subr.bf16.mxu0 0
      %1180 = vmatpush2.bf16.msra.mxu0 0
      %1181 = vmatprep.mubr.bf16.mxu0 0
      %1182 = vmatmul.mubr.bf16.gmra.mxu0 %v1102
      %v1183 = vpop.f32.mrf.mxu0
      %v1184 = vadd.f32 0.0, %v1183
      %v1185 = vpop.f32.mrf.mxu0
      %v1186 = vpop.f32.mrf.mxu0
      %v1187 = vadd.f32 0.0, %v1186
      %v1188 = vpop.f32.mrf.mxu0
      %1189 = vmatprep.mubr.bf16.mxu0 0
      %1190 = vmatmul.mubr.bf16.gmra.mxu0 %v1105
      %v1191 = vpop.f32.mrf.mxu0
      %v1192 = vadd.f32 0.0, %v1191
      %v1193 = vpop.f32.mrf.mxu0
      %v1194 = vpop.f32.mrf.mxu0
      %v1195 = vadd.f32 0.0, %v1194
      %v1196 = vpop.f32.mrf.mxu0
      %1197 = vmatprep.mubr.bf16.mxu0 0
      %1198 = vmatmul.mubr.bf16.gmra.mxu0 %v1108
      %v1199 = vpop.f32.mrf.mxu0
      %v1200 = vadd.f32 0.0, %v1199
      %v1201 = vpop.f32.mrf.mxu0
      %v1202 = vpop.f32.mrf.mxu0
      %v1203 = vadd.f32 0.0, %v1202
      %v1204 = vpop.f32.mrf.mxu0
      %1205 = vmatprep.mubr.bf16.mxu0 0
      %1206 = vmatmul.mubr.bf16.gmra.mxu0 %v1111
      %v1207 = vpop.f32.mrf.mxu0
      %v1208 = vadd.f32 0.0, %v1207
      %v1209 = vpop.f32.mrf.mxu0
      %v1210 = vpop.f32.mrf.mxu0
      %v1211 = vadd.f32 0.0, %v1210
      %v1212 = vpop.f32.mrf.mxu0
      %1213 = vmatprep.mubr.bf16.mxu0 0
      %1214 = vmatmul.mubr.bf16.gmra.mxu0 %v1114
      %v1215 = vpop.f32.mrf.mxu0
      %v1216 = vadd.f32 0.0, %v1215
      %v1217 = vpop.f32.mrf.mxu0
      %v1218 = vpop.f32.mrf.mxu0
      %v1219 = vadd.f32 0.0, %v1218
      %v1220 = vpop.f32.mrf.mxu0
      %1221 = vmatprep.mubr.bf16.mxu0 0
      %1222 = vmatmul.mubr.bf16.gmra.mxu0 %v1117
      %v1223 = vpop.f32.mrf.mxu0
      %v1224 = vadd.f32 0.0, %v1223
      %v1225 = vpop.f32.mrf.mxu0
      %v1226 = vpop.f32.mrf.mxu0
      %v1227 = vadd.f32 0.0, %v1226
      %v1228 = vpop.f32.mrf.mxu0
      %1229 = vmatprep.mubr.bf16.mxu0 0
      %1230 = vmatmul.mubr.bf16.gmra.mxu0 %v1120
      %v1231 = vpop.f32.mrf.mxu0
      %v1232 = vadd.f32 0.0, %v1231
      %v1233 = vpop.f32.mrf.mxu0
      %v1234 = vpop.f32.mrf.mxu0
      %v1235 = vadd.f32 0.0, %v1234
      %v1236 = vpop.f32.mrf.mxu0
      %1237 = vmatprep.mubr.bf16.mxu0 0
      %1238 = vmatmul.mubr.bf16.gmra.mxu0 %v1123
      %v1239 = vpop.f32.mrf.mxu0
      %v1240 = vadd.f32 0.0, %v1239
      %v1241 = vpop.f32.mrf.mxu0
      %v1242 = vpop.f32.mrf.mxu0
      %v1243 = vadd.f32 0.0, %v1242
      %v1244 = vpop.f32.mrf.mxu0
      %1245 = vmatprep.mubr.bf16.mxu0 0
      %1246 = vmatmul.mubr.bf16.gmra.mxu0 %v1126
      %v1247 = vpop.f32.mrf.mxu0
      %v1248 = vadd.f32 0.0, %v1247
      %v1249 = vpop.f32.mrf.mxu0
      %v1250 = vpop.f32.mrf.mxu0
      %v1251 = vadd.f32 0.0, %v1250
      %v1252 = vpop.f32.mrf.mxu0
      %1253 = vmatprep.mubr.bf16.mxu0 0
      %1254 = vmatmul.mubr.bf16.gmra.mxu0 %v1129
      %v1255 = vpop.f32.mrf.mxu0
      %v1256 = vadd.f32 0.0, %v1255
      %v1257 = vpop.f32.mrf.mxu0
      %v1258 = vpop.f32.mrf.mxu0
      %v1259 = vadd.f32 0.0, %v1258
      %v1260 = vpop.f32.mrf.mxu0
      %1261 = vmatprep.mubr.bf16.mxu0 0
      %1262 = vmatmul.mubr.bf16.gmra.mxu0 %v1132
      %v1263 = vpop.f32.mrf.mxu0
      %v1264 = vadd.f32 0.0, %v1263
      %v1265 = vpop.f32.mrf.mxu0
      %v1266 = vpop.f32.mrf.mxu0
      %v1267 = vadd.f32 0.0, %v1266
      %v1268 = vpop.f32.mrf.mxu0
      %1269 = vmatprep.mubr.bf16.mxu0 0
      %1270 = vmatmul.mubr.bf16.gmra.mxu0 %v1135
      %v1271 = vpop.f32.mrf.mxu0
      %v1272 = vadd.f32 0.0, %v1271
      %v1273 = vpop.f32.mrf.mxu0
      %v1274 = vpop.f32.mrf.mxu0
      %v1275 = vadd.f32 0.0, %v1274
      %v1276 = vpop.f32.mrf.mxu0
      %1277 = vmatprep.mubr.bf16.mxu0 0
      %1278 = vmatmul.mubr.bf16.gmra.mxu0 %v1138
      %v1279 = vpop.f32.mrf.mxu0
      %v1280 = vadd.f32 0.0, %v1279
      %v1281 = vpop.f32.mrf.mxu0
      %v1282 = vpop.f32.mrf.mxu0
      %v1283 = vadd.f32 0.0, %v1282
      %v1284 = vpop.f32.mrf.mxu0
      %1285 = vmatprep.mubr.bf16.mxu0 0
      %1286 = vmatmul.mubr.bf16.gmra.mxu0 %v1141
      %v1287 = vpop.f32.mrf.mxu0
      %v1288 = vadd.f32 0.0, %v1287
      %v1289 = vpop.f32.mrf.mxu0
      %v1290 = vpop.f32.mrf.mxu0
      %v1291 = vadd.f32 0.0, %v1290
      %v1292 = vpop.f32.mrf.mxu0
      %1293 = vmatprep.mubr.bf16.mxu0 0
      %1294 = vmatmul.mubr.bf16.gmra.mxu0 %v1144
      %v1295 = vpop.f32.mrf.mxu0
      %v1296 = vadd.f32 0.0, %v1295
      %v1297 = vpop.f32.mrf.mxu0
      %v1298 = vpop.f32.mrf.mxu0
      %v1299 = vadd.f32 0.0, %v1298
      %v1300 = vpop.f32.mrf.mxu0
      %1301 = vmatprep.mubr.bf16.mxu0 0
      %1302 = vmatmul.mubr.bf16.gmra.mxu0 %v1147
      %v1303 = vpop.f32.mrf.mxu0
      %v1304 = vadd.f32 0.0, %v1303
      %v1305 = vpop.f32.mrf.mxu0
      %v1306 = vpop.f32.mrf.mxu0
      %v1307 = vadd.f32 0.0, %v1306
      %v1308 = vpop.f32.mrf.mxu0
      %1309 = vdwg.mxu0
      %v1310 = vadd.f32 %v910, %v1184
      %v1311 = vadd.f32 %v913, %v1187
      %v1312 = vadd.f32 %v918, %v1192
      %v1313 = vadd.f32 %v921, %v1195
      %v1314 = vadd.f32 %v926, %v1200
      %v1315 = vadd.f32 %v929, %v1203
      %v1316 = vadd.f32 %v934, %v1208
      %v1317 = vadd.f32 %v937, %v1211
      %v1318 = vadd.f32 %v942, %v1216
      %v1319 = vadd.f32 %v945, %v1219
      %v1320 = vadd.f32 %v950, %v1224
      %v1321 = vadd.f32 %v953, %v1227
      %v1322 = vadd.f32 %v958, %v1232
      %v1323 = vadd.f32 %v961, %v1235
      %v1324 = vadd.f32 %v966, %v1240
      %v1325 = vadd.f32 %v969, %v1243
      %v1326 = vadd.f32 %v974, %v1248
      %v1327 = vadd.f32 %v977, %v1251
      %v1328 = vadd.f32 %v982, %v1256
      %v1329 = vadd.f32 %v985, %v1259
      %v1330 = vadd.f32 %v990, %v1264
      %v1331 = vadd.f32 %v993, %v1267
      %v1332 = vadd.f32 %v998, %v1272
      %v1333 = vadd.f32 %v1001, %v1275
      %v1334 = vadd.f32 %v1006, %v1280
      %v1335 = vadd.f32 %v1009, %v1283
      %v1336 = vadd.f32 %v1014, %v1288
      %v1337 = vadd.f32 %v1017, %v1291
      %v1338 = vadd.f32 %v1022, %v1296
      %v1339 = vadd.f32 %v1025, %v1299
      %v1340 = vadd.f32 %v1030, %v1304
      %v1341 = vadd.f32 %v1033, %v1307
      %v1342 = vld [vmem:[%s249] sm:$0xff]
      %v1343 = vld [vmem:[%s249 + $0x8] sm:$0xff]
      %v1344 = vld [vmem:[%s249 + $0x18] sm:$0xff]
      %v1345 = vld [vmem:[%s249 + $0x20] sm:$0xff]
      %v1346 = vld [vmem:[%s249 + $0x30] sm:$0xff]
      %v1347 = vld [vmem:[%s249 + $0x38] sm:$0xff]
      %v1348 = vld [vmem:[%s249 + $0x48] sm:$0xff]
      %v1349 = vld [vmem:[%s249 + $0x50] sm:$0xff]
      %v1350 = vld [vmem:[%s249 + $0x60] sm:$0xff]
      %v1351 = vld [vmem:[%s249 + $0x68] sm:$0xff]
      %v1352 = vld [vmem:[%s249 + $0x78] sm:$0xff]
      %v1353 = vld [vmem:[%s249 + $0x80] sm:$0xff]
      %v1354 = vld [vmem:[%s249 + $0x90] sm:$0xff]
      %v1355 = vld [vmem:[%s249 + $0x98] sm:$0xff]
      %v1356 = vld [vmem:[%s249 + $0xa8] sm:$0xff]
      %v1357 = vld [vmem:[%s249 + $0xb0] sm:$0xff]
      %v1358 = vld [vmem:[%s249 + $0xc0] sm:$0xff]
      %v1359 = vld [vmem:[%s249 + $0xc8] sm:$0xff]
      %v1360 = vld [vmem:[%s249 + $0xd8] sm:$0xff]
      %v1361 = vld [vmem:[%s249 + $0xe0] sm:$0xff]
      %v1362 = vld [vmem:[%s249 + $0xf0] sm:$0xff]
      %v1363 = vld [vmem:[%s249 + $0xf8] sm:$0xff]
      %v1364 = vld [vmem:[%s249 + $0x108] sm:$0xff]
      %v1365 = vld [vmem:[%s249 + $0x110] sm:$0xff]
      %v1366 = vld [vmem:[%s249 + $0x120] sm:$0xff]
      %v1367 = vld [vmem:[%s249 + $0x128] sm:$0xff]
      %v1368 = vld [vmem:[%s249 + $0x138] sm:$0xff]
      %v1369 = vld [vmem:[%s249 + $0x140] sm:$0xff]
      %v1370 = vld [vmem:[%s249 + $0x150] sm:$0xff]
      %v1371 = vld [vmem:[%s249 + $0x158] sm:$0xff]
      %v1372 = vld [vmem:[%s249 + $0x168] sm:$0xff]
      %v1373 = vld [vmem:[%s249 + $0x170] sm:$0xff]
      %v1374 = vpack.c.bf16 %v1343, %v1342
      %v1375 = vpack.c.bf16 %v1345, %v1344
      %v1376 = vpack.c.bf16 %v1347, %v1346
      %v1377 = vpack.c.bf16 %v1349, %v1348
      %v1378 = vpack.c.bf16 %v1351, %v1350
      %v1379 = vpack.c.bf16 %v1353, %v1352
      %v1380 = vpack.c.bf16 %v1355, %v1354
      %v1381 = vpack.c.bf16 %v1357, %v1356
      %v1382 = vpack.c.bf16 %v1359, %v1358
      %v1383 = vpack.c.bf16 %v1361, %v1360
      %v1384 = vpack.c.bf16 %v1363, %v1362
      %v1385 = vpack.c.bf16 %v1365, %v1364
      %v1386 = vpack.c.bf16 %v1367, %v1366
      %v1387 = vpack.c.bf16 %v1369, %v1368
      %v1388 = vpack.c.bf16 %v1371, %v1370
      %v1389 = vpack.c.bf16 %v1373, %v1372
      %s1390 = scalar_lea.vmem %s3, 48
      %v1391 = vld [vmem:[%s1390] sm:$0xf]
      %v1392 = vld [vmem:[%s1390 + $0x4] sm:$0xf]
      %v1393 = vld [vmem:[%s1390 + $0x8] sm:$0xf]
      %v1394 = vld [vmem:[%s1390 + $0xc] sm:$0xf]
      %v1399 = vunpack.c.l.b16 %v1391
      %v1400 = vunpack.c.l.b16 %v1392
      %v1401 = vunpack.c.l.b16 %v1393
      %v1402 = vunpack.c.l.b16 %v1394
      %v1403 = vpack.c.b16 %v1400, %v1399
      %v1404 = vpack.c.b16 %v1402, %v1401
      %v1408 = vsel %vm240, %v1374, 0
      %v1411 = vsel %vm240, %v1375, 0
      %v1414 = vsel %vm240, %v1376, 0
      %v1417 = vsel %vm240, %v1377, 0
      %v1420 = vsel %vm240, %v1378, 0
      %v1423 = vsel %vm240, %v1379, 0
      %v1426 = vsel %vm240, %v1380, 0
      %v1429 = vsel %vm240, %v1381, 0
      %v1432 = vsel %vm240, %v1382, 0
      %v1435 = vsel %vm240, %v1383, 0
      %v1438 = vsel %vm240, %v1384, 0
      %v1441 = vsel %vm240, %v1385, 0
      %v1444 = vsel %vm240, %v1386, 0
      %v1447 = vsel %vm240, %v1387, 0
      %v1450 = vsel %vm240, %v1388, 0
      %v1453 = vsel %vm240, %v1389, 0
      %1455 = vmatprep.subr.bf16.mxu0 0
      %1456 = vmatpush1.bf16.msra.mxu0 0
      %1457 = vmatprep.subr.bf16.mxu0 0
      %1458 = vmatpush1.bf16.msra.mxu0 0
      %1459 = vmatprep.subr.bf16.mxu0 0
      %1460 = vmatpush1.bf16.msra.mxu0 0
      %1461 = vmatprep.subr.bf16.mxu0 0
      %1462 = vmatpush1.bf16.msra.mxu0 0
      %1463 = vmatprep.subr.bf16.mxu0 0
      %1464 = vmatpush1.bf16.msra.mxu0 0
      %1465 = vmatprep.subr.bf16.mxu0 0
      %1466 = vmatpush1.bf16.msra.mxu0 0
      %1467 = vmatprep.subr.bf16.mxu0 0
      %1468 = vmatpush1.bf16.msra.mxu0 %v1404
      %1469 = vmatprep.subr.bf16.mxu0 0
      %1470 = vmatpush1.bf16.msra.mxu0 %v1403
      %1471 = vmatprep.subr.bf16.mxu0 0
      %1472 = vmatpush2.bf16.msra.mxu0 0
      %1473 = vmatprep.subr.bf16.mxu0 0
      %1474 = vmatpush2.bf16.msra.mxu0 0
      %1475 = vmatprep.subr.bf16.mxu0 0
      %1476 = vmatpush2.bf16.msra.mxu0 0
      %1477 = vmatprep.subr.bf16.mxu0 0
      %1478 = vmatpush2.bf16.msra.mxu0 0
      %1479 = vmatprep.subr.bf16.mxu0 0
      %1480 = vmatpush2.bf16.msra.mxu0 0
      %1481 = vmatprep.subr.bf16.mxu0 0
      %1482 = vmatpush2.bf16.msra.mxu0 0
      %1483 = vmatprep.subr.bf16.mxu0 0
      %1484 = vmatpush2.bf16.msra.mxu0 0
      %1485 = vmatprep.subr.bf16.mxu0 0
      %1486 = vmatpush2.bf16.msra.mxu0 0
      %1487 = vmatprep.mubr.bf16.mxu0 0
      %1488 = vmatmul.mubr.bf16.gmra.mxu0 %v1408
      %v1489 = vpop.f32.mrf.mxu0
      %v1490 = vadd.f32 0.0, %v1489
      %v1491 = vpop.f32.mrf.mxu0
      %v1492 = vpop.f32.mrf.mxu0
      %v1493 = vadd.f32 0.0, %v1492
      %v1494 = vpop.f32.mrf.mxu0
      %1495 = vmatprep.mubr.bf16.mxu0 0
      %1496 = vmatmul.mubr.bf16.gmra.mxu0 %v1411
      %v1497 = vpop.f32.mrf.mxu0
      %v1498 = vadd.f32 0.0, %v1497
      %v1499 = vpop.f32.mrf.mxu0
      %v1500 = vpop.f32.mrf.mxu0
      %v1501 = vadd.f32 0.0, %v1500
      %v1502 = vpop.f32.mrf.mxu0
      %1503 = vmatprep.mubr.bf16.mxu0 0
      %1504 = vmatmul.mubr.bf16.gmra.mxu0 %v1414
      %v1505 = vpop.f32.mrf.mxu0
      %v1506 = vadd.f32 0.0, %v1505
      %v1507 = vpop.f32.mrf.mxu0
      %v1508 = vpop.f32.mrf.mxu0
      %v1509 = vadd.f32 0.0, %v1508
      %v1510 = vpop.f32.mrf.mxu0
      %1511 = vmatprep.mubr.bf16.mxu0 0
      %1512 = vmatmul.mubr.bf16.gmra.mxu0 %v1417
      %v1513 = vpop.f32.mrf.mxu0
      %v1514 = vadd.f32 0.0, %v1513
      %v1515 = vpop.f32.mrf.mxu0
      %v1516 = vpop.f32.mrf.mxu0
      %v1517 = vadd.f32 0.0, %v1516
      %v1518 = vpop.f32.mrf.mxu0
      %1519 = vmatprep.mubr.bf16.mxu0 0
      %1520 = vmatmul.mubr.bf16.gmra.mxu0 %v1420
      %v1521 = vpop.f32.mrf.mxu0
      %v1522 = vadd.f32 0.0, %v1521
      %v1523 = vpop.f32.mrf.mxu0
      %v1524 = vpop.f32.mrf.mxu0
      %v1525 = vadd.f32 0.0, %v1524
      %v1526 = vpop.f32.mrf.mxu0
      %1527 = vmatprep.mubr.bf16.mxu0 0
      %1528 = vmatmul.mubr.bf16.gmra.mxu0 %v1423
      %v1529 = vpop.f32.mrf.mxu0
      %v1530 = vadd.f32 0.0, %v1529
      %v1531 = vpop.f32.mrf.mxu0
      %v1532 = vpop.f32.mrf.mxu0
      %v1533 = vadd.f32 0.0, %v1532
      %v1534 = vpop.f32.mrf.mxu0
      %1535 = vmatprep.mubr.bf16.mxu0 0
      %1536 = vmatmul.mubr.bf16.gmra.mxu0 %v1426
      %v1537 = vpop.f32.mrf.mxu0
      %v1538 = vadd.f32 0.0, %v1537
      %v1539 = vpop.f32.mrf.mxu0
      %v1540 = vpop.f32.mrf.mxu0
      %v1541 = vadd.f32 0.0, %v1540
      %v1542 = vpop.f32.mrf.mxu0
      %1543 = vmatprep.mubr.bf16.mxu0 0
      %1544 = vmatmul.mubr.bf16.gmra.mxu0 %v1429
      %v1545 = vpop.f32.mrf.mxu0
      %v1546 = vadd.f32 0.0, %v1545
      %v1547 = vpop.f32.mrf.mxu0
      %v1548 = vpop.f32.mrf.mxu0
      %v1549 = vadd.f32 0.0, %v1548
      %v1550 = vpop.f32.mrf.mxu0
      %1551 = vmatprep.mubr.bf16.mxu0 0
      %1552 = vmatmul.mubr.bf16.gmra.mxu0 %v1432
      %v1553 = vpop.f32.mrf.mxu0
      %v1554 = vadd.f32 0.0, %v1553
      %v1555 = vpop.f32.mrf.mxu0
      %v1556 = vpop.f32.mrf.mxu0
      %v1557 = vadd.f32 0.0, %v1556
      %v1558 = vpop.f32.mrf.mxu0
      %1559 = vmatprep.mubr.bf16.mxu0 0
      %1560 = vmatmul.mubr.bf16.gmra.mxu0 %v1435
      %v1561 = vpop.f32.mrf.mxu0
      %v1562 = vadd.f32 0.0, %v1561
      %v1563 = vpop.f32.mrf.mxu0
      %v1564 = vpop.f32.mrf.mxu0
      %v1565 = vadd.f32 0.0, %v1564
      %v1566 = vpop.f32.mrf.mxu0
      %1567 = vmatprep.mubr.bf16.mxu0 0
      %1568 = vmatmul.mubr.bf16.gmra.mxu0 %v1438
      %v1569 = vpop.f32.mrf.mxu0
      %v1570 = vadd.f32 0.0, %v1569
      %v1571 = vpop.f32.mrf.mxu0
      %v1572 = vpop.f32.mrf.mxu0
      %v1573 = vadd.f32 0.0, %v1572
      %v1574 = vpop.f32.mrf.mxu0
      %1575 = vmatprep.mubr.bf16.mxu0 0
      %1576 = vmatmul.mubr.bf16.gmra.mxu0 %v1441
      %v1577 = vpop.f32.mrf.mxu0
      %v1578 = vadd.f32 0.0, %v1577
      %v1579 = vpop.f32.mrf.mxu0
      %v1580 = vpop.f32.mrf.mxu0
      %v1581 = vadd.f32 0.0, %v1580
      %v1582 = vpop.f32.mrf.mxu0
      %1583 = vmatprep.mubr.bf16.mxu0 0
      %1584 = vmatmul.mubr.bf16.gmra.mxu0 %v1444
      %v1585 = vpop.f32.mrf.mxu0
      %v1586 = vadd.f32 0.0, %v1585
      %v1587 = vpop.f32.mrf.mxu0
      %v1588 = vpop.f32.mrf.mxu0
      %v1589 = vadd.f32 0.0, %v1588
      %v1590 = vpop.f32.mrf.mxu0
      %1591 = vmatprep.mubr.bf16.mxu0 0
      %1592 = vmatmul.mubr.bf16.gmra.mxu0 %v1447
      %v1593 = vpop.f32.mrf.mxu0
      %v1594 = vadd.f32 0.0, %v1593
      %v1595 = vpop.f32.mrf.mxu0
      %v1596 = vpop.f32.mrf.mxu0
      %v1597 = vadd.f32 0.0, %v1596
      %v1598 = vpop.f32.mrf.mxu0
      %1599 = vmatprep.mubr.bf16.mxu0 0
      %1600 = vmatmul.mubr.bf16.gmra.mxu0 %v1450
      %v1601 = vpop.f32.mrf.mxu0
      %v1602 = vadd.f32 0.0, %v1601
      %v1603 = vpop.f32.mrf.mxu0
      %v1604 = vpop.f32.mrf.mxu0
      %v1605 = vadd.f32 0.0, %v1604
      %v1606 = vpop.f32.mrf.mxu0
      %1607 = vmatprep.mubr.bf16.mxu0 0
      %1608 = vmatmul.mubr.bf16.gmra.mxu0 %v1453
      %v1609 = vpop.f32.mrf.mxu0
      %v1610 = vadd.f32 0.0, %v1609
      %v1611 = vpop.f32.mrf.mxu0
      %v1612 = vpop.f32.mrf.mxu0
      %v1613 = vadd.f32 0.0, %v1612
      %v1614 = vpop.f32.mrf.mxu0
      %1615 = vdwg.mxu0
      %v1616 = vadd.f32 %v1310, %v1490
      %v1617 = vadd.f32 %v1311, %v1493
      %v1618 = vadd.f32 %v1312, %v1498
      %v1619 = vadd.f32 %v1313, %v1501
      %v1620 = vadd.f32 %v1314, %v1506
      %v1621 = vadd.f32 %v1315, %v1509
      %v1622 = vadd.f32 %v1316, %v1514
      %v1623 = vadd.f32 %v1317, %v1517
      %v1624 = vadd.f32 %v1318, %v1522
      %v1625 = vadd.f32 %v1319, %v1525
      %v1626 = vadd.f32 %v1320, %v1530
      %v1627 = vadd.f32 %v1321, %v1533
      %v1628 = vadd.f32 %v1322, %v1538
      %v1629 = vadd.f32 %v1323, %v1541
      %v1630 = vadd.f32 %v1324, %v1546
      %v1631 = vadd.f32 %v1325, %v1549
      %v1632 = vadd.f32 %v1326, %v1554
      %v1633 = vadd.f32 %v1327, %v1557
      %v1634 = vadd.f32 %v1328, %v1562
      %v1635 = vadd.f32 %v1329, %v1565
      %v1636 = vadd.f32 %v1330, %v1570
      %v1637 = vadd.f32 %v1331, %v1573
      %v1638 = vadd.f32 %v1332, %v1578
      %v1639 = vadd.f32 %v1333, %v1581
      %v1640 = vadd.f32 %v1334, %v1586
      %v1641 = vadd.f32 %v1335, %v1589
      %v1642 = vadd.f32 %v1336, %v1594
      %v1643 = vadd.f32 %v1337, %v1597
      %v1644 = vadd.f32 %v1338, %v1602
      %v1645 = vadd.f32 %v1339, %v1605
      %v1646 = vadd.f32 %v1340, %v1610
      %v1647 = vadd.f32 %v1341, %v1613
      %v1648 = vld [vmem:[%s249 + $0x1] sm:$0xff]
      %v1649 = vld [vmem:[%s249 + $0x9] sm:$0xff]
      %v1650 = vld [vmem:[%s249 + $0x19] sm:$0xff]
      %v1651 = vld [vmem:[%s249 + $0x21] sm:$0xff]
      %v1652 = vld [vmem:[%s249 + $0x31] sm:$0xff]
      %v1653 = vld [vmem:[%s249 + $0x39] sm:$0xff]
      %v1654 = vld [vmem:[%s249 + $0x49] sm:$0xff]
      %v1655 = vld [vmem:[%s249 + $0x51] sm:$0xff]
      %v1656 = vld [vmem:[%s249 + $0x61] sm:$0xff]
      %v1657 = vld [vmem:[%s249 + $0x69] sm:$0xff]
      %v1658 = vld [vmem:[%s249 + $0x79] sm:$0xff]
      %v1659 = vld [vmem:[%s249 + $0x81] sm:$0xff]
      %v1660 = vld [vmem:[%s249 + $0x91] sm:$0xff]
      %v1661 = vld [vmem:[%s249 + $0x99] sm:$0xff]
      %v1662 = vld [vmem:[%s249 + $0xa9] sm:$0xff]
      %v1663 = vld [vmem:[%s249 + $0xb1] sm:$0xff]
      %v1664 = vld [vmem:[%s249 + $0xc1] sm:$0xff]
      %v1665 = vld [vmem:[%s249 + $0xc9] sm:$0xff]
      %v1666 = vld [vmem:[%s249 + $0xd9] sm:$0xff]
      %v1667 = vld [vmem:[%s249 + $0xe1] sm:$0xff]
      %v1668 = vld [vmem:[%s249 + $0xf1] sm:$0xff]
      %v1669 = vld [vmem:[%s249 + $0xf9] sm:$0xff]
      %v1670 = vld [vmem:[%s249 + $0x109] sm:$0xff]
      %v1671 = vld [vmem:[%s249 + $0x111] sm:$0xff]
      %v1672 = vld [vmem:[%s249 + $0x121] sm:$0xff]
      %v1673 = vld [vmem:[%s249 + $0x129] sm:$0xff]
      %v1674 = vld [vmem:[%s249 + $0x139] sm:$0xff]
      %v1675 = vld [vmem:[%s249 + $0x141] sm:$0xff]
      %v1676 = vld [vmem:[%s249 + $0x151] sm:$0xff]
      %v1677 = vld [vmem:[%s249 + $0x159] sm:$0xff]
      %v1678 = vld [vmem:[%s249 + $0x169] sm:$0xff]
      %v1679 = vld [vmem:[%s249 + $0x171] sm:$0xff]
      %v1680 = vpack.c.bf16 %v1649, %v1648
      %v1681 = vpack.c.bf16 %v1651, %v1650
      %v1682 = vpack.c.bf16 %v1653, %v1652
      %v1683 = vpack.c.bf16 %v1655, %v1654
      %v1684 = vpack.c.bf16 %v1657, %v1656
      %v1685 = vpack.c.bf16 %v1659, %v1658
      %v1686 = vpack.c.bf16 %v1661, %v1660
      %v1687 = vpack.c.bf16 %v1663, %v1662
      %v1688 = vpack.c.bf16 %v1665, %v1664
      %v1689 = vpack.c.bf16 %v1667, %v1666
      %v1690 = vpack.c.bf16 %v1669, %v1668
      %v1691 = vpack.c.bf16 %v1671, %v1670
      %v1692 = vpack.c.bf16 %v1673, %v1672
      %v1693 = vpack.c.bf16 %v1675, %v1674
      %v1694 = vpack.c.bf16 %v1677, %v1676
      %v1695 = vpack.c.bf16 %v1679, %v1678
      %s1696 = scalar_lea.vmem %s3, 64
      %v1697 = vld [vmem:[%s1696] sm:$0xf]
      %v1698 = vld [vmem:[%s1696 + $0x4] sm:$0xf]
      %v1699 = vld [vmem:[%s1696 + $0x8] sm:$0xf]
      %v1700 = vld [vmem:[%s1696 + $0xc] sm:$0xf]
      %v1705 = vunpack.c.l.b16 %v1697
      %v1706 = vunpack.c.l.b16 %v1698
      %v1707 = vunpack.c.l.b16 %v1699
      %v1708 = vunpack.c.l.b16 %v1700
      %v1709 = vpack.c.b16 %v1706, %v1705
      %v1710 = vpack.c.b16 %v1708, %v1707
      %v1714 = vsel %vm240, %v1680, 0
      %v1717 = vsel %vm240, %v1681, 0
      %v1720 = vsel %vm240, %v1682, 0
      %v1723 = vsel %vm240, %v1683, 0
      %v1726 = vsel %vm240, %v1684, 0
      %v1729 = vsel %vm240, %v1685, 0
      %v1732 = vsel %vm240, %v1686, 0
      %v1735 = vsel %vm240, %v1687, 0
      %v1738 = vsel %vm240, %v1688, 0
      %v1741 = vsel %vm240, %v1689, 0
      %v1744 = vsel %vm240, %v1690, 0
      %v1747 = vsel %vm240, %v1691, 0
      %v1750 = vsel %vm240, %v1692, 0
      %v1753 = vsel %vm240, %v1693, 0
      %v1756 = vsel %vm240, %v1694, 0
      %v1759 = vsel %vm240, %v1695, 0
      %1761 = vmatprep.subr.bf16.mxu0 0
      %1762 = vmatpush1.bf16.msra.mxu0 0
      %1763 = vmatprep.subr.bf16.mxu0 0
      %1764 = vmatpush1.bf16.msra.mxu0 0
      %1765 = vmatprep.subr.bf16.mxu0 0
      %1766 = vmatpush1.bf16.msra.mxu0 0
      %1767 = vmatprep.subr.bf16.mxu0 0
      %1768 = vmatpush1.bf16.msra.mxu0 0
      %1769 = vmatprep.subr.bf16.mxu0 0
      %1770 = vmatpush1.bf16.msra.mxu0 0
      %1771 = vmatprep.subr.bf16.mxu0 0
      %1772 = vmatpush1.bf16.msra.mxu0 0
      %1773 = vmatprep.subr.bf16.mxu0 0
      %1774 = vmatpush1.bf16.msra.mxu0 %v1710
      %1775 = vmatprep.subr.bf16.mxu0 0
      %1776 = vmatpush1.bf16.msra.mxu0 %v1709
      %1777 = vmatprep.subr.bf16.mxu0 0
      %1778 = vmatpush2.bf16.msra.mxu0 0
      %1779 = vmatprep.subr.bf16.mxu0 0
      %1780 = vmatpush2.bf16.msra.mxu0 0
      %1781 = vmatprep.subr.bf16.mxu0 0
      %1782 = vmatpush2.bf16.msra.mxu0 0
      %1783 = vmatprep.subr.bf16.mxu0 0
      %1784 = vmatpush2.bf16.msra.mxu0 0
      %1785 = vmatprep.subr.bf16.mxu0 0
      %1786 = vmatpush2.bf16.msra.mxu0 0
      %1787 = vmatprep.subr.bf16.mxu0 0
      %1788 = vmatpush2.bf16.msra.mxu0 0
      %1789 = vmatprep.subr.bf16.mxu0 0
      %1790 = vmatpush2.bf16.msra.mxu0 0
      %1791 = vmatprep.subr.bf16.mxu0 0
      %1792 = vmatpush2.bf16.msra.mxu0 0
      %1793 = vmatprep.mubr.bf16.mxu0 0
      %1794 = vmatmul.mubr.bf16.gmra.mxu0 %v1714
      %v1795 = vpop.f32.mrf.mxu0
      %v1796 = vadd.f32 0.0, %v1795
      %v1797 = vpop.f32.mrf.mxu0
      %v1798 = vpop.f32.mrf.mxu0
      %v1799 = vadd.f32 0.0, %v1798
      %v1800 = vpop.f32.mrf.mxu0
      %1801 = vmatprep.mubr.bf16.mxu0 0
      %1802 = vmatmul.mubr.bf16.gmra.mxu0 %v1717
      %v1803 = vpop.f32.mrf.mxu0
      %v1804 = vadd.f32 0.0, %v1803
      %v1805 = vpop.f32.mrf.mxu0
      %v1806 = vpop.f32.mrf.mxu0
      %v1807 = vadd.f32 0.0, %v1806
      %v1808 = vpop.f32.mrf.mxu0
      %1809 = vmatprep.mubr.bf16.mxu0 0
      %1810 = vmatmul.mubr.bf16.gmra.mxu0 %v1720
      %v1811 = vpop.f32.mrf.mxu0
      %v1812 = vadd.f32 0.0, %v1811
      %v1813 = vpop.f32.mrf.mxu0
      %v1814 = vpop.f32.mrf.mxu0
      %v1815 = vadd.f32 0.0, %v1814
      %v1816 = vpop.f32.mrf.mxu0
      %1817 = vmatprep.mubr.bf16.mxu0 0
      %1818 = vmatmul.mubr.bf16.gmra.mxu0 %v1723
      %v1819 = vpop.f32.mrf.mxu0
      %v1820 = vadd.f32 0.0, %v1819
      %v1821 = vpop.f32.mrf.mxu0
      %v1822 = vpop.f32.mrf.mxu0
      %v1823 = vadd.f32 0.0, %v1822
      %v1824 = vpop.f32.mrf.mxu0
      %1825 = vmatprep.mubr.bf16.mxu0 0
      %1826 = vmatmul.mubr.bf16.gmra.mxu0 %v1726
      %v1827 = vpop.f32.mrf.mxu0
      %v1828 = vadd.f32 0.0, %v1827
      %v1829 = vpop.f32.mrf.mxu0
      %v1830 = vpop.f32.mrf.mxu0
      %v1831 = vadd.f32 0.0, %v1830
      %v1832 = vpop.f32.mrf.mxu0
      %1833 = vmatprep.mubr.bf16.mxu0 0
      %1834 = vmatmul.mubr.bf16.gmra.mxu0 %v1729
      %v1835 = vpop.f32.mrf.mxu0
      %v1836 = vadd.f32 0.0, %v1835
      %v1837 = vpop.f32.mrf.mxu0
      %v1838 = vpop.f32.mrf.mxu0
      %v1839 = vadd.f32 0.0, %v1838
      %v1840 = vpop.f32.mrf.mxu0
      %1841 = vmatprep.mubr.bf16.mxu0 0
      %1842 = vmatmul.mubr.bf16.gmra.mxu0 %v1732
      %v1843 = vpop.f32.mrf.mxu0
      %v1844 = vadd.f32 0.0, %v1843
      %v1845 = vpop.f32.mrf.mxu0
      %v1846 = vpop.f32.mrf.mxu0
      %v1847 = vadd.f32 0.0, %v1846
      %v1848 = vpop.f32.mrf.mxu0
      %1849 = vmatprep.mubr.bf16.mxu0 0
      %1850 = vmatmul.mubr.bf16.gmra.mxu0 %v1735
      %v1851 = vpop.f32.mrf.mxu0
      %v1852 = vadd.f32 0.0, %v1851
      %v1853 = vpop.f32.mrf.mxu0
      %v1854 = vpop.f32.mrf.mxu0
      %v1855 = vadd.f32 0.0, %v1854
      %v1856 = vpop.f32.mrf.mxu0
      %1857 = vmatprep.mubr.bf16.mxu0 0
      %1858 = vmatmul.mubr.bf16.gmra.mxu0 %v1738
      %v1859 = vpop.f32.mrf.mxu0
      %v1860 = vadd.f32 0.0, %v1859
      %v1861 = vpop.f32.mrf.mxu0
      %v1862 = vpop.f32.mrf.mxu0
      %v1863 = vadd.f32 0.0, %v1862
      %v1864 = vpop.f32.mrf.mxu0
      %1865 = vmatprep.mubr.bf16.mxu0 0
      %1866 = vmatmul.mubr.bf16.gmra.mxu0 %v1741
      %v1867 = vpop.f32.mrf.mxu0
      %v1868 = vadd.f32 0.0, %v1867
      %v1869 = vpop.f32.mrf.mxu0
      %v1870 = vpop.f32.mrf.mxu0
      %v1871 = vadd.f32 0.0, %v1870
      %v1872 = vpop.f32.mrf.mxu0
      %1873 = vmatprep.mubr.bf16.mxu0 0
      %1874 = vmatmul.mubr.bf16.gmra.mxu0 %v1744
      %v1875 = vpop.f32.mrf.mxu0
      %v1876 = vadd.f32 0.0, %v1875
      %v1877 = vpop.f32.mrf.mxu0
      %v1878 = vpop.f32.mrf.mxu0
      %v1879 = vadd.f32 0.0, %v1878
      %v1880 = vpop.f32.mrf.mxu0
      %1881 = vmatprep.mubr.bf16.mxu0 0
      %1882 = vmatmul.mubr.bf16.gmra.mxu0 %v1747
      %v1883 = vpop.f32.mrf.mxu0
      %v1884 = vadd.f32 0.0, %v1883
      %v1885 = vpop.f32.mrf.mxu0
      %v1886 = vpop.f32.mrf.mxu0
      %v1887 = vadd.f32 0.0, %v1886
      %v1888 = vpop.f32.mrf.mxu0
      %1889 = vmatprep.mubr.bf16.mxu0 0
      %1890 = vmatmul.mubr.bf16.gmra.mxu0 %v1750
      %v1891 = vpop.f32.mrf.mxu0
      %v1892 = vadd.f32 0.0, %v1891
      %v1893 = vpop.f32.mrf.mxu0
      %v1894 = vpop.f32.mrf.mxu0
      %v1895 = vadd.f32 0.0, %v1894
      %v1896 = vpop.f32.mrf.mxu0
      %1897 = vmatprep.mubr.bf16.mxu0 0
      %1898 = vmatmul.mubr.bf16.gmra.mxu0 %v1753
      %v1899 = vpop.f32.mrf.mxu0
      %v1900 = vadd.f32 0.0, %v1899
      %v1901 = vpop.f32.mrf.mxu0
      %v1902 = vpop.f32.mrf.mxu0
      %v1903 = vadd.f32 0.0, %v1902
      %v1904 = vpop.f32.mrf.mxu0
      %1905 = vmatprep.mubr.bf16.mxu0 0
      %1906 = vmatmul.mubr.bf16.gmra.mxu0 %v1756
      %v1907 = vpop.f32.mrf.mxu0
      %v1908 = vadd.f32 0.0, %v1907
      %v1909 = vpop.f32.mrf.mxu0
      %v1910 = vpop.f32.mrf.mxu0
      %v1911 = vadd.f32 0.0, %v1910
      %v1912 = vpop.f32.mrf.mxu0
      %1913 = vmatprep.mubr.bf16.mxu0 0
      %1914 = vmatmul.mubr.bf16.gmra.mxu0 %v1759
      %v1915 = vpop.f32.mrf.mxu0
      %v1916 = vadd.f32 0.0, %v1915
      %v1917 = vpop.f32.mrf.mxu0
      %v1918 = vpop.f32.mrf.mxu0
      %v1919 = vadd.f32 0.0, %v1918
      %v1920 = vpop.f32.mrf.mxu0
      %1921 = vdwg.mxu0
      %v1922 = vadd.f32 %v1616, %v1796
      %v1923 = vadd.f32 %v1617, %v1799
      %v1924 = vadd.f32 %v1618, %v1804
      %v1925 = vadd.f32 %v1619, %v1807
      %v1926 = vadd.f32 %v1620, %v1812
      %v1927 = vadd.f32 %v1621, %v1815
      %v1928 = vadd.f32 %v1622, %v1820
      %v1929 = vadd.f32 %v1623, %v1823
      %v1930 = vadd.f32 %v1624, %v1828
      %v1931 = vadd.f32 %v1625, %v1831
      %v1932 = vadd.f32 %v1626, %v1836
      %v1933 = vadd.f32 %v1627, %v1839
      %v1934 = vadd.f32 %v1628, %v1844
      %v1935 = vadd.f32 %v1629, %v1847
      %v1936 = vadd.f32 %v1630, %v1852
      %v1937 = vadd.f32 %v1631, %v1855
      %v1938 = vadd.f32 %v1632, %v1860
      %v1939 = vadd.f32 %v1633, %v1863
      %v1940 = vadd.f32 %v1634, %v1868
      %v1941 = vadd.f32 %v1635, %v1871
      %v1942 = vadd.f32 %v1636, %v1876
      %v1943 = vadd.f32 %v1637, %v1879
      %v1944 = vadd.f32 %v1638, %v1884
      %v1945 = vadd.f32 %v1639, %v1887
      %v1946 = vadd.f32 %v1640, %v1892
      %v1947 = vadd.f32 %v1641, %v1895
      %v1948 = vadd.f32 %v1642, %v1900
      %v1949 = vadd.f32 %v1643, %v1903
      %v1950 = vadd.f32 %v1644, %v1908
      %v1951 = vadd.f32 %v1645, %v1911
      %v1952 = vadd.f32 %v1646, %v1916
      %v1953 = vadd.f32 %v1647, %v1919
      %v1954 = vld [vmem:[%s249 + $0x2] sm:$0xff]
      %v1955 = vld [vmem:[%s249 + $0xa] sm:$0xff]
      %v1956 = vld [vmem:[%s249 + $0x1a] sm:$0xff]
      %v1957 = vld [vmem:[%s249 + $0x22] sm:$0xff]
      %v1958 = vld [vmem:[%s249 + $0x32] sm:$0xff]
      %v1959 = vld [vmem:[%s249 + $0x3a] sm:$0xff]
      %v1960 = vld [vmem:[%s249 + $0x4a] sm:$0xff]
      %v1961 = vld [vmem:[%s249 + $0x52] sm:$0xff]
      %v1962 = vld [vmem:[%s249 + $0x62] sm:$0xff]
      %v1963 = vld [vmem:[%s249 + $0x6a] sm:$0xff]
      %v1964 = vld [vmem:[%s249 + $0x7a] sm:$0xff]
      %v1965 = vld [vmem:[%s249 + $0x82] sm:$0xff]
      %v1966 = vld [vmem:[%s249 + $0x92] sm:$0xff]
      %v1967 = vld [vmem:[%s249 + $0x9a] sm:$0xff]
      %v1968 = vld [vmem:[%s249 + $0xaa] sm:$0xff]
      %v1969 = vld [vmem:[%s249 + $0xb2] sm:$0xff]
      %v1970 = vld [vmem:[%s249 + $0xc2] sm:$0xff]
      %v1971 = vld [vmem:[%s249 + $0xca] sm:$0xff]
      %v1972 = vld [vmem:[%s249 + $0xda] sm:$0xff]
      %v1973 = vld [vmem:[%s249 + $0xe2] sm:$0xff]
      %v1974 = vld [vmem:[%s249 + $0xf2] sm:$0xff]
      %v1975 = vld [vmem:[%s249 + $0xfa] sm:$0xff]
      %v1976 = vld [vmem:[%s249 + $0x10a] sm:$0xff]
      %v1977 = vld [vmem:[%s249 + $0x112] sm:$0xff]
      %v1978 = vld [vmem:[%s249 + $0x122] sm:$0xff]
      %v1979 = vld [vmem:[%s249 + $0x12a] sm:$0xff]
      %v1980 = vld [vmem:[%s249 + $0x13a] sm:$0xff]
      %v1981 = vld [vmem:[%s249 + $0x142] sm:$0xff]
      %v1982 = vld [vmem:[%s249 + $0x152] sm:$0xff]
      %v1983 = vld [vmem:[%s249 + $0x15a] sm:$0xff]
      %v1984 = vld [vmem:[%s249 + $0x16a] sm:$0xff]
      %v1985 = vld [vmem:[%s249 + $0x172] sm:$0xff]
      %v1986 = vpack.c.bf16 %v1955, %v1954
      %v1987 = vpack.c.bf16 %v1957, %v1956
      %v1988 = vpack.c.bf16 %v1959, %v1958
      %v1989 = vpack.c.bf16 %v1961, %v1960
      %v1990 = vpack.c.bf16 %v1963, %v1962
      %v1991 = vpack.c.bf16 %v1965, %v1964
      %v1992 = vpack.c.bf16 %v1967, %v1966
      %v1993 = vpack.c.bf16 %v1969, %v1968
      %v1994 = vpack.c.bf16 %v1971, %v1970
      %v1995 = vpack.c.bf16 %v1973, %v1972
      %v1996 = vpack.c.bf16 %v1975, %v1974
      %v1997 = vpack.c.bf16 %v1977, %v1976
      %v1998 = vpack.c.bf16 %v1979, %v1978
      %v1999 = vpack.c.bf16 %v1981, %v1980
      %v2000 = vpack.c.bf16 %v1983, %v1982
      %v2001 = vpack.c.bf16 %v1985, %v1984
      %s2002 = scalar_lea.vmem %s3, 80
      %v2003 = vld [vmem:[%s2002] sm:$0xf]
      %v2004 = vld [vmem:[%s2002 + $0x4] sm:$0xf]
      %v2005 = vld [vmem:[%s2002 + $0x8] sm:$0xf]
      %v2006 = vld [vmem:[%s2002 + $0xc] sm:$0xf]
      %v2011 = vunpack.c.l.b16 %v2003
      %v2012 = vunpack.c.l.b16 %v2004
      %v2013 = vunpack.c.l.b16 %v2005
      %v2014 = vunpack.c.l.b16 %v2006
      %v2015 = vpack.c.b16 %v2012, %v2011
      %v2016 = vpack.c.b16 %v2014, %v2013
      %v2020 = vsel %vm240, %v1986, 0
      %v2023 = vsel %vm240, %v1987, 0
      %v2026 = vsel %vm240, %v1988, 0
      %v2029 = vsel %vm240, %v1989, 0
      %v2032 = vsel %vm240, %v1990, 0
      %v2035 = vsel %vm240, %v1991, 0
      %v2038 = vsel %vm240, %v1992, 0
      %v2041 = vsel %vm240, %v1993, 0
      %v2044 = vsel %vm240, %v1994, 0
      %v2047 = vsel %vm240, %v1995, 0
      %v2050 = vsel %vm240, %v1996, 0
      %v2053 = vsel %vm240, %v1997, 0
      %v2056 = vsel %vm240, %v1998, 0
      %v2059 = vsel %vm240, %v1999, 0
      %v2062 = vsel %vm240, %v2000, 0
      %v2065 = vsel %vm240, %v2001, 0
      %2067 = vmatprep.subr.bf16.mxu0 0
      %2068 = vmatpush1.bf16.msra.mxu0 0
      %2069 = vmatprep.subr.bf16.mxu0 0
      %2070 = vmatpush1.bf16.msra.mxu0 0
      %2071 = vmatprep.subr.bf16.mxu0 0
      %2072 = vmatpush1.bf16.msra.mxu0 0
      %2073 = vmatprep.subr.bf16.mxu0 0
      %2074 = vmatpush1.bf16.msra.mxu0 0
      %2075 = vmatprep.subr.bf16.mxu0 0
      %2076 = vmatpush1.bf16.msra.mxu0 0
      %2077 = vmatprep.subr.bf16.mxu0 0
      %2078 = vmatpush1.bf16.msra.mxu0 0
      %2079 = vmatprep.subr.bf16.mxu0 0
      %2080 = vmatpush1.bf16.msra.mxu0 %v2016
      %2081 = vmatprep.subr.bf16.mxu0 0
      %2082 = vmatpush1.bf16.msra.mxu0 %v2015
      %2083 = vmatprep.subr.bf16.mxu0 0
      %2084 = vmatpush2.bf16.msra.mxu0 0
      %2085 = vmatprep.subr.bf16.mxu0 0
      %2086 = vmatpush2.bf16.msra.mxu0 0
      %2087 = vmatprep.subr.bf16.mxu0 0
      %2088 = vmatpush2.bf16.msra.mxu0 0
      %2089 = vmatprep.subr.bf16.mxu0 0
      %2090 = vmatpush2.bf16.msra.mxu0 0
      %2091 = vmatprep.subr.bf16.mxu0 0
      %2092 = vmatpush2.bf16.msra.mxu0 0
      %2093 = vmatprep.subr.bf16.mxu0 0
      %2094 = vmatpush2.bf16.msra.mxu0 0
      %2095 = vmatprep.subr.bf16.mxu0 0
      %2096 = vmatpush2.bf16.msra.mxu0 0
      %2097 = vmatprep.subr.bf16.mxu0 0
      %2098 = vmatpush2.bf16.msra.mxu0 0
      %2099 = vmatprep.mubr.bf16.mxu0 0
      %2100 = vmatmul.mubr.bf16.gmra.mxu0 %v2020
      %v2101 = vpop.f32.mrf.mxu0
      %v2102 = vadd.f32 0.0, %v2101
      %v2103 = vpop.f32.mrf.mxu0
      %v2104 = vpop.f32.mrf.mxu0
      %v2105 = vadd.f32 0.0, %v2104
      %v2106 = vpop.f32.mrf.mxu0
      %2107 = vmatprep.mubr.bf16.mxu0 0
      %2108 = vmatmul.mubr.bf16.gmra.mxu0 %v2023
      %v2109 = vpop.f32.mrf.mxu0
      %v2110 = vadd.f32 0.0, %v2109
      %v2111 = vpop.f32.mrf.mxu0
      %v2112 = vpop.f32.mrf.mxu0
      %v2113 = vadd.f32 0.0, %v2112
      %v2114 = vpop.f32.mrf.mxu0
      %2115 = vmatprep.mubr.bf16.mxu0 0
      %2116 = vmatmul.mubr.bf16.gmra.mxu0 %v2026
      %v2117 = vpop.f32.mrf.mxu0
      %v2118 = vadd.f32 0.0, %v2117
      %v2119 = vpop.f32.mrf.mxu0
      %v2120 = vpop.f32.mrf.mxu0
      %v2121 = vadd.f32 0.0, %v2120
      %v2122 = vpop.f32.mrf.mxu0
      %2123 = vmatprep.mubr.bf16.mxu0 0
      %2124 = vmatmul.mubr.bf16.gmra.mxu0 %v2029
      %v2125 = vpop.f32.mrf.mxu0
      %v2126 = vadd.f32 0.0, %v2125
      %v2127 = vpop.f32.mrf.mxu0
      %v2128 = vpop.f32.mrf.mxu0
      %v2129 = vadd.f32 0.0, %v2128
      %v2130 = vpop.f32.mrf.mxu0
      %2131 = vmatprep.mubr.bf16.mxu0 0
      %2132 = vmatmul.mubr.bf16.gmra.mxu0 %v2032
      %v2133 = vpop.f32.mrf.mxu0
      %v2134 = vadd.f32 0.0, %v2133
      %v2135 = vpop.f32.mrf.mxu0
      %v2136 = vpop.f32.mrf.mxu0
      %v2137 = vadd.f32 0.0, %v2136
      %v2138 = vpop.f32.mrf.mxu0
      %2139 = vmatprep.mubr.bf16.mxu0 0
      %2140 = vmatmul.mubr.bf16.gmra.mxu0 %v2035
      %v2141 = vpop.f32.mrf.mxu0
      %v2142 = vadd.f32 0.0, %v2141
      %v2143 = vpop.f32.mrf.mxu0
      %v2144 = vpop.f32.mrf.mxu0
      %v2145 = vadd.f32 0.0, %v2144
      %v2146 = vpop.f32.mrf.mxu0
      %2147 = vmatprep.mubr.bf16.mxu0 0
      %2148 = vmatmul.mubr.bf16.gmra.mxu0 %v2038
      %v2149 = vpop.f32.mrf.mxu0
      %v2150 = vadd.f32 0.0, %v2149
      %v2151 = vpop.f32.mrf.mxu0
      %v2152 = vpop.f32.mrf.mxu0
      %v2153 = vadd.f32 0.0, %v2152
      %v2154 = vpop.f32.mrf.mxu0
      %2155 = vmatprep.mubr.bf16.mxu0 0
      %2156 = vmatmul.mubr.bf16.gmra.mxu0 %v2041
      %v2157 = vpop.f32.mrf.mxu0
      %v2158 = vadd.f32 0.0, %v2157
      %v2159 = vpop.f32.mrf.mxu0
      %v2160 = vpop.f32.mrf.mxu0
      %v2161 = vadd.f32 0.0, %v2160
      %v2162 = vpop.f32.mrf.mxu0
      %2163 = vmatprep.mubr.bf16.mxu0 0
      %2164 = vmatmul.mubr.bf16.gmra.mxu0 %v2044
      %v2165 = vpop.f32.mrf.mxu0
      %v2166 = vadd.f32 0.0, %v2165
      %v2167 = vpop.f32.mrf.mxu0
      %v2168 = vpop.f32.mrf.mxu0
      %v2169 = vadd.f32 0.0, %v2168
      %v2170 = vpop.f32.mrf.mxu0
      %2171 = vmatprep.mubr.bf16.mxu0 0
      %2172 = vmatmul.mubr.bf16.gmra.mxu0 %v2047
      %v2173 = vpop.f32.mrf.mxu0
      %v2174 = vadd.f32 0.0, %v2173
      %v2175 = vpop.f32.mrf.mxu0
      %v2176 = vpop.f32.mrf.mxu0
      %v2177 = vadd.f32 0.0, %v2176
      %v2178 = vpop.f32.mrf.mxu0
      %2179 = vmatprep.mubr.bf16.mxu0 0
      %2180 = vmatmul.mubr.bf16.gmra.mxu0 %v2050
      %v2181 = vpop.f32.mrf.mxu0
      %v2182 = vadd.f32 0.0, %v2181
      %v2183 = vpop.f32.mrf.mxu0
      %v2184 = vpop.f32.mrf.mxu0
      %v2185 = vadd.f32 0.0, %v2184
      %v2186 = vpop.f32.mrf.mxu0
      %2187 = vmatprep.mubr.bf16.mxu0 0
      %2188 = vmatmul.mubr.bf16.gmra.mxu0 %v2053
      %v2189 = vpop.f32.mrf.mxu0
      %v2190 = vadd.f32 0.0, %v2189
      %v2191 = vpop.f32.mrf.mxu0
      %v2192 = vpop.f32.mrf.mxu0
      %v2193 = vadd.f32 0.0, %v2192
      %v2194 = vpop.f32.mrf.mxu0
      %2195 = vmatprep.mubr.bf16.mxu0 0
      %2196 = vmatmul.mubr.bf16.gmra.mxu0 %v2056
      %v2197 = vpop.f32.mrf.mxu0
      %v2198 = vadd.f32 0.0, %v2197
      %v2199 = vpop.f32.mrf.mxu0
      %v2200 = vpop.f32.mrf.mxu0
      %v2201 = vadd.f32 0.0, %v2200
      %v2202 = vpop.f32.mrf.mxu0
      %2203 = vmatprep.mubr.bf16.mxu0 0
      %2204 = vmatmul.mubr.bf16.gmra.mxu0 %v2059
      %v2205 = vpop.f32.mrf.mxu0
      %v2206 = vadd.f32 0.0, %v2205
      %v2207 = vpop.f32.mrf.mxu0
      %v2208 = vpop.f32.mrf.mxu0
      %v2209 = vadd.f32 0.0, %v2208
      %v2210 = vpop.f32.mrf.mxu0
      %2211 = vmatprep.mubr.bf16.mxu0 0
      %2212 = vmatmul.mubr.bf16.gmra.mxu0 %v2062
      %v2213 = vpop.f32.mrf.mxu0
      %v2214 = vadd.f32 0.0, %v2213
      %v2215 = vpop.f32.mrf.mxu0
      %v2216 = vpop.f32.mrf.mxu0
      %v2217 = vadd.f32 0.0, %v2216
      %v2218 = vpop.f32.mrf.mxu0
      %2219 = vmatprep.mubr.bf16.mxu0 0
      %2220 = vmatmul.mubr.bf16.gmra.mxu0 %v2065
      %v2221 = vpop.f32.mrf.mxu0
      %v2222 = vadd.f32 0.0, %v2221
      %v2223 = vpop.f32.mrf.mxu0
      %v2224 = vpop.f32.mrf.mxu0
      %v2225 = vadd.f32 0.0, %v2224
      %v2226 = vpop.f32.mrf.mxu0
      %2227 = vdwg.mxu0
      %v2228 = vadd.f32 %v1922, %v2102
      %v2229 = vadd.f32 %v1923, %v2105
      %v2230 = vadd.f32 %v1924, %v2110
      %v2231 = vadd.f32 %v1925, %v2113
      %v2232 = vadd.f32 %v1926, %v2118
      %v2233 = vadd.f32 %v1927, %v2121
      %v2234 = vadd.f32 %v1928, %v2126
      %v2235 = vadd.f32 %v1929, %v2129
      %v2236 = vadd.f32 %v1930, %v2134
      %v2237 = vadd.f32 %v1931, %v2137
      %v2238 = vadd.f32 %v1932, %v2142
      %v2239 = vadd.f32 %v1933, %v2145
      %v2240 = vadd.f32 %v1934, %v2150
      %v2241 = vadd.f32 %v1935, %v2153
      %v2242 = vadd.f32 %v1936, %v2158
      %v2243 = vadd.f32 %v1937, %v2161
      %v2244 = vadd.f32 %v1938, %v2166
      %v2245 = vadd.f32 %v1939, %v2169
      %v2246 = vadd.f32 %v1940, %v2174
      %v2247 = vadd.f32 %v1941, %v2177
      %v2248 = vadd.f32 %v1942, %v2182
      %v2249 = vadd.f32 %v1943, %v2185
      %v2250 = vadd.f32 %v1944, %v2190
      %v2251 = vadd.f32 %v1945, %v2193
      %v2252 = vadd.f32 %v1946, %v2198
      %v2253 = vadd.f32 %v1947, %v2201
      %v2254 = vadd.f32 %v1948, %v2206
      %v2255 = vadd.f32 %v1949, %v2209
      %v2256 = vadd.f32 %v1950, %v2214
      %v2257 = vadd.f32 %v1951, %v2217
      %v2258 = vadd.f32 %v1952, %v2222
      %v2259 = vadd.f32 %v1953, %v2225
      %s2260 = scalar_lea.vmem [#allocation2], 48
      %v2261 = vld [vmem:[%s2260] sm:$0xff]
      %v2262 = vld [vmem:[%s2260 + $0x8] sm:$0xff]
      %v2263 = vld [vmem:[%s2260 + $0x18] sm:$0xff]
      %v2264 = vld [vmem:[%s2260 + $0x20] sm:$0xff]
      %v2265 = vld [vmem:[%s2260 + $0x30] sm:$0xff]
      %v2266 = vld [vmem:[%s2260 + $0x38] sm:$0xff]
      %v2267 = vld [vmem:[%s2260 + $0x48] sm:$0xff]
      %v2268 = vld [vmem:[%s2260 + $0x50] sm:$0xff]
      %v2269 = vld [vmem:[%s2260 + $0x60] sm:$0xff]
      %v2270 = vld [vmem:[%s2260 + $0x68] sm:$0xff]
      %v2271 = vld [vmem:[%s2260 + $0x78] sm:$0xff]
      %v2272 = vld [vmem:[%s2260 + $0x80] sm:$0xff]
      %v2273 = vld [vmem:[%s2260 + $0x90] sm:$0xff]
      %v2274 = vld [vmem:[%s2260 + $0x98] sm:$0xff]
      %v2275 = vld [vmem:[%s2260 + $0xa8] sm:$0xff]
      %v2276 = vld [vmem:[%s2260 + $0xb0] sm:$0xff]
      %v2277 = vld [vmem:[%s2260 + $0xc0] sm:$0xff]
      %v2278 = vld [vmem:[%s2260 + $0xc8] sm:$0xff]
      %v2279 = vld [vmem:[%s2260 + $0xd8] sm:$0xff]
      %v2280 = vld [vmem:[%s2260 + $0xe0] sm:$0xff]
      %v2281 = vld [vmem:[%s2260 + $0xf0] sm:$0xff]
      %v2282 = vld [vmem:[%s2260 + $0xf8] sm:$0xff]
      %v2283 = vld [vmem:[%s2260 + $0x108] sm:$0xff]
      %v2284 = vld [vmem:[%s2260 + $0x110] sm:$0xff]
      %v2285 = vld [vmem:[%s2260 + $0x120] sm:$0xff]
      %v2286 = vld [vmem:[%s2260 + $0x128] sm:$0xff]
      %v2287 = vld [vmem:[%s2260 + $0x138] sm:$0xff]
      %v2288 = vld [vmem:[%s2260 + $0x140] sm:$0xff]
      %v2289 = vld [vmem:[%s2260 + $0x150] sm:$0xff]
      %v2290 = vld [vmem:[%s2260 + $0x158] sm:$0xff]
      %v2291 = vld [vmem:[%s2260 + $0x168] sm:$0xff]
      %v2292 = vld [vmem:[%s2260 + $0x170] sm:$0xff]
      %v2293 = vpack.c.bf16 %v2262, %v2261
      %v2294 = vpack.c.bf16 %v2264, %v2263
      %v2295 = vpack.c.bf16 %v2266, %v2265
      %v2296 = vpack.c.bf16 %v2268, %v2267
      %v2297 = vpack.c.bf16 %v2270, %v2269
      %v2298 = vpack.c.bf16 %v2272, %v2271
      %v2299 = vpack.c.bf16 %v2274, %v2273
      %v2300 = vpack.c.bf16 %v2276, %v2275
      %v2301 = vpack.c.bf16 %v2278, %v2277
      %v2302 = vpack.c.bf16 %v2280, %v2279
      %v2303 = vpack.c.bf16 %v2282, %v2281
      %v2304 = vpack.c.bf16 %v2284, %v2283
      %v2305 = vpack.c.bf16 %v2286, %v2285
      %v2306 = vpack.c.bf16 %v2288, %v2287
      %v2307 = vpack.c.bf16 %v2290, %v2289
      %v2308 = vpack.c.bf16 %v2292, %v2291
      %s2309 = scalar_lea.vmem %s3, 96
      %v2310 = vld [vmem:[%s2309] sm:$0xf]
      %v2311 = vld [vmem:[%s2309 + $0x4] sm:$0xf]
      %v2312 = vld [vmem:[%s2309 + $0x8] sm:$0xf]
      %v2313 = vld [vmem:[%s2309 + $0xc] sm:$0xf]
      %v2318 = vunpack.c.l.b16 %v2310
      %v2319 = vunpack.c.l.b16 %v2311
      %v2320 = vunpack.c.l.b16 %v2312
      %v2321 = vunpack.c.l.b16 %v2313
      %v2322 = vpack.c.b16 %v2319, %v2318
      %v2323 = vpack.c.b16 %v2321, %v2320
      %v2327 = vsel %vm240, %v2293, 0
      %v2330 = vsel %vm240, %v2294, 0
      %v2333 = vsel %vm240, %v2295, 0
      %v2336 = vsel %vm240, %v2296, 0
      %v2339 = vsel %vm240, %v2297, 0
      %v2342 = vsel %vm240, %v2298, 0
      %v2345 = vsel %vm240, %v2299, 0
      %v2348 = vsel %vm240, %v2300, 0
      %v2351 = vsel %vm240, %v2301, 0
      %v2354 = vsel %vm240, %v2302, 0
      %v2357 = vsel %vm240, %v2303, 0
      %v2360 = vsel %vm240, %v2304, 0
      %v2363 = vsel %vm240, %v2305, 0
      %v2366 = vsel %vm240, %v2306, 0
      %v2369 = vsel %vm240, %v2307, 0
      %v2372 = vsel %vm240, %v2308, 0
      %2374 = vmatprep.subr.bf16.mxu0 0
      %2375 = vmatpush1.bf16.msra.mxu0 0
      %2376 = vmatprep.subr.bf16.mxu0 0
      %2377 = vmatpush1.bf16.msra.mxu0 0
      %2378 = vmatprep.subr.bf16.mxu0 0
      %2379 = vmatpush1.bf16.msra.mxu0 0
      %2380 = vmatprep.subr.bf16.mxu0 0
      %2381 = vmatpush1.bf16.msra.mxu0 0
      %2382 = vmatprep.subr.bf16.mxu0 0
      %2383 = vmatpush1.bf16.msra.mxu0 0
      %2384 = vmatprep.subr.bf16.mxu0 0
      %2385 = vmatpush1.bf16.msra.mxu0 0
      %2386 = vmatprep.subr.bf16.mxu0 0
      %2387 = vmatpush1.bf16.msra.mxu0 %v2323
      %2388 = vmatprep.subr.bf16.mxu0 0
      %2389 = vmatpush1.bf16.msra.mxu0 %v2322
      %2390 = vmatprep.subr.bf16.mxu0 0
      %2391 = vmatpush2.bf16.msra.mxu0 0
      %2392 = vmatprep.subr.bf16.mxu0 0
      %2393 = vmatpush2.bf16.msra.mxu0 0
      %2394 = vmatprep.subr.bf16.mxu0 0
      %2395 = vmatpush2.bf16.msra.mxu0 0
      %2396 = vmatprep.subr.bf16.mxu0 0
      %2397 = vmatpush2.bf16.msra.mxu0 0
      %2398 = vmatprep.subr.bf16.mxu0 0
      %2399 = vmatpush2.bf16.msra.mxu0 0
      %2400 = vmatprep.subr.bf16.mxu0 0
      %2401 = vmatpush2.bf16.msra.mxu0 0
      %2402 = vmatprep.subr.bf16.mxu0 0
      %2403 = vmatpush2.bf16.msra.mxu0 0
      %2404 = vmatprep.subr.bf16.mxu0 0
      %2405 = vmatpush2.bf16.msra.mxu0 0
      %2406 = vmatprep.mubr.bf16.mxu0 0
      %2407 = vmatmul.mubr.bf16.gmra.mxu0 %v2327
      %v2408 = vpop.f32.mrf.mxu0
      %v2409 = vadd.f32 0.0, %v2408
      %v2410 = vpop.f32.mrf.mxu0
      %v2411 = vpop.f32.mrf.mxu0
      %v2412 = vadd.f32 0.0, %v2411
      %v2413 = vpop.f32.mrf.mxu0
      %2414 = vmatprep.mubr.bf16.mxu0 0
      %2415 = vmatmul.mubr.bf16.gmra.mxu0 %v2330
      %v2416 = vpop.f32.mrf.mxu0
      %v2417 = vadd.f32 0.0, %v2416
      %v2418 = vpop.f32.mrf.mxu0
      %v2419 = vpop.f32.mrf.mxu0
      %v2420 = vadd.f32 0.0, %v2419
      %v2421 = vpop.f32.mrf.mxu0
      %2422 = vmatprep.mubr.bf16.mxu0 0
      %2423 = vmatmul.mubr.bf16.gmra.mxu0 %v2333
      %v2424 = vpop.f32.mrf.mxu0
      %v2425 = vadd.f32 0.0, %v2424
      %v2426 = vpop.f32.mrf.mxu0
      %v2427 = vpop.f32.mrf.mxu0
      %v2428 = vadd.f32 0.0, %v2427
      %v2429 = vpop.f32.mrf.mxu0
      %2430 = vmatprep.mubr.bf16.mxu0 0
      %2431 = vmatmul.mubr.bf16.gmra.mxu0 %v2336
      %v2432 = vpop.f32.mrf.mxu0
      %v2433 = vadd.f32 0.0, %v2432
      %v2434 = vpop.f32.mrf.mxu0
      %v2435 = vpop.f32.mrf.mxu0
      %v2436 = vadd.f32 0.0, %v2435
      %v2437 = vpop.f32.mrf.mxu0
      %2438 = vmatprep.mubr.bf16.mxu0 0
      %2439 = vmatmul.mubr.bf16.gmra.mxu0 %v2339
      %v2440 = vpop.f32.mrf.mxu0
      %v2441 = vadd.f32 0.0, %v2440
      %v2442 = vpop.f32.mrf.mxu0
      %v2443 = vpop.f32.mrf.mxu0
      %v2444 = vadd.f32 0.0, %v2443
      %v2445 = vpop.f32.mrf.mxu0
      %2446 = vmatprep.mubr.bf16.mxu0 0
      %2447 = vmatmul.mubr.bf16.gmra.mxu0 %v2342
      %v2448 = vpop.f32.mrf.mxu0
      %v2449 = vadd.f32 0.0, %v2448
      %v2450 = vpop.f32.mrf.mxu0
      %v2451 = vpop.f32.mrf.mxu0
      %v2452 = vadd.f32 0.0, %v2451
      %v2453 = vpop.f32.mrf.mxu0
      %2454 = vmatprep.mubr.bf16.mxu0 0
      %2455 = vmatmul.mubr.bf16.gmra.mxu0 %v2345
      %v2456 = vpop.f32.mrf.mxu0
      %v2457 = vadd.f32 0.0, %v2456
      %v2458 = vpop.f32.mrf.mxu0
      %v2459 = vpop.f32.mrf.mxu0
      %v2460 = vadd.f32 0.0, %v2459
      %v2461 = vpop.f32.mrf.mxu0
      %2462 = vmatprep.mubr.bf16.mxu0 0
      %2463 = vmatmul.mubr.bf16.gmra.mxu0 %v2348
      %v2464 = vpop.f32.mrf.mxu0
      %v2465 = vadd.f32 0.0, %v2464
      %v2466 = vpop.f32.mrf.mxu0
      %v2467 = vpop.f32.mrf.mxu0
      %v2468 = vadd.f32 0.0, %v2467
      %v2469 = vpop.f32.mrf.mxu0
      %2470 = vmatprep.mubr.bf16.mxu0 0
      %2471 = vmatmul.mubr.bf16.gmra.mxu0 %v2351
      %v2472 = vpop.f32.mrf.mxu0
      %v2473 = vadd.f32 0.0, %v2472
      %v2474 = vpop.f32.mrf.mxu0
      %v2475 = vpop.f32.mrf.mxu0
      %v2476 = vadd.f32 0.0, %v2475
      %v2477 = vpop.f32.mrf.mxu0
      %2478 = vmatprep.mubr.bf16.mxu0 0
      %2479 = vmatmul.mubr.bf16.gmra.mxu0 %v2354
      %v2480 = vpop.f32.mrf.mxu0
      %v2481 = vadd.f32 0.0, %v2480
      %v2482 = vpop.f32.mrf.mxu0
      %v2483 = vpop.f32.mrf.mxu0
      %v2484 = vadd.f32 0.0, %v2483
      %v2485 = vpop.f32.mrf.mxu0
      %2486 = vmatprep.mubr.bf16.mxu0 0
      %2487 = vmatmul.mubr.bf16.gmra.mxu0 %v2357
      %v2488 = vpop.f32.mrf.mxu0
      %v2489 = vadd.f32 0.0, %v2488
      %v2490 = vpop.f32.mrf.mxu0
      %v2491 = vpop.f32.mrf.mxu0
      %v2492 = vadd.f32 0.0, %v2491
      %v2493 = vpop.f32.mrf.mxu0
      %2494 = vmatprep.mubr.bf16.mxu0 0
      %2495 = vmatmul.mubr.bf16.gmra.mxu0 %v2360
      %v2496 = vpop.f32.mrf.mxu0
      %v2497 = vadd.f32 0.0, %v2496
      %v2498 = vpop.f32.mrf.mxu0
      %v2499 = vpop.f32.mrf.mxu0
      %v2500 = vadd.f32 0.0, %v2499
      %v2501 = vpop.f32.mrf.mxu0
      %2502 = vmatprep.mubr.bf16.mxu0 0
      %2503 = vmatmul.mubr.bf16.gmra.mxu0 %v2363
      %v2504 = vpop.f32.mrf.mxu0
      %v2505 = vadd.f32 0.0, %v2504
      %v2506 = vpop.f32.mrf.mxu0
      %v2507 = vpop.f32.mrf.mxu0
      %v2508 = vadd.f32 0.0, %v2507
      %v2509 = vpop.f32.mrf.mxu0
      %2510 = vmatprep.mubr.bf16.mxu0 0
      %2511 = vmatmul.mubr.bf16.gmra.mxu0 %v2366
      %v2512 = vpop.f32.mrf.mxu0
      %v2513 = vadd.f32 0.0, %v2512
      %v2514 = vpop.f32.mrf.mxu0
      %v2515 = vpop.f32.mrf.mxu0
      %v2516 = vadd.f32 0.0, %v2515
      %v2517 = vpop.f32.mrf.mxu0
      %2518 = vmatprep.mubr.bf16.mxu0 0
      %2519 = vmatmul.mubr.bf16.gmra.mxu0 %v2369
      %v2520 = vpop.f32.mrf.mxu0
      %v2521 = vadd.f32 0.0, %v2520
      %v2522 = vpop.f32.mrf.mxu0
      %v2523 = vpop.f32.mrf.mxu0
      %v2524 = vadd.f32 0.0, %v2523
      %v2525 = vpop.f32.mrf.mxu0
      %2526 = vmatprep.mubr.bf16.mxu0 0
      %2527 = vmatmul.mubr.bf16.gmra.mxu0 %v2372
      %v2528 = vpop.f32.mrf.mxu0
      %v2529 = vadd.f32 0.0, %v2528
      %v2530 = vpop.f32.mrf.mxu0
      %v2531 = vpop.f32.mrf.mxu0
      %v2532 = vadd.f32 0.0, %v2531
      %v2533 = vpop.f32.mrf.mxu0
      %2534 = vdwg.mxu0
      %v2535 = vadd.f32 %v2228, %v2409
      %v2536 = vadd.f32 %v2229, %v2412
      %v2537 = vadd.f32 %v2230, %v2417
      %v2538 = vadd.f32 %v2231, %v2420
      %v2539 = vadd.f32 %v2232, %v2425
      %v2540 = vadd.f32 %v2233, %v2428
      %v2541 = vadd.f32 %v2234, %v2433
      %v2542 = vadd.f32 %v2235, %v2436
      %v2543 = vadd.f32 %v2236, %v2441
      %v2544 = vadd.f32 %v2237, %v2444
      %v2545 = vadd.f32 %v2238, %v2449
      %v2546 = vadd.f32 %v2239, %v2452
      %v2547 = vadd.f32 %v2240, %v2457
      %v2548 = vadd.f32 %v2241, %v2460
      %v2549 = vadd.f32 %v2242, %v2465
      %v2550 = vadd.f32 %v2243, %v2468
      %v2551 = vadd.f32 %v2244, %v2473
      %v2552 = vadd.f32 %v2245, %v2476
      %v2553 = vadd.f32 %v2246, %v2481
      %v2554 = vadd.f32 %v2247, %v2484
      %v2555 = vadd.f32 %v2248, %v2489
      %v2556 = vadd.f32 %v2249, %v2492
      %v2557 = vadd.f32 %v2250, %v2497
      %v2558 = vadd.f32 %v2251, %v2500
      %v2559 = vadd.f32 %v2252, %v2505
      %v2560 = vadd.f32 %v2253, %v2508
      %v2561 = vadd.f32 %v2254, %v2513
      %v2562 = vadd.f32 %v2255, %v2516
      %v2563 = vadd.f32 %v2256, %v2521
      %v2564 = vadd.f32 %v2257, %v2524
      %v2565 = vadd.f32 %v2258, %v2529
      %v2566 = vadd.f32 %v2259, %v2532
      %v2567 = vld [vmem:[%s2260 + $0x1] sm:$0xff]
      %v2568 = vld [vmem:[%s2260 + $0x9] sm:$0xff]
      %v2569 = vld [vmem:[%s2260 + $0x19] sm:$0xff]
      %v2570 = vld [vmem:[%s2260 + $0x21] sm:$0xff]
      %v2571 = vld [vmem:[%s2260 + $0x31] sm:$0xff]
      %v2572 = vld [vmem:[%s2260 + $0x39] sm:$0xff]
      %v2573 = vld [vmem:[%s2260 + $0x49] sm:$0xff]
      %v2574 = vld [vmem:[%s2260 + $0x51] sm:$0xff]
      %v2575 = vld [vmem:[%s2260 + $0x61] sm:$0xff]
      %v2576 = vld [vmem:[%s2260 + $0x69] sm:$0xff]
      %v2577 = vld [vmem:[%s2260 + $0x79] sm:$0xff]
      %v2578 = vld [vmem:[%s2260 + $0x81] sm:$0xff]
      %v2579 = vld [vmem:[%s2260 + $0x91] sm:$0xff]
      %v2580 = vld [vmem:[%s2260 + $0x99] sm:$0xff]
      %v2581 = vld [vmem:[%s2260 + $0xa9] sm:$0xff]
      %v2582 = vld [vmem:[%s2260 + $0xb1] sm:$0xff]
      %v2583 = vld [vmem:[%s2260 + $0xc1] sm:$0xff]
      %v2584 = vld [vmem:[%s2260 + $0xc9] sm:$0xff]
      %v2585 = vld [vmem:[%s2260 + $0xd9] sm:$0xff]
      %v2586 = vld [vmem:[%s2260 + $0xe1] sm:$0xff]
      %v2587 = vld [vmem:[%s2260 + $0xf1] sm:$0xff]
      %v2588 = vld [vmem:[%s2260 + $0xf9] sm:$0xff]
      %v2589 = vld [vmem:[%s2260 + $0x109] sm:$0xff]
      %v2590 = vld [vmem:[%s2260 + $0x111] sm:$0xff]
      %v2591 = vld [vmem:[%s2260 + $0x121] sm:$0xff]
      %v2592 = vld [vmem:[%s2260 + $0x129] sm:$0xff]
      %v2593 = vld [vmem:[%s2260 + $0x139] sm:$0xff]
      %v2594 = vld [vmem:[%s2260 + $0x141] sm:$0xff]
      %v2595 = vld [vmem:[%s2260 + $0x151] sm:$0xff]
      %v2596 = vld [vmem:[%s2260 + $0x159] sm:$0xff]
      %v2597 = vld [vmem:[%s2260 + $0x169] sm:$0xff]
      %v2598 = vld [vmem:[%s2260 + $0x171] sm:$0xff]
      %v2599 = vpack.c.bf16 %v2568, %v2567
      %v2600 = vpack.c.bf16 %v2570, %v2569
      %v2601 = vpack.c.bf16 %v2572, %v2571
      %v2602 = vpack.c.bf16 %v2574, %v2573
      %v2603 = vpack.c.bf16 %v2576, %v2575
      %v2604 = vpack.c.bf16 %v2578, %v2577
      %v2605 = vpack.c.bf16 %v2580, %v2579
      %v2606 = vpack.c.bf16 %v2582, %v2581
      %v2607 = vpack.c.bf16 %v2584, %v2583
      %v2608 = vpack.c.bf16 %v2586, %v2585
      %v2609 = vpack.c.bf16 %v2588, %v2587
      %v2610 = vpack.c.bf16 %v2590, %v2589
      %v2611 = vpack.c.bf16 %v2592, %v2591
      %v2612 = vpack.c.bf16 %v2594, %v2593
      %v2613 = vpack.c.bf16 %v2596, %v2595
      %v2614 = vpack.c.bf16 %v2598, %v2597
      %s2615 = scalar_lea.vmem %s3, 112
      %v2616 = vld [vmem:[%s2615] sm:$0xf]
      %v2617 = vld [vmem:[%s2615 + $0x4] sm:$0xf]
      %v2618 = vld [vmem:[%s2615 + $0x8] sm:$0xf]
      %v2619 = vld [vmem:[%s2615 + $0xc] sm:$0xf]
      %v2624 = vunpack.c.l.b16 %v2616
      %v2625 = vunpack.c.l.b16 %v2617
      %v2626 = vunpack.c.l.b16 %v2618
      %v2627 = vunpack.c.l.b16 %v2619
      %v2628 = vpack.c.b16 %v2625, %v2624
      %v2629 = vpack.c.b16 %v2627, %v2626
      %v2633 = vsel %vm240, %v2599, 0
      %v2636 = vsel %vm240, %v2600, 0
      %v2639 = vsel %vm240, %v2601, 0
      %v2642 = vsel %vm240, %v2602, 0
      %v2645 = vsel %vm240, %v2603, 0
      %v2648 = vsel %vm240, %v2604, 0
      %v2651 = vsel %vm240, %v2605, 0
      %v2654 = vsel %vm240, %v2606, 0
      %v2657 = vsel %vm240, %v2607, 0
      %v2660 = vsel %vm240, %v2608, 0
      %v2663 = vsel %vm240, %v2609, 0
      %v2666 = vsel %vm240, %v2610, 0
      %v2669 = vsel %vm240, %v2611, 0
      %v2672 = vsel %vm240, %v2612, 0
      %v2675 = vsel %vm240, %v2613, 0
      %v2678 = vsel %vm240, %v2614, 0
      %2680 = vmatprep.subr.bf16.mxu0 0
      %2681 = vmatpush1.bf16.msra.mxu0 0
      %2682 = vmatprep.subr.bf16.mxu0 0
      %2683 = vmatpush1.bf16.msra.mxu0 0
      %2684 = vmatprep.subr.bf16.mxu0 0
      %2685 = vmatpush1.bf16.msra.mxu0 0
      %2686 = vmatprep.subr.bf16.mxu0 0
      %2687 = vmatpush1.bf16.msra.mxu0 0
      %2688 = vmatprep.subr.bf16.mxu0 0
      %2689 = vmatpush1.bf16.msra.mxu0 0
      %2690 = vmatprep.subr.bf16.mxu0 0
      %2691 = vmatpush1.bf16.msra.mxu0 0
      %2692 = vmatprep.subr.bf16.mxu0 0
      %2693 = vmatpush1.bf16.msra.mxu0 %v2629
      %2694 = vmatprep.subr.bf16.mxu0 0
      %2695 = vmatpush1.bf16.msra.mxu0 %v2628
      %2696 = vmatprep.subr.bf16.mxu0 0
      %2697 = vmatpush2.bf16.msra.mxu0 0
      %2698 = vmatprep.subr.bf16.mxu0 0
      %2699 = vmatpush2.bf16.msra.mxu0 0
      %2700 = vmatprep.subr.bf16.mxu0 0
      %2701 = vmatpush2.bf16.msra.mxu0 0
      %2702 = vmatprep.subr.bf16.mxu0 0
      %2703 = vmatpush2.bf16.msra.mxu0 0
      %2704 = vmatprep.subr.bf16.mxu0 0
      %2705 = vmatpush2.bf16.msra.mxu0 0
      %2706 = vmatprep.subr.bf16.mxu0 0
      %2707 = vmatpush2.bf16.msra.mxu0 0
      %2708 = vmatprep.subr.bf16.mxu0 0
      %2709 = vmatpush2.bf16.msra.mxu0 0
      %2710 = vmatprep.subr.bf16.mxu0 0
      %2711 = vmatpush2.bf16.msra.mxu0 0
      %2712 = vmatprep.mubr.bf16.mxu0 0
      %2713 = vmatmul.mubr.bf16.gmra.mxu0 %v2633
      %v2714 = vpop.f32.mrf.mxu0
      %v2715 = vadd.f32 0.0, %v2714
      %v2716 = vpop.f32.mrf.mxu0
      %v2717 = vpop.f32.mrf.mxu0
      %v2718 = vadd.f32 0.0, %v2717
      %v2719 = vpop.f32.mrf.mxu0
      %2720 = vmatprep.mubr.bf16.mxu0 0
      %2721 = vmatmul.mubr.bf16.gmra.mxu0 %v2636
      %v2722 = vpop.f32.mrf.mxu0
      %v2723 = vadd.f32 0.0, %v2722
      %v2724 = vpop.f32.mrf.mxu0
      %v2725 = vpop.f32.mrf.mxu0
      %v2726 = vadd.f32 0.0, %v2725
      %v2727 = vpop.f32.mrf.mxu0
      %2728 = vmatprep.mubr.bf16.mxu0 0
      %2729 = vmatmul.mubr.bf16.gmra.mxu0 %v2639
      %v2730 = vpop.f32.mrf.mxu0
      %v2731 = vadd.f32 0.0, %v2730
      %v2732 = vpop.f32.mrf.mxu0
      %v2733 = vpop.f32.mrf.mxu0
      %v2734 = vadd.f32 0.0, %v2733
      %v2735 = vpop.f32.mrf.mxu0
      %2736 = vmatprep.mubr.bf16.mxu0 0
      %2737 = vmatmul.mubr.bf16.gmra.mxu0 %v2642
      %v2738 = vpop.f32.mrf.mxu0
      %v2739 = vadd.f32 0.0, %v2738
      %v2740 = vpop.f32.mrf.mxu0
      %v2741 = vpop.f32.mrf.mxu0
      %v2742 = vadd.f32 0.0, %v2741
      %v2743 = vpop.f32.mrf.mxu0
      %2744 = vmatprep.mubr.bf16.mxu0 0
      %2745 = vmatmul.mubr.bf16.gmra.mxu0 %v2645
      %v2746 = vpop.f32.mrf.mxu0
      %v2747 = vadd.f32 0.0, %v2746
      %v2748 = vpop.f32.mrf.mxu0
      %v2749 = vpop.f32.mrf.mxu0
      %v2750 = vadd.f32 0.0, %v2749
      %v2751 = vpop.f32.mrf.mxu0
      %2752 = vmatprep.mubr.bf16.mxu0 0
      %2753 = vmatmul.mubr.bf16.gmra.mxu0 %v2648
      %v2754 = vpop.f32.mrf.mxu0
      %v2755 = vadd.f32 0.0, %v2754
      %v2756 = vpop.f32.mrf.mxu0
      %v2757 = vpop.f32.mrf.mxu0
      %v2758 = vadd.f32 0.0, %v2757
      %v2759 = vpop.f32.mrf.mxu0
      %2760 = vmatprep.mubr.bf16.mxu0 0
      %2761 = vmatmul.mubr.bf16.gmra.mxu0 %v2651
      %v2762 = vpop.f32.mrf.mxu0
      %v2763 = vadd.f32 0.0, %v2762
      %v2764 = vpop.f32.mrf.mxu0
      %v2765 = vpop.f32.mrf.mxu0
      %v2766 = vadd.f32 0.0, %v2765
      %v2767 = vpop.f32.mrf.mxu0
      %2768 = vmatprep.mubr.bf16.mxu0 0
      %2769 = vmatmul.mubr.bf16.gmra.mxu0 %v2654
      %v2770 = vpop.f32.mrf.mxu0
      %v2771 = vadd.f32 0.0, %v2770
      %v2772 = vpop.f32.mrf.mxu0
      %v2773 = vpop.f32.mrf.mxu0
      %v2774 = vadd.f32 0.0, %v2773
      %v2775 = vpop.f32.mrf.mxu0
      %2776 = vmatprep.mubr.bf16.mxu0 0
      %2777 = vmatmul.mubr.bf16.gmra.mxu0 %v2657
      %v2778 = vpop.f32.mrf.mxu0
      %v2779 = vadd.f32 0.0, %v2778
      %v2780 = vpop.f32.mrf.mxu0
      %v2781 = vpop.f32.mrf.mxu0
      %v2782 = vadd.f32 0.0, %v2781
      %v2783 = vpop.f32.mrf.mxu0
      %2784 = vmatprep.mubr.bf16.mxu0 0
      %2785 = vmatmul.mubr.bf16.gmra.mxu0 %v2660
      %v2786 = vpop.f32.mrf.mxu0
      %v2787 = vadd.f32 0.0, %v2786
      %v2788 = vpop.f32.mrf.mxu0
      %v2789 = vpop.f32.mrf.mxu0
      %v2790 = vadd.f32 0.0, %v2789
      %v2791 = vpop.f32.mrf.mxu0
      %2792 = vmatprep.mubr.bf16.mxu0 0
      %2793 = vmatmul.mubr.bf16.gmra.mxu0 %v2663
      %v2794 = vpop.f32.mrf.mxu0
      %v2795 = vadd.f32 0.0, %v2794
      %v2796 = vpop.f32.mrf.mxu0
      %v2797 = vpop.f32.mrf.mxu0
      %v2798 = vadd.f32 0.0, %v2797
      %v2799 = vpop.f32.mrf.mxu0
      %2800 = vmatprep.mubr.bf16.mxu0 0
      %2801 = vmatmul.mubr.bf16.gmra.mxu0 %v2666
      %v2802 = vpop.f32.mrf.mxu0
      %v2803 = vadd.f32 0.0, %v2802
      %v2804 = vpop.f32.mrf.mxu0
      %v2805 = vpop.f32.mrf.mxu0
      %v2806 = vadd.f32 0.0, %v2805
      %v2807 = vpop.f32.mrf.mxu0
      %2808 = vmatprep.mubr.bf16.mxu0 0
      %2809 = vmatmul.mubr.bf16.gmra.mxu0 %v2669
      %v2810 = vpop.f32.mrf.mxu0
      %v2811 = vadd.f32 0.0, %v2810
      %v2812 = vpop.f32.mrf.mxu0
      %v2813 = vpop.f32.mrf.mxu0
      %v2814 = vadd.f32 0.0, %v2813
      %v2815 = vpop.f32.mrf.mxu0
      %2816 = vmatprep.mubr.bf16.mxu0 0
      %2817 = vmatmul.mubr.bf16.gmra.mxu0 %v2672
      %v2818 = vpop.f32.mrf.mxu0
      %v2819 = vadd.f32 0.0, %v2818
      %v2820 = vpop.f32.mrf.mxu0
      %v2821 = vpop.f32.mrf.mxu0
      %v2822 = vadd.f32 0.0, %v2821
      %v2823 = vpop.f32.mrf.mxu0
      %2824 = vmatprep.mubr.bf16.mxu0 0
      %2825 = vmatmul.mubr.bf16.gmra.mxu0 %v2675
      %v2826 = vpop.f32.mrf.mxu0
      %v2827 = vadd.f32 0.0, %v2826
      %v2828 = vpop.f32.mrf.mxu0
      %v2829 = vpop.f32.mrf.mxu0
      %v2830 = vadd.f32 0.0, %v2829
      %v2831 = vpop.f32.mrf.mxu0
      %2832 = vmatprep.mubr.bf16.mxu0 0
      %2833 = vmatmul.mubr.bf16.gmra.mxu0 %v2678
      %v2834 = vpop.f32.mrf.mxu0
      %v2835 = vadd.f32 0.0, %v2834
      %v2836 = vpop.f32.mrf.mxu0
      %v2837 = vpop.f32.mrf.mxu0
      %v2838 = vadd.f32 0.0, %v2837
      %v2839 = vpop.f32.mrf.mxu0
      %2840 = vdwg.mxu0
      %v2841 = vadd.f32 %v2535, %v2715
      %v2842 = vadd.f32 %v2536, %v2718
      %v2843 = vadd.f32 %v2537, %v2723
      %v2844 = vadd.f32 %v2538, %v2726
      %v2845 = vadd.f32 %v2539, %v2731
      %v2846 = vadd.f32 %v2540, %v2734
      %v2847 = vadd.f32 %v2541, %v2739
      %v2848 = vadd.f32 %v2542, %v2742
      %v2849 = vadd.f32 %v2543, %v2747
      %v2850 = vadd.f32 %v2544, %v2750
      %v2851 = vadd.f32 %v2545, %v2755
      %v2852 = vadd.f32 %v2546, %v2758
      %v2853 = vadd.f32 %v2547, %v2763
      %v2854 = vadd.f32 %v2548, %v2766
      %v2855 = vadd.f32 %v2549, %v2771
      %v2856 = vadd.f32 %v2550, %v2774
      %v2857 = vadd.f32 %v2551, %v2779
      %v2858 = vadd.f32 %v2552, %v2782
      %v2859 = vadd.f32 %v2553, %v2787
      %v2860 = vadd.f32 %v2554, %v2790
      %v2861 = vadd.f32 %v2555, %v2795
      %v2862 = vadd.f32 %v2556, %v2798
      %v2863 = vadd.f32 %v2557, %v2803
      %v2864 = vadd.f32 %v2558, %v2806
      %v2865 = vadd.f32 %v2559, %v2811
      %v2866 = vadd.f32 %v2560, %v2814
      %v2867 = vadd.f32 %v2561, %v2819
      %v2868 = vadd.f32 %v2562, %v2822
      %v2869 = vadd.f32 %v2563, %v2827
      %v2870 = vadd.f32 %v2564, %v2830
      %v2871 = vadd.f32 %v2565, %v2835
      %v2872 = vadd.f32 %v2566, %v2838
      %v2873 = vld [vmem:[%s2260 + $0x2] sm:$0xff]
      %v2874 = vld [vmem:[%s2260 + $0xa] sm:$0xff]
      %v2875 = vld [vmem:[%s2260 + $0x1a] sm:$0xff]
      %v2876 = vld [vmem:[%s2260 + $0x22] sm:$0xff]
      %v2877 = vld [vmem:[%s2260 + $0x32] sm:$0xff]
      %v2878 = vld [vmem:[%s2260 + $0x3a] sm:$0xff]
      %v2879 = vld [vmem:[%s2260 + $0x4a] sm:$0xff]
      %v2880 = vld [vmem:[%s2260 + $0x52] sm:$0xff]
      %v2881 = vld [vmem:[%s2260 + $0x62] sm:$0xff]
      %v2882 = vld [vmem:[%s2260 + $0x6a] sm:$0xff]
      %v2883 = vld [vmem:[%s2260 + $0x7a] sm:$0xff]
      %v2884 = vld [vmem:[%s2260 + $0x82] sm:$0xff]
      %v2885 = vld [vmem:[%s2260 + $0x92] sm:$0xff]
      %v2886 = vld [vmem:[%s2260 + $0x9a] sm:$0xff]
      %v2887 = vld [vmem:[%s2260 + $0xaa] sm:$0xff]
      %v2888 = vld [vmem:[%s2260 + $0xb2] sm:$0xff]
      %v2889 = vld [vmem:[%s2260 + $0xc2] sm:$0xff]
      %v2890 = vld [vmem:[%s2260 + $0xca] sm:$0xff]
      %v2891 = vld [vmem:[%s2260 + $0xda] sm:$0xff]
      %v2892 = vld [vmem:[%s2260 + $0xe2] sm:$0xff]
      %v2893 = vld [vmem:[%s2260 + $0xf2] sm:$0xff]
      %v2894 = vld [vmem:[%s2260 + $0xfa] sm:$0xff]
      %v2895 = vld [vmem:[%s2260 + $0x10a] sm:$0xff]
      %v2896 = vld [vmem:[%s2260 + $0x112] sm:$0xff]
      %v2897 = vld [vmem:[%s2260 + $0x122] sm:$0xff]
      %v2898 = vld [vmem:[%s2260 + $0x12a] sm:$0xff]
      %v2899 = vld [vmem:[%s2260 + $0x13a] sm:$0xff]
      %v2900 = vld [vmem:[%s2260 + $0x142] sm:$0xff]
      %v2901 = vld [vmem:[%s2260 + $0x152] sm:$0xff]
      %v2902 = vld [vmem:[%s2260 + $0x15a] sm:$0xff]
      %v2903 = vld [vmem:[%s2260 + $0x16a] sm:$0xff]
      %v2904 = vld [vmem:[%s2260 + $0x172] sm:$0xff]
      %v2905 = vpack.c.bf16 %v2874, %v2873
      %v2906 = vpack.c.bf16 %v2876, %v2875
      %v2907 = vpack.c.bf16 %v2878, %v2877
      %v2908 = vpack.c.bf16 %v2880, %v2879
      %v2909 = vpack.c.bf16 %v2882, %v2881
      %v2910 = vpack.c.bf16 %v2884, %v2883
      %v2911 = vpack.c.bf16 %v2886, %v2885
      %v2912 = vpack.c.bf16 %v2888, %v2887
      %v2913 = vpack.c.bf16 %v2890, %v2889
      %v2914 = vpack.c.bf16 %v2892, %v2891
      %v2915 = vpack.c.bf16 %v2894, %v2893
      %v2916 = vpack.c.bf16 %v2896, %v2895
      %v2917 = vpack.c.bf16 %v2898, %v2897
      %v2918 = vpack.c.bf16 %v2900, %v2899
      %v2919 = vpack.c.bf16 %v2902, %v2901
      %v2920 = vpack.c.bf16 %v2904, %v2903
      %s2921 = scalar_lea.vmem %s3, 128
      %v2922 = vld [vmem:[%s2921] sm:$0xf]
      %v2923 = vld [vmem:[%s2921 + $0x4] sm:$0xf]
      %v2924 = vld [vmem:[%s2921 + $0x8] sm:$0xf]
      %v2925 = vld [vmem:[%s2921 + $0xc] sm:$0xf]
      %v2930 = vunpack.c.l.b16 %v2922
      %v2931 = vunpack.c.l.b16 %v2923
      %v2932 = vunpack.c.l.b16 %v2924
      %v2933 = vunpack.c.l.b16 %v2925
      %v2934 = vpack.c.b16 %v2931, %v2930
      %v2935 = vpack.c.b16 %v2933, %v2932
      %v2939 = vsel %vm240, %v2905, 0
      %v2942 = vsel %vm240, %v2906, 0
      %v2945 = vsel %vm240, %v2907, 0
      %v2948 = vsel %vm240, %v2908, 0
      %v2951 = vsel %vm240, %v2909, 0
      %v2954 = vsel %vm240, %v2910, 0
      %v2957 = vsel %vm240, %v2911, 0
      %v2960 = vsel %vm240, %v2912, 0
      %v2963 = vsel %vm240, %v2913, 0
      %v2966 = vsel %vm240, %v2914, 0
      %v2969 = vsel %vm240, %v2915, 0
      %v2972 = vsel %vm240, %v2916, 0
      %v2975 = vsel %vm240, %v2917, 0
      %v2978 = vsel %vm240, %v2918, 0
      %v2981 = vsel %vm240, %v2919, 0
      %v2984 = vsel %vm240, %v2920, 0
      %2986 = vmatprep.subr.bf16.mxu0 0
      %2987 = vmatpush1.bf16.msra.mxu0 0
      %2988 = vmatprep.subr.bf16.mxu0 0
      %2989 = vmatpush1.bf16.msra.mxu0 0
      %2990 = vmatprep.subr.bf16.mxu0 0
      %2991 = vmatpush1.bf16.msra.mxu0 0
      %2992 = vmatprep.subr.bf16.mxu0 0
      %2993 = vmatpush1.bf16.msra.mxu0 0
      %2994 = vmatprep.subr.bf16.mxu0 0
      %2995 = vmatpush1.bf16.msra.mxu0 0
      %2996 = vmatprep.subr.bf16.mxu0 0
      %2997 = vmatpush1.bf16.msra.mxu0 0
      %2998 = vmatprep.subr.bf16.mxu0 0
      %2999 = vmatpush1.bf16.msra.mxu0 %v2935
      %3000 = vmatprep.subr.bf16.mxu0 0
      %3001 = vmatpush1.bf16.msra.mxu0 %v2934
      %3002 = vmatprep.subr.bf16.mxu0 0
      %3003 = vmatpush2.bf16.msra.mxu0 0
      %3004 = vmatprep.subr.bf16.mxu0 0
      %3005 = vmatpush2.bf16.msra.mxu0 0
      %3006 = vmatprep.subr.bf16.mxu0 0
      %3007 = vmatpush2.bf16.msra.mxu0 0
      %3008 = vmatprep.subr.bf16.mxu0 0
      %3009 = vmatpush2.bf16.msra.mxu0 0
      %3010 = vmatprep.subr.bf16.mxu0 0
      %3011 = vmatpush2.bf16.msra.mxu0 0
      %3012 = vmatprep.subr.bf16.mxu0 0
      %3013 = vmatpush2.bf16.msra.mxu0 0
      %3014 = vmatprep.subr.bf16.mxu0 0
      %3015 = vmatpush2.bf16.msra.mxu0 0
      %3016 = vmatprep.subr.bf16.mxu0 0
      %3017 = vmatpush2.bf16.msra.mxu0 0
      %3018 = vmatprep.mubr.bf16.mxu0 0
      %3019 = vmatmul.mubr.bf16.gmra.mxu0 %v2939
      %v3020 = vpop.f32.mrf.mxu0
      %v3021 = vadd.f32 0.0, %v3020
      %v3022 = vpop.f32.mrf.mxu0
      %v3023 = vpop.f32.mrf.mxu0
      %v3024 = vadd.f32 0.0, %v3023
      %v3025 = vpop.f32.mrf.mxu0
      %3026 = vmatprep.mubr.bf16.mxu0 0
      %3027 = vmatmul.mubr.bf16.gmra.mxu0 %v2942
      %v3028 = vpop.f32.mrf.mxu0
      %v3029 = vadd.f32 0.0, %v3028
      %v3030 = vpop.f32.mrf.mxu0
      %v3031 = vpop.f32.mrf.mxu0
      %v3032 = vadd.f32 0.0, %v3031
      %v3033 = vpop.f32.mrf.mxu0
      %3034 = vmatprep.mubr.bf16.mxu0 0
      %3035 = vmatmul.mubr.bf16.gmra.mxu0 %v2945
      %v3036 = vpop.f32.mrf.mxu0
      %v3037 = vadd.f32 0.0, %v3036
      %v3038 = vpop.f32.mrf.mxu0
      %v3039 = vpop.f32.mrf.mxu0
      %v3040 = vadd.f32 0.0, %v3039
      %v3041 = vpop.f32.mrf.mxu0
      %3042 = vmatprep.mubr.bf16.mxu0 0
      %3043 = vmatmul.mubr.bf16.gmra.mxu0 %v2948
      %v3044 = vpop.f32.mrf.mxu0
      %v3045 = vadd.f32 0.0, %v3044
      %v3046 = vpop.f32.mrf.mxu0
      %v3047 = vpop.f32.mrf.mxu0
      %v3048 = vadd.f32 0.0, %v3047
      %v3049 = vpop.f32.mrf.mxu0
      %3050 = vmatprep.mubr.bf16.mxu0 0
      %3051 = vmatmul.mubr.bf16.gmra.mxu0 %v2951
      %v3052 = vpop.f32.mrf.mxu0
      %v3053 = vadd.f32 0.0, %v3052
      %v3054 = vpop.f32.mrf.mxu0
      %v3055 = vpop.f32.mrf.mxu0
      %v3056 = vadd.f32 0.0, %v3055
      %v3057 = vpop.f32.mrf.mxu0
      %3058 = vmatprep.mubr.bf16.mxu0 0
      %3059 = vmatmul.mubr.bf16.gmra.mxu0 %v2954
      %v3060 = vpop.f32.mrf.mxu0
      %v3061 = vadd.f32 0.0, %v3060
      %v3062 = vpop.f32.mrf.mxu0
      %v3063 = vpop.f32.mrf.mxu0
      %v3064 = vadd.f32 0.0, %v3063
      %v3065 = vpop.f32.mrf.mxu0
      %3066 = vmatprep.mubr.bf16.mxu0 0
      %3067 = vmatmul.mubr.bf16.gmra.mxu0 %v2957
      %v3068 = vpop.f32.mrf.mxu0
      %v3069 = vadd.f32 0.0, %v3068
      %v3070 = vpop.f32.mrf.mxu0
      %v3071 = vpop.f32.mrf.mxu0
      %v3072 = vadd.f32 0.0, %v3071
      %v3073 = vpop.f32.mrf.mxu0
      %3074 = vmatprep.mubr.bf16.mxu0 0
      %3075 = vmatmul.mubr.bf16.gmra.mxu0 %v2960
      %v3076 = vpop.f32.mrf.mxu0
      %v3077 = vadd.f32 0.0, %v3076
      %v3078 = vpop.f32.mrf.mxu0
      %v3079 = vpop.f32.mrf.mxu0
      %v3080 = vadd.f32 0.0, %v3079
      %v3081 = vpop.f32.mrf.mxu0
      %3082 = vmatprep.mubr.bf16.mxu0 0
      %3083 = vmatmul.mubr.bf16.gmra.mxu0 %v2963
      %v3084 = vpop.f32.mrf.mxu0
      %v3085 = vadd.f32 0.0, %v3084
      %v3086 = vpop.f32.mrf.mxu0
      %v3087 = vpop.f32.mrf.mxu0
      %v3088 = vadd.f32 0.0, %v3087
      %v3089 = vpop.f32.mrf.mxu0
      %3090 = vmatprep.mubr.bf16.mxu0 0
      %3091 = vmatmul.mubr.bf16.gmra.mxu0 %v2966
      %v3092 = vpop.f32.mrf.mxu0
      %v3093 = vadd.f32 0.0, %v3092
      %v3094 = vpop.f32.mrf.mxu0
      %v3095 = vpop.f32.mrf.mxu0
      %v3096 = vadd.f32 0.0, %v3095
      %v3097 = vpop.f32.mrf.mxu0
      %3098 = vmatprep.mubr.bf16.mxu0 0
      %3099 = vmatmul.mubr.bf16.gmra.mxu0 %v2969
      %v3100 = vpop.f32.mrf.mxu0
      %v3101 = vadd.f32 0.0, %v3100
      %v3102 = vpop.f32.mrf.mxu0
      %v3103 = vpop.f32.mrf.mxu0
      %v3104 = vadd.f32 0.0, %v3103
      %v3105 = vpop.f32.mrf.mxu0
      %3106 = vmatprep.mubr.bf16.mxu0 0
      %3107 = vmatmul.mubr.bf16.gmra.mxu0 %v2972
      %v3108 = vpop.f32.mrf.mxu0
      %v3109 = vadd.f32 0.0, %v3108
      %v3110 = vpop.f32.mrf.mxu0
      %v3111 = vpop.f32.mrf.mxu0
      %v3112 = vadd.f32 0.0, %v3111
      %v3113 = vpop.f32.mrf.mxu0
      %3114 = vmatprep.mubr.bf16.mxu0 0
      %3115 = vmatmul.mubr.bf16.gmra.mxu0 %v2975
      %v3116 = vpop.f32.mrf.mxu0
      %v3117 = vadd.f32 0.0, %v3116
      %v3118 = vpop.f32.mrf.mxu0
      %v3119 = vpop.f32.mrf.mxu0
      %v3120 = vadd.f32 0.0, %v3119
      %v3121 = vpop.f32.mrf.mxu0
      %3122 = vmatprep.mubr.bf16.mxu0 0
      %3123 = vmatmul.mubr.bf16.gmra.mxu0 %v2978
      %v3124 = vpop.f32.mrf.mxu0
      %v3125 = vadd.f32 0.0, %v3124
      %v3126 = vpop.f32.mrf.mxu0
      %v3127 = vpop.f32.mrf.mxu0
      %v3128 = vadd.f32 0.0, %v3127
      %v3129 = vpop.f32.mrf.mxu0
      %3130 = vmatprep.mubr.bf16.mxu0 0
      %3131 = vmatmul.mubr.bf16.gmra.mxu0 %v2981
      %v3132 = vpop.f32.mrf.mxu0
      %v3133 = vadd.f32 0.0, %v3132
      %v3134 = vpop.f32.mrf.mxu0
      %v3135 = vpop.f32.mrf.mxu0
      %v3136 = vadd.f32 0.0, %v3135
      %v3137 = vpop.f32.mrf.mxu0
      %3138 = vmatprep.mubr.bf16.mxu0 0
      %3139 = vmatmul.mubr.bf16.gmra.mxu0 %v2984
      %v3140 = vpop.f32.mrf.mxu0
      %v3141 = vadd.f32 0.0, %v3140
      %v3142 = vpop.f32.mrf.mxu0
      %v3143 = vpop.f32.mrf.mxu0
      %v3144 = vadd.f32 0.0, %v3143
      %v3145 = vpop.f32.mrf.mxu0
      %3146 = vdwg.mxu0
      %v3147 = vadd.f32 %v2841, %v3021
      %v3148 = vadd.f32 %v2842, %v3024
      %v3149 = vadd.f32 %v2843, %v3029
      %v3150 = vadd.f32 %v2844, %v3032
      %v3151 = vadd.f32 %v2845, %v3037
      %v3152 = vadd.f32 %v2846, %v3040
      %v3153 = vadd.f32 %v2847, %v3045
      %v3154 = vadd.f32 %v2848, %v3048
      %v3155 = vadd.f32 %v2849, %v3053
      %v3156 = vadd.f32 %v2850, %v3056
      %v3157 = vadd.f32 %v2851, %v3061
      %v3158 = vadd.f32 %v2852, %v3064
      %v3159 = vadd.f32 %v2853, %v3069
      %v3160 = vadd.f32 %v2854, %v3072
      %v3161 = vadd.f32 %v2855, %v3077
      %v3162 = vadd.f32 %v2856, %v3080
      %v3163 = vadd.f32 %v2857, %v3085
      %v3164 = vadd.f32 %v2858, %v3088
      %v3165 = vadd.f32 %v2859, %v3093
      %v3166 = vadd.f32 %v2860, %v3096
      %v3167 = vadd.f32 %v2861, %v3101
      %v3168 = vadd.f32 %v2862, %v3104
      %v3169 = vadd.f32 %v2863, %v3109
      %v3170 = vadd.f32 %v2864, %v3112
      %v3171 = vadd.f32 %v2865, %v3117
      %v3172 = vadd.f32 %v2866, %v3120
      %v3173 = vadd.f32 %v2867, %v3125
      %v3174 = vadd.f32 %v2868, %v3128
      %v3175 = vadd.f32 %v2869, %v3133
      %v3176 = vadd.f32 %v2870, %v3136
      %v3177 = vadd.f32 %v2871, %v3141
      %v3178 = vadd.f32 %v2872, %v3144
      %v3179 = vpack.c.bf16 %v3148, %v3147
      %v3180 = vpack.c.bf16 %v3150, %v3149
      %v3181 = vpack.c.bf16 %v3152, %v3151
      %v3182 = vpack.c.bf16 %v3154, %v3153
      %v3183 = vpack.c.bf16 %v3156, %v3155
      %v3184 = vpack.c.bf16 %v3158, %v3157
      %v3185 = vpack.c.bf16 %v3160, %v3159
      %v3186 = vpack.c.bf16 %v3162, %v3161
      %v3187 = vpack.c.bf16 %v3164, %v3163
      %v3188 = vpack.c.bf16 %v3166, %v3165
      %v3189 = vpack.c.bf16 %v3168, %v3167
      %v3190 = vpack.c.bf16 %v3170, %v3169
      %v3191 = vpack.c.bf16 %v3172, %v3171
      %v3192 = vpack.c.bf16 %v3174, %v3173
      %v3193 = vpack.c.bf16 %v3176, %v3175
      %v3194 = vpack.c.bf16 %v3178, %v3177
      %v3211 = vunpack.c.l.b16 %v3179
      %v3212 = vunpack.c.h.b16 %v3179
      %v3213 = vunpack.c.l.b16 %v3180
      %v3214 = vunpack.c.h.b16 %v3180
      %v3215 = vunpack.c.l.b16 %v3181
      %v3216 = vunpack.c.h.b16 %v3181
      %v3217 = vunpack.c.l.b16 %v3182
      %v3218 = vunpack.c.h.b16 %v3182
      %v3219 = vunpack.c.l.b16 %v3183
      %v3220 = vunpack.c.h.b16 %v3183
      %v3221 = vunpack.c.l.b16 %v3184
      %v3222 = vunpack.c.h.b16 %v3184
      %v3223 = vunpack.c.l.b16 %v3185
      %v3224 = vunpack.c.h.b16 %v3185
      %v3225 = vunpack.c.l.b16 %v3186
      %v3226 = vunpack.c.h.b16 %v3186
      %v3227 = vunpack.c.l.b16 %v3187
      %v3228 = vunpack.c.h.b16 %v3187
      %v3229 = vunpack.c.l.b16 %v3188
      %v3230 = vunpack.c.h.b16 %v3188
      %v3231 = vunpack.c.l.b16 %v3189
      %v3232 = vunpack.c.h.b16 %v3189
      %v3233 = vunpack.c.l.b16 %v3190
      %v3234 = vunpack.c.h.b16 %v3190
      %v3235 = vunpack.c.l.b16 %v3191
      %v3236 = vunpack.c.h.b16 %v3191
      %v3237 = vunpack.c.l.b16 %v3192
      %v3238 = vunpack.c.h.b16 %v3192
      %v3239 = vunpack.c.l.b16 %v3193
      %v3240 = vunpack.c.h.b16 %v3193
      %v3241 = vunpack.c.l.b16 %v3194
      %v3242 = vunpack.c.h.b16 %v3194
      %v3243 = vpack.c.b16 %v3211, %v3211
      %v3244 = vpack.c.b16 %v3212, %v3212
      %v3245 = vpack.c.b16 %v3213, %v3213
      %v3246 = vpack.c.b16 %v3214, %v3214
      %v3247 = vpack.c.b16 %v3215, %v3215
      %v3248 = vpack.c.b16 %v3216, %v3216
      %v3249 = vpack.c.b16 %v3217, %v3217
      %v3250 = vpack.c.b16 %v3218, %v3218
      %v3251 = vpack.c.b16 %v3219, %v3219
      %v3252 = vpack.c.b16 %v3220, %v3220
      %v3253 = vpack.c.b16 %v3221, %v3221
      %v3254 = vpack.c.b16 %v3222, %v3222
      %v3255 = vpack.c.b16 %v3223, %v3223
      %v3256 = vpack.c.b16 %v3224, %v3224
      %v3257 = vpack.c.b16 %v3225, %v3225
      %v3258 = vpack.c.b16 %v3226, %v3226
      %v3259 = vpack.c.b16 %v3227, %v3227
      %v3260 = vpack.c.b16 %v3228, %v3228
      %v3261 = vpack.c.b16 %v3229, %v3229
      %v3262 = vpack.c.b16 %v3230, %v3230
      %v3263 = vpack.c.b16 %v3231, %v3231
      %v3264 = vpack.c.b16 %v3232, %v3232
      %v3265 = vpack.c.b16 %v3233, %v3233
      %v3266 = vpack.c.b16 %v3234, %v3234
      %v3267 = vpack.c.b16 %v3235, %v3235
      %v3268 = vpack.c.b16 %v3236, %v3236
      %v3269 = vpack.c.b16 %v3237, %v3237
      %v3270 = vpack.c.b16 %v3238, %v3238
      %v3271 = vpack.c.b16 %v3239, %v3239
      %v3272 = vpack.c.b16 %v3240, %v3240
      %v3273 = vpack.c.b16 %v3241, %v3241
      %v3274 = vpack.c.b16 %v3242, %v3242
      %vm3307 = vcmask 257024
      %3308 = vst.msk [vmem:[%s233] sm:$0xf] %vm3307, %v3243
      %3309 = vst.msk [vmem:[%s233 + $0x4] sm:$0xf] %vm3307, %v3244
      %3310 = vst.msk [vmem:[%s233 + $0x8] sm:$0xf] %vm3307, %v3245
      %3311 = vst.msk [vmem:[%s233 + $0xc] sm:$0xf] %vm3307, %v3246
      %3312 = vst.msk [vmem:[%s233 + $0x10] sm:$0xf] %vm3307, %v3247
      %3313 = vst.msk [vmem:[%s233 + $0x14] sm:$0xf] %vm3307, %v3248
      %3314 = vst.msk [vmem:[%s233 + $0x18] sm:$0xf] %vm3307, %v3249
      %3315 = vst.msk [vmem:[%s233 + $0x1c] sm:$0xf] %vm3307, %v3250
      %3316 = vst.msk [vmem:[%s233 + $0x20] sm:$0xf] %vm3307, %v3251
      %3317 = vst.msk [vmem:[%s233 + $0x24] sm:$0xf] %vm3307, %v3252
      %3318 = vst.msk [vmem:[%s233 + $0x28] sm:$0xf] %vm3307, %v3253
      %3319 = vst.msk [vmem:[%s233 + $0x2c] sm:$0xf] %vm3307, %v3254
      %3320 = vst.msk [vmem:[%s233 + $0x30] sm:$0xf] %vm3307, %v3255
      %3321 = vst.msk [vmem:[%s233 + $0x34] sm:$0xf] %vm3307, %v3256
      %3322 = vst.msk [vmem:[%s233 + $0x38] sm:$0xf] %vm3307, %v3257
      %3323 = vst.msk [vmem:[%s233 + $0x3c] sm:$0xf] %vm3307, %v3258
      %3324 = vst.msk [vmem:[%s233 + $0x40] sm:$0xf] %vm3307, %v3259
      %3325 = vst.msk [vmem:[%s233 + $0x44] sm:$0xf] %vm3307, %v3260
      %3326 = vst.msk [vmem:[%s233 + $0x48] sm:$0xf] %vm3307, %v3261
      %3327 = vst.msk [vmem:[%s233 + $0x4c] sm:$0xf] %vm3307, %v3262
      %3328 = vst.msk [vmem:[%s233 + $0x50] sm:$0xf] %vm3307, %v3263
      %3329 = vst.msk [vmem:[%s233 + $0x54] sm:$0xf] %vm3307, %v3264
      %3330 = vst.msk [vmem:[%s233 + $0x58] sm:$0xf] %vm3307, %v3265
      %3331 = vst.msk [vmem:[%s233 + $0x5c] sm:$0xf] %vm3307, %v3266
      %3332 = vst.msk [vmem:[%s233 + $0x60] sm:$0xf] %vm3307, %v3267
      %3333 = vst.msk [vmem:[%s233 + $0x64] sm:$0xf] %vm3307, %v3268
      %3334 = vst.msk [vmem:[%s233 + $0x68] sm:$0xf] %vm3307, %v3269
      %3335 = vst.msk [vmem:[%s233 + $0x6c] sm:$0xf] %vm3307, %v3270
      %3336 = vst.msk [vmem:[%s233 + $0x70] sm:$0xf] %vm3307, %v3271
      %3337 = vst.msk [vmem:[%s233 + $0x74] sm:$0xf] %vm3307, %v3272
      %3338 = vst.msk [vmem:[%s233 + $0x78] sm:$0xf] %vm3307, %v3273
      %3339 = vst.msk [vmem:[%s233 + $0x7c] sm:$0xf] %vm3307, %v3274
      %v3340 = vsel %vm240, %v3147, 0.0
      %v3341 = vsel %vm240, %v3148, 0.0
      %v3342 = vadd.f32 %v3340, %v3341
      %v3343 = vsel %vm240, %v3149, 0.0
      %v3344 = vadd.f32 %v3342, %v3343
      %v3345 = vsel %vm240, %v3150, 0.0
      %v3346 = vadd.f32 %v3344, %v3345
      %v3347 = vsel %vm240, %v3151, 0.0
      %v3348 = vadd.f32 %v3346, %v3347
      %v3349 = vsel %vm240, %v3152, 0.0
      %v3350 = vadd.f32 %v3348, %v3349
      %v3351 = vsel %vm240, %v3153, 0.0
      %v3352 = vadd.f32 %v3350, %v3351
      %v3353 = vsel %vm240, %v3154, 0.0
      %v3354 = vadd.f32 %v3352, %v3353
      %v3355 = vsel %vm240, %v3155, 0.0
      %v3356 = vadd.f32 %v3354, %v3355
      %v3357 = vsel %vm240, %v3156, 0.0
      %v3358 = vadd.f32 %v3356, %v3357
      %v3359 = vsel %vm240, %v3157, 0.0
      %v3360 = vadd.f32 %v3358, %v3359
      %v3361 = vsel %vm240, %v3158, 0.0
      %v3362 = vadd.f32 %v3360, %v3361
      %v3363 = vsel %vm240, %v3159, 0.0
      %v3364 = vadd.f32 %v3362, %v3363
      %v3365 = vsel %vm240, %v3160, 0.0
      %v3366 = vadd.f32 %v3364, %v3365
      %v3367 = vsel %vm240, %v3161, 0.0
      %v3368 = vadd.f32 %v3366, %v3367
      %v3369 = vsel %vm240, %v3162, 0.0
      %v3370 = vadd.f32 %v3368, %v3369
      %v3371 = vsel %vm240, %v3163, 0.0
      %v3372 = vadd.f32 %v3370, %v3371
      %v3373 = vsel %vm240, %v3164, 0.0
      %v3374 = vadd.f32 %v3372, %v3373
      %v3375 = vsel %vm240, %v3165, 0.0
      %v3376 = vadd.f32 %v3374, %v3375
      %v3377 = vsel %vm240, %v3166, 0.0
      %v3378 = vadd.f32 %v3376, %v3377
      %v3379 = vsel %vm240, %v3167, 0.0
      %v3380 = vadd.f32 %v3378, %v3379
      %v3381 = vsel %vm240, %v3168, 0.0
      %v3382 = vadd.f32 %v3380, %v3381
      %v3383 = vsel %vm240, %v3169, 0.0
      %v3384 = vadd.f32 %v3382, %v3383
      %v3385 = vsel %vm240, %v3170, 0.0
      %v3386 = vadd.f32 %v3384, %v3385
      %v3387 = vsel %vm240, %v3171, 0.0
      %v3388 = vadd.f32 %v3386, %v3387
      %v3389 = vsel %vm240, %v3172, 0.0
      %v3390 = vadd.f32 %v3388, %v3389
      %v3391 = vsel %vm240, %v3173, 0.0
      %v3392 = vadd.f32 %v3390, %v3391
      %v3393 = vsel %vm240, %v3174, 0.0
      %v3394 = vadd.f32 %v3392, %v3393
      %v3395 = vsel %vm240, %v3175, 0.0
      %v3396 = vadd.f32 %v3394, %v3395
      %v3397 = vsel %vm240, %v3176, 0.0
      %v3398 = vadd.f32 %v3396, %v3397
      %v3399 = vsel %vm240, %v3177, 0.0
      %v3400 = vadd.f32 %v3398, %v3399
      %v3401 = vsel %vm240, %v3178, 0.0
      %v3402 = vadd.f32 %v3400, %v3401
      %v3403 = vrot.slane %v3402, 4
      %v3404 = vadd.f32 %v3402, %v3403
      %v3405 = vrot.slane %v3404, 2
      %v3406 = vadd.f32 %v3404, %v3405
      %v3407 = vrot.slane %v3406, 1
      %v3408 = vadd.f32 %v3406, %v3407
      %v3409 = vrcp.pop 256.0
      %v3410 = vmul.f32 %v3408, %v3409
      %v3411 = vsub.f32 %v3147, %v3410
      %v3412 = vsub.f32 %v3148, %v3410
      %v3413 = vsub.f32 %v3149, %v3410
      %v3414 = vsub.f32 %v3150, %v3410
      %v3415 = vsub.f32 %v3151, %v3410
      %v3416 = vsub.f32 %v3152, %v3410
      %v3417 = vsub.f32 %v3153, %v3410
      %v3418 = vsub.f32 %v3154, %v3410
      %v3419 = vsub.f32 %v3155, %v3410
      %v3420 = vsub.f32 %v3156, %v3410
      %v3421 = vsub.f32 %v3157, %v3410
      %v3422 = vsub.f32 %v3158, %v3410
      %v3423 = vsub.f32 %v3159, %v3410
      %v3424 = vsub.f32 %v3160, %v3410
      %v3425 = vsub.f32 %v3161, %v3410
      %v3426 = vsub.f32 %v3162, %v3410
      %v3427 = vsub.f32 %v3163, %v3410
      %v3428 = vsub.f32 %v3164, %v3410
      %v3429 = vsub.f32 %v3165, %v3410
      %v3430 = vsub.f32 %v3166, %v3410
      %v3431 = vsub.f32 %v3167, %v3410
      %v3432 = vsub.f32 %v3168, %v3410
      %v3433 = vsub.f32 %v3169, %v3410
      %v3434 = vsub.f32 %v3170, %v3410
      %v3435 = vsub.f32 %v3171, %v3410
      %v3436 = vsub.f32 %v3172, %v3410
      %v3437 = vsub.f32 %v3173, %v3410
      %v3438 = vsub.f32 %v3174, %v3410
      %v3439 = vsub.f32 %v3175, %v3410
      %v3440 = vsub.f32 %v3176, %v3410
      %v3441 = vsub.f32 %v3177, %v3410
      %v3442 = vsub.f32 %v3178, %v3410
      %v3443 = vmul.f32 %v3411, %v3411
      %v3444 = vmul.f32 %v3412, %v3412
      %v3445 = vmul.f32 %v3413, %v3413
      %v3446 = vmul.f32 %v3414, %v3414
      %v3447 = vmul.f32 %v3415, %v3415
      %v3448 = vmul.f32 %v3416, %v3416
      %v3449 = vmul.f32 %v3417, %v3417
      %v3450 = vmul.f32 %v3418, %v3418
      %v3451 = vmul.f32 %v3419, %v3419
      %v3452 = vmul.f32 %v3420, %v3420
      %v3453 = vmul.f32 %v3421, %v3421
      %v3454 = vmul.f32 %v3422, %v3422
      %v3455 = vmul.f32 %v3423, %v3423
      %v3456 = vmul.f32 %v3424, %v3424
      %v3457 = vmul.f32 %v3425, %v3425
      %v3458 = vmul.f32 %v3426, %v3426
      %v3459 = vmul.f32 %v3427, %v3427
      %v3460 = vmul.f32 %v3428, %v3428
      %v3461 = vmul.f32 %v3429, %v3429
      %v3462 = vmul.f32 %v3430, %v3430
      %v3463 = vmul.f32 %v3431, %v3431
      %v3464 = vmul.f32 %v3432, %v3432
      %v3465 = vmul.f32 %v3433, %v3433
      %v3466 = vmul.f32 %v3434, %v3434
      %v3467 = vmul.f32 %v3435, %v3435
      %v3468 = vmul.f32 %v3436, %v3436
      %v3469 = vmul.f32 %v3437, %v3437
      %v3470 = vmul.f32 %v3438, %v3438
      %v3471 = vmul.f32 %v3439, %v3439
      %v3472 = vmul.f32 %v3440, %v3440
      %v3473 = vmul.f32 %v3441, %v3441
      %v3474 = vmul.f32 %v3442, %v3442
      %v3475 = vsel %vm240, %v3443, 0.0
      %v3476 = vsel %vm240, %v3444, 0.0
      %v3477 = vadd.f32 %v3475, %v3476
      %v3478 = vsel %vm240, %v3445, 0.0
      %v3479 = vadd.f32 %v3477, %v3478
      %v3480 = vsel %vm240, %v3446, 0.0
      %v3481 = vadd.f32 %v3479, %v3480
      %v3482 = vsel %vm240, %v3447, 0.0
      %v3483 = vadd.f32 %v3481, %v3482
      %v3484 = vsel %vm240, %v3448, 0.0
      %v3485 = vadd.f32 %v3483, %v3484
      %v3486 = vsel %vm240, %v3449, 0.0
      %v3487 = vadd.f32 %v3485, %v3486
      %v3488 = vsel %vm240, %v3450, 0.0
      %v3489 = vadd.f32 %v3487, %v3488
      %v3490 = vsel %vm240, %v3451, 0.0
      %v3491 = vadd.f32 %v3489, %v3490
      %v3492 = vsel %vm240, %v3452, 0.0
      %v3493 = vadd.f32 %v3491, %v3492
      %v3494 = vsel %vm240, %v3453, 0.0
      %v3495 = vadd.f32 %v3493, %v3494
      %v3496 = vsel %vm240, %v3454, 0.0
      %v3497 = vadd.f32 %v3495, %v3496
      %v3498 = vsel %vm240, %v3455, 0.0
      %v3499 = vadd.f32 %v3497, %v3498
      %v3500 = vsel %vm240, %v3456, 0.0
      %v3501 = vadd.f32 %v3499, %v3500
      %v3502 = vsel %vm240, %v3457, 0.0
      %v3503 = vadd.f32 %v3501, %v3502
      %v3504 = vsel %vm240, %v3458, 0.0
      %v3505 = vadd.f32 %v3503, %v3504
      %v3506 = vsel %vm240, %v3459, 0.0
      %v3507 = vadd.f32 %v3505, %v3506
      %v3508 = vsel %vm240, %v3460, 0.0
      %v3509 = vadd.f32 %v3507, %v3508
      %v3510 = vsel %vm240, %v3461, 0.0
      %v3511 = vadd.f32 %v3509, %v3510
      %v3512 = vsel %vm240, %v3462, 0.0
      %v3513 = vadd.f32 %v3511, %v3512
      %v3514 = vsel %vm240, %v3463, 0.0
      %v3515 = vadd.f32 %v3513, %v3514
      %v3516 = vsel %vm240, %v3464, 0.0
      %v3517 = vadd.f32 %v3515, %v3516
      %v3518 = vsel %vm240, %v3465, 0.0
      %v3519 = vadd.f32 %v3517, %v3518
      %v3520 = vsel %vm240, %v3466, 0.0
      %v3521 = vadd.f32 %v3519, %v3520
      %v3522 = vsel %vm240, %v3467, 0.0
      %v3523 = vadd.f32 %v3521, %v3522
      %v3524 = vsel %vm240, %v3468, 0.0
      %v3525 = vadd.f32 %v3523, %v3524
      %v3526 = vsel %vm240, %v3469, 0.0
      %v3527 = vadd.f32 %v3525, %v3526
      %v3528 = vsel %vm240, %v3470, 0.0
      %v3529 = vadd.f32 %v3527, %v3528
      %v3530 = vsel %vm240, %v3471, 0.0
      %v3531 = vadd.f32 %v3529, %v3530
      %v3532 = vsel %vm240, %v3472, 0.0
      %v3533 = vadd.f32 %v3531, %v3532
      %v3534 = vsel %vm240, %v3473, 0.0
      %v3535 = vadd.f32 %v3533, %v3534
      %v3536 = vsel %vm240, %v3474, 0.0
      %v3537 = vadd.f32 %v3535, %v3536
      %v3538 = vrot.slane %v3537, 4
      %v3539 = vadd.f32 %v3537, %v3538
      %v3540 = vrot.slane %v3539, 2
      %v3541 = vadd.f32 %v3539, %v3540
      %v3542 = vrot.slane %v3541, 1
      %v3543 = vadd.f32 %v3541, %v3542
      %vm3544 = vcmask 1040384
      %v3545 = vsel %vm3544, %v3410, %v3543
      %3546 = vst.msk [vmem:[%s238] sm:$0x3] %vm243, %v3545
      %s3547 = smul.u32 32, %s17
      %p3548 = scmp.lt.s32.totalorder %s3547, 63
      %s3549 = scalar_select %p3548, %s3547, 63
      %s3550 = smul.addr %s3549, 4
      %s3551 = scalar_lea.vmem %s4, %s3550
      %p3552 = scmp.lt.s32.totalorder %s17, 1
      %s3553 = scalar_select %p3552, %s17, 1
      %s3554 = smul.addr %s3553, 2
      %s3555 = scalar_lea.vmem %s5, %s3554
      // Predicated region
      $region37: #{bottleneck_block_nhwc.5} parent=35 // pred_check
        %p3556 = pneg %p124
      $region38: #{bottleneck_block_nhwc.5} parent=35 // pred_check_branch
        %3558 = sbr.rel (%p3556) target = $region40
      $region39: #{bottleneck_block_nhwc.5} parent=35 // pred_region
        %s3559 = smul.u32 32, %s17
      $region40: #{bottleneck_block_nhwc.5} parent=35 // pred_fallthru
        _
      // Predicated region
      $region41: #{bottleneck_block_nhwc.5} parent=35 // pred_check
        %p3560 = pneg %p150
      $region42: #{bottleneck_block_nhwc.5} parent=35 // pred_check_branch
        %3562 = sbr.rel (%p3560) target = $region44
      $region43: #{bottleneck_block_nhwc.5} parent=35 // pred_region
        _
      $region44: #{bottleneck_block_nhwc.5} parent=35 // pred_fallthru
        _
    $region36: #{bottleneck_block_nhwc.5} parent=5 // pred_fallthru
      _
    %p3563 = scmp.le.s32.totalorder 2, %s12
    // Predicated region
    $region45: #{bottleneck_block_nhwc.5} parent=5 // pred_check
      %p3564 = pneg %p3563
    $region46: #{bottleneck_block_nhwc.5} parent=5 // pred_check_branch
      %3566 = sbr.rel (%p3564) target = $region48
    $region47: #{bottleneck_block_nhwc.5} parent=5 // pred_region
      %s3567 = ssub.s32 %s12, 2
      // Predicated region
      $region49: #{bottleneck_block_nhwc.5} parent=47 // pred_check
        %p3568 = pneg %p130
      $region50: #{bottleneck_block_nhwc.5} parent=47 // pred_check_branch
        %3570 = sbr.rel (%p3568) target = $region52
      $region51: #{bottleneck_block_nhwc.5} parent=47 // pred_region
        %s3571 = smul.u32 32, %s18
        %p3572 = scmp.lt.s32.totalorder %s3571, 63
        %s3573 = scalar_select %p3572, %s3571, 63
        %s3574 = smul.addr %s3573, 4
        %s3575 = scalar_lea.vmem %s4, %s3574
      $region52: #{bottleneck_block_nhwc.5} parent=47 // pred_fallthru
        _
      // Predicated region
      $region53: #{bottleneck_block_nhwc.5} parent=47 // pred_check
        %p3576 = pneg %p156
      $region54: #{bottleneck_block_nhwc.5} parent=47 // pred_check_branch
        %3578 = sbr.rel (%p3576) target = $region56
      $region55: #{bottleneck_block_nhwc.5} parent=47 // pred_region
        %p3579 = scmp.lt.s32.totalorder %s18, 1
        %s3580 = scalar_select %p3579, %s18, 1
        %s3581 = smul.addr %s3580, 2
        %s3582 = scalar_lea.vmem %s5, %s3581
      $region56: #{bottleneck_block_nhwc.5} parent=47 // pred_fallthru
        _
    $region48: #{bottleneck_block_nhwc.5} parent=5 // pred_fallthru
      _
  $region6: #{bottleneck_block_nhwc.5} parent=0 // loop_footer
    %s16 = sadd.s32 1, %s12
  $region7: #{bottleneck_block_nhwc.5} parent=0 // loop_footer_branch
    %11 = sbr.rel target = $region3
  $region8: #{bottleneck_block_nhwc.5} parent=0 // loop_exit
    _

</llo_original>
